<compile_context>
chip_gen: v7x
topology: tpu7x:2x2x1
jax: 0.10.0
libtpu: 0.0.40
codegen_flags: <defaults>
</compile_context>

<pallas_src>
import functools

import jax
import jax.numpy as jnp
from jax.experimental import pallas as pl
from jax.experimental.pallas import tpu as pltpu


# ----------------------------------------------------------------------------
# Fused Pallas kernel: encoder + fuse + decode + composite for one batch element
# ----------------------------------------------------------------------------
def _csfn_kernel(patches_ref, wc_ref, bc_ref, w1_ref, b1_ref, w2_ref, b2_ref,
                 wv_ref, fb_ref, wdr_ref, bdr_ref, wdm_ref, o_ref, *, depth_size):
    f32 = jnp.float32
    bf16 = jnp.bfloat16
    pt = patches_ref[0]                                           # [Kp, P] bf16

    # ---- encoder (EncoderNetworkRes): 3x3 conv (im2col) + ReLU, residual 1x1 block
    feat = jnp.dot(wc_ref[...], pt, preferred_element_type=f32) + bc_ref[...]
    feat = jnp.maximum(feat, 0.0)                                 # [cell, P] f32
    r = jnp.dot(w1_ref[...], feat.astype(bf16), preferred_element_type=f32) + b1_ref[...]
    r = jnp.maximum(r, 0.0)
    r = jnp.dot(w2_ref[...], r.astype(bf16), preferred_element_type=f32) + b2_ref[...]
    vc = jnp.maximum(feat + r, 0.0).astype(bf16)                  # view_cell_o [cell, P]

    wdr = wdr_ref[...]                                            # [3, cell] bf16
    wdm = wdm_ref[...]                                            # [1, cell] bf16
    bdr = bdr_ref[...]                                            # [3, 1]    f32

    # ---- cstrn 'ocm' fusion (per-depth layers) + decoder rgb/mask heads
    masks, rgbs = [], []
    for d in range(depth_size):
        layer = jnp.dot(wv_ref[d], vc, preferred_element_type=f32) + fb_ref[0, d]
        layer = jnp.maximum(layer, 0.0).astype(bf16)              # [cell, P]
        # NOTE: the decoder's mask bias is the same scalar for every depth layer,
        # so it cancels exactly in the softmax below and is not passed in.
        masks.append(jnp.dot(wdm, layer, preferred_element_type=f32))        # [1, P]
        rgbs.append(jnp.dot(wdr, layer, preferred_element_type=f32) + bdr)   # [3, P]

    # ---- softmax over depth + weighted RGB composite (lane-dense [3, P] output)
    m = masks[0]
    for d in range(1, depth_size):
        m = jnp.maximum(m, masks[d])
    es = [jnp.exp(mk - m) for mk in masks]
    z = es[0]
    for d in range(1, depth_size):
        z = z + es[d]
    inv = pl.reciprocal(z, approx=True)                           # EUP slot, ~free
    out = rgbs[0] * (es[0] * inv)
    for d in range(1, depth_size):
        out = out + rgbs[d] * (es[d] * inv)
    o_ref[0] = out.astype(o_ref.dtype)


# ----------------------------------------------------------------------------
# Parameters (deterministic synthetic init)
# ----------------------------------------------------------------------------
def init_params(key, in_ch=3, depth_size=6, pose_size=12, emb_size=32, cell_size=128):
    ks = jax.random.split(key, 7)

    def lin(k, fan_in, fan_out):
        w = jax.random.normal(k, (fan_in, fan_out), jnp.float32) / jnp.sqrt(fan_in)
        b = jnp.zeros((fan_out,), jnp.float32)
        return w, b

    return {
        # conv weight rows are [Cin, kh, kw]-flattened (channel-major, PyTorch order)
        "enc_conv": lin(ks[0], in_ch * 9, cell_size),
        "enc_res1": lin(ks[1], cell_size, cell_size),
        "enc_res2": lin(ks[2], cell_size, cell_size),
        "pose_o":   lin(ks[3], pose_size, emb_size),
        "pose_q":   lin(ks[4], pose_size, emb_size),
        "fuse":     lin(ks[5], cell_size + 2 * emb_size, depth_size * cell_size),
        "dec":      lin(ks[6], cell_size, 4),                      # rgb(3) + mask(1)
    }


# ----------------------------------------------------------------------------
# Forward pass (glue reshapes / tiny pose path in JAX, all heavy compute in Pallas)
# ----------------------------------------------------------------------------
def csfn_forward(params, x, pose_o, pose_q, *, view_size=(16, 16),
                 depth_size=6, cell_size=128):
    B, Cin, H, W = x.shape
    assert (H, W) == view_size
    P = H * W
    Kp = ((Cin * 9 + 7) // 8) * 8                 # 27 -> 32, sublane aligned

    # im2col (3x3, pad=1) in NCHW, channel-major flattening to match PyTorch
    # Conv2d weight.reshape(Cout, Cin*9); kept transposed as [K, pixels].
    xp = jnp.pad(x, ((0, 0), (0, 0), (1, 1), (1, 1)))
    cols = jnp.stack([xp[:, :, di:di + H, dj:dj + W]
                      for di in range(3) for dj in range(3)], axis=2)   # [B,Cin,9,H,W]
    patches_t = cols.reshape(B, Cin * 9, P)
    patches_t = jnp.pad(patches_t, ((0, 0), (0, Kp - Cin * 9), (0, 0))).astype(jnp.bfloat16)

    # pose embeddings -> per-batch additive bias of the fuse layer (tiny; deliberately
    # plain JAX: a pallas_call for [B,12]@[12,32] is pure launch overhead).
    wo, bo = params["pose_o"]
    wq, bq = params["pose_q"]
    emb_o = jnp.maximum(pose_o @ wo + bo, 0.0)
    emb_q = jnp.maximum(pose_q @ wq + bq, 0.0)
    emb = jnp.concatenate([emb_o, emb_q], axis=-1)                 # [B, 2*emb]
    fuse_w, fuse_b = params["fuse"]
    w_view, w_emb = fuse_w[:cell_size], fuse_w[cell_size:]
    fuse_bias = (emb @ w_emb + fuse_b).reshape(B, depth_size, cell_size, 1)
    fuse_bias = fuse_bias.astype(jnp.float32)

    # kernel-ready transposed weights: bf16 for MXU operands, f32 biases.
    wc, bc = params["enc_conv"]
    wc = jnp.pad(wc, ((0, Kp - Cin * 9), (0, 0)))
    wc_t = wc.T.astype(jnp.bfloat16)                               # [cell, Kp]
    w1, b1 = params["enc_res1"]
    w2, b2 = params["enc_res2"]
    w1_t = w1.T.astype(jnp.bfloat16)
    w2_t = w2.T.astype(jnp.bfloat16)
    wv_t = (w_view.reshape(cell_size, depth_size, cell_size)
            .transpose(1, 2, 0).astype(jnp.bfloat16))              # [D, cell, cell]
    wd, bd = params["dec"]
    wdr_t = wd[:, :3].T.astype(jnp.bfloat16)                       # [3, cell]
    wdm_t = wd[:, 3:4].T.astype(jnp.bfloat16)                      # [1, cell]
    bdr = bd[:3].reshape(3, 1).astype(jnp.float32)
    bc2 = bc.reshape(cell_size, 1)
    b12 = b1.reshape(cell_size, 1)
    b22 = b2.reshape(cell_size, 1)

    kernel = functools.partial(_csfn_kernel, depth_size=depth_size)
    out = pl.pallas_call(
        kernel,
        out_shape=jax.ShapeDtypeStruct((B, 3, P), jnp.float32),
        grid_spec=pltpu.PrefetchScalarGridSpec(
            num_scalar_prefetch=0,
            grid=(B,),
            in_specs=[
                pl.BlockSpec((1, Kp, P), lambda b: (b, 0, 0)),                    # patches
                pl.BlockSpec((cell_size, Kp), lambda b: (0, 0)),                  # wc_t
                pl.BlockSpec((cell_size, 1), lambda b: (0, 0)),                   # bc
                pl.BlockSpec((cell_size, cell_size), lambda b: (0, 0)),           # w1_t
                pl.BlockSpec((cell_size, 1), lambda b: (0, 0)),                   # b1
                pl.BlockSpec((cell_size, cell_size), lambda b: (0, 0)),           # w2_t
                pl.BlockSpec((cell_size, 1), lambda b: (0, 0)),                   # b2
                pl.BlockSpec((depth_size, cell_size, cell_size),
                             lambda b: (0, 0, 0)),                                # wv_t
                pl.BlockSpec((1, depth_size, cell_size, 1),
                             lambda b: (b, 0, 0, 0)),                             # fuse_bias
                pl.BlockSpec((3, cell_size), lambda b: (0, 0)),                   # wd_rgb
                pl.BlockSpec((3, 1), lambda b: (0, 0)),                           # bd_rgb
                pl.BlockSpec((1, cell_size), lambda b: (0, 0)),                   # wd_mask
            ],
            out_specs=pl.BlockSpec((1, 3, P), lambda b: (b, 0, 0)),
        ),
        compiler_params=pltpu.CompilerParams(
            dimension_semantics=("parallel",)),
    )(patches_t, wc_t, bc2, w1_t, b12, w2_t, b22, wv_t, fuse_bias, wdr_t, bdr, wdm_t)

    return out.reshape(B, 3, H, W)                                  # NCHW like PyTorch


# ----------------------------------------------------------------------------
if __name__ == "__main__":
    key = jax.random.PRNGKey(0)
    kx, ko, kq, kp = jax.random.split(key, 4)

    B, Cin, H, W = 2, 3, 16, 16
    pose_size = 12
    x = jax.random.normal(kx, (B, Cin, H, W), jnp.float32)
    pose_o = jax.random.normal(ko, (B, pose_size), jnp.float32)
    pose_q = jax.random.normal(kq, (B, pose_size), jnp.float32)

    params = init_params(kp)

    xq = jax.jit(csfn_forward)(params, x, pose_o, pose_q)
    jax.block_until_ready(xq)
    assert xq.shape == (B, 3, H, W) and xq.dtype == jnp.float32
    print("KERNEL_OK")
</pallas_src>

<mosaic_0001>
module attributes {stable_mosaic.version = 11 : i64} {
  func.func @_csfn_kernel(%arg0: i32, %arg1: memref<1x32x256xbf16, #tpu.memory_space<vmem>>, %arg2: memref<128x32xbf16, #tpu.memory_space<vmem>>, %arg3: memref<128x1xf32, #tpu.memory_space<vmem>>, %arg4: memref<128x128xbf16, #tpu.memory_space<vmem>>, %arg5: memref<128x1xf32, #tpu.memory_space<vmem>>, %arg6: memref<128x128xbf16, #tpu.memory_space<vmem>>, %arg7: memref<128x1xf32, #tpu.memory_space<vmem>>, %arg8: memref<6x128x128xbf16, #tpu.memory_space<vmem>>, %arg9: memref<1x6x128x1xf32, #tpu.memory_space<vmem>>, %arg10: memref<3x128xbf16, #tpu.memory_space<vmem>>, %arg11: memref<3x1xf32, #tpu.memory_space<vmem>>, %arg12: memref<1x128xbf16, #tpu.memory_space<vmem>>, %arg13: memref<1x3x256xf32, #tpu.memory_space<vmem>>) attributes {dimension_semantics = [#tpu.dimension_semantics<parallel>], iteration_bounds = array<i64: 2>, scalar_prefetch = 0 : i64, scratch_operands = 0 : i64, tpu.core_type = #tpu.core_type<tc>, window_params = [{transform_indices = @transform_0, window_bounds = array<i64: 1, 32, 256>}, {pipeline_mode = #tpu.pipeline_mode<synchronous>, transform_indices = @transform_1, window_bounds = array<i64: 128, 32>}, {pipeline_mode = #tpu.pipeline_mode<synchronous>, transform_indices = @transform_2, window_bounds = array<i64: 128, 1>}, {pipeline_mode = #tpu.pipeline_mode<synchronous>, transform_indices = @transform_3, window_bounds = array<i64: 128, 128>}, {pipeline_mode = #tpu.pipeline_mode<synchronous>, transform_indices = @transform_4, window_bounds = array<i64: 128, 1>}, {pipeline_mode = #tpu.pipeline_mode<synchronous>, transform_indices = @transform_5, window_bounds = array<i64: 128, 128>}, {pipeline_mode = #tpu.pipeline_mode<synchronous>, transform_indices = @transform_6, window_bounds = array<i64: 128, 1>}, {pipeline_mode = #tpu.pipeline_mode<synchronous>, transform_indices = @transform_7, window_bounds = array<i64: 6, 128, 128>}, {transform_indices = @transform_8, window_bounds = array<i64: 1, 6, 128, 1>}, {pipeline_mode = #tpu.pipeline_mode<synchronous>, transform_indices = @transform_9, window_bounds = array<i64: 3, 128>}, {pipeline_mode = #tpu.pipeline_mode<synchronous>, transform_indices = @transform_10, window_bounds = array<i64: 3, 1>}, {pipeline_mode = #tpu.pipeline_mode<synchronous>, transform_indices = @transform_11, window_bounds = array<i64: 1, 128>}, {transform_indices = @transform_12, window_bounds = array<i64: 1, 3, 256>}]} {
    %c0 = arith.constant 0 : index
    %c0_0 = arith.constant 0 : index
    %c0_1 = arith.constant 0 : index
    %0 = vector.load %arg1[%c0, %c0_0, %c0_1] : memref<1x32x256xbf16, #tpu.memory_space<vmem>>, vector<1x32x256xbf16>
    %1 = vector.shape_cast %0 : vector<1x32x256xbf16> to vector<32x256xbf16>
    %c0_2 = arith.constant 0 : index
    %c0_3 = arith.constant 0 : index
    %2 = vector.load %arg2[%c0_2, %c0_3] : memref<128x32xbf16, #tpu.memory_space<vmem>>, vector<128x32xbf16>
    %cst = arith.constant dense<0.000000e+00> : vector<128x256xf32>
    %3 = tpu.matmul %2, %1, %cst {dimension_numbers = #tpu.dot_dimension_numbers<[1], [0], [0], [1], [0, 0, 1, 1], [], []>} : vector<128x32xbf16>, vector<32x256xbf16>, vector<128x256xf32> -> vector<128x256xf32>
    %c0_4 = arith.constant 0 : index
    %c0_5 = arith.constant 0 : index
    %4 = vector.load %arg3[%c0_4, %c0_5] : memref<128x1xf32, #tpu.memory_space<vmem>>, vector<128x1xf32>
    %5 = vector.broadcast %4 : vector<128x1xf32> to vector<128x256xf32>
    %6 = arith.addf %3, %5 : vector<128x256xf32>
    %cst_6 = arith.constant 0.000000e+00 : f32
    %7 = vector.broadcast %cst_6 : f32 to vector<128x256xf32>
    %8 = arith.maximumf %6, %7 : vector<128x256xf32>
    %c0_7 = arith.constant 0 : index
    %c0_8 = arith.constant 0 : index
    %9 = vector.load %arg4[%c0_7, %c0_8] : memref<128x128xbf16, #tpu.memory_space<vmem>>, vector<128x128xbf16>
    %10 = arith.truncf %8 : vector<128x256xf32> to vector<128x256xbf16>
    %cst_9 = arith.constant dense<0.000000e+00> : vector<128x256xf32>
    %11 = tpu.matmul %9, %10, %cst_9 {dimension_numbers = #tpu.dot_dimension_numbers<[1], [0], [0], [1], [0, 0, 1, 1], [], []>} : vector<128x128xbf16>, vector<128x256xbf16>, vector<128x256xf32> -> vector<128x256xf32>
    %c0_10 = arith.constant 0 : index
    %c0_11 = arith.constant 0 : index
    %12 = vector.load %arg5[%c0_10, %c0_11] : memref<128x1xf32, #tpu.memory_space<vmem>>, vector<128x1xf32>
    %13 = vector.broadcast %12 : vector<128x1xf32> to vector<128x256xf32>
    %14 = arith.addf %11, %13 : vector<128x256xf32>
    %cst_12 = arith.constant 0.000000e+00 : f32
    %15 = vector.broadcast %cst_12 : f32 to vector<128x256xf32>
    %16 = arith.maximumf %14, %15 : vector<128x256xf32>
    %c0_13 = arith.constant 0 : index
    %c0_14 = arith.constant 0 : index
    %17 = vector.load %arg6[%c0_13, %c0_14] : memref<128x128xbf16, #tpu.memory_space<vmem>>, vector<128x128xbf16>
    %18 = arith.truncf %16 : vector<128x256xf32> to vector<128x256xbf16>
    %cst_15 = arith.constant dense<0.000000e+00> : vector<128x256xf32>
    %19 = tpu.matmul %17, %18, %cst_15 {dimension_numbers = #tpu.dot_dimension_numbers<[1], [0], [0], [1], [0, 0, 1, 1], [], []>} : vector<128x128xbf16>, vector<128x256xbf16>, vector<128x256xf32> -> vector<128x256xf32>
    %c0_16 = arith.constant 0 : index
    %c0_17 = arith.constant 0 : index
    %20 = vector.load %arg7[%c0_16, %c0_17] : memref<128x1xf32, #tpu.memory_space<vmem>>, vector<128x1xf32>
    %21 = vector.broadcast %20 : vector<128x1xf32> to vector<128x256xf32>
    %22 = arith.addf %19, %21 : vector<128x256xf32>
    %23 = arith.addf %8, %22 : vector<128x256xf32>
    %cst_18 = arith.constant 0.000000e+00 : f32
    %24 = vector.broadcast %cst_18 : f32 to vector<128x256xf32>
    %25 = arith.maximumf %23, %24 : vector<128x256xf32>
    %26 = arith.truncf %25 : vector<128x256xf32> to vector<128x256xbf16>
    %c0_19 = arith.constant 0 : index
    %c0_20 = arith.constant 0 : index
    %27 = vector.load %arg10[%c0_19, %c0_20] : memref<3x128xbf16, #tpu.memory_space<vmem>>, vector<3x128xbf16>
    %c0_21 = arith.constant 0 : index
    %c0_22 = arith.constant 0 : index
    %28 = vector.load %arg12[%c0_21, %c0_22] : memref<1x128xbf16, #tpu.memory_space<vmem>>, vector<1x128xbf16>
    %c0_23 = arith.constant 0 : index
    %c0_24 = arith.constant 0 : index
    %29 = vector.load %arg11[%c0_23, %c0_24] : memref<3x1xf32, #tpu.memory_space<vmem>>, vector<3x1xf32>
    %c0_25 = arith.constant 0 : index
    %c0_26 = arith.constant 0 : index
    %c0_27 = arith.constant 0 : index
    %30 = vector.load %arg8[%c0_25, %c0_26, %c0_27] : memref<6x128x128xbf16, #tpu.memory_space<vmem>>, vector<1x128x128xbf16>
    %31 = vector.shape_cast %30 : vector<1x128x128xbf16> to vector<128x128xbf16>
    %cst_28 = arith.constant dense<0.000000e+00> : vector<128x256xf32>
    %32 = tpu.matmul %31, %26, %cst_28 {dimension_numbers = #tpu.dot_dimension_numbers<[1], [0], [0], [1], [0, 0, 1, 1], [], []>} : vector<128x128xbf16>, vector<128x256xbf16>, vector<128x256xf32> -> vector<128x256xf32>
    %c0_29 = arith.constant 0 : index
    %c0_30 = arith.constant 0 : index
    %c0_31 = arith.constant 0 : index
    %c0_32 = arith.constant 0 : index
    %33 = vector.load %arg9[%c0_29, %c0_30, %c0_31, %c0_32] : memref<1x6x128x1xf32, #tpu.memory_space<vmem>>, vector<1x1x128x1xf32>
    %34 = vector.shape_cast %33 : vector<1x1x128x1xf32> to vector<128x1xf32>
    %35 = vector.broadcast %34 : vector<128x1xf32> to vector<128x256xf32>
    %36 = arith.addf %32, %35 : vector<128x256xf32>
    %cst_33 = arith.constant 0.000000e+00 : f32
    %37 = vector.broadcast %cst_33 : f32 to vector<128x256xf32>
    %38 = arith.maximumf %36, %37 : vector<128x256xf32>
    %39 = arith.truncf %38 : vector<128x256xf32> to vector<128x256xbf16>
    %cst_34 = arith.constant dense<0.000000e+00> : vector<1x256xf32>
    %40 = tpu.matmul %28, %39, %cst_34 {dimension_numbers = #tpu.dot_dimension_numbers<[1], [0], [0], [1], [0, 0, 1, 1], [], []>} : vector<1x128xbf16>, vector<128x256xbf16>, vector<1x256xf32> -> vector<1x256xf32>
    %cst_35 = arith.constant dense<0.000000e+00> : vector<3x256xf32>
    %41 = tpu.matmul %27, %39, %cst_35 {dimension_numbers = #tpu.dot_dimension_numbers<[1], [0], [0], [1], [0, 0, 1, 1], [], []>} : vector<3x128xbf16>, vector<128x256xbf16>, vector<3x256xf32> -> vector<3x256xf32>
    %42 = vector.broadcast %29 : vector<3x1xf32> to vector<3x256xf32>
    %43 = arith.addf %41, %42 : vector<3x256xf32>
    %c1 = arith.constant 1 : index
    %c0_36 = arith.constant 0 : index
    %c0_37 = arith.constant 0 : index
    %44 = vector.load %arg8[%c1, %c0_36, %c0_37] : memref<6x128x128xbf16, #tpu.memory_space<vmem>>, vector<1x128x128xbf16>
    %45 = vector.shape_cast %44 : vector<1x128x128xbf16> to vector<128x128xbf16>
    %cst_38 = arith.constant dense<0.000000e+00> : vector<128x256xf32>
    %46 = tpu.matmul %45, %26, %cst_38 {dimension_numbers = #tpu.dot_dimension_numbers<[1], [0], [0], [1], [0, 0, 1, 1], [], []>} : vector<128x128xbf16>, vector<128x256xbf16>, vector<128x256xf32> -> vector<128x256xf32>
    %c0_39 = arith.constant 0 : index
    %c1_40 = arith.constant 1 : index
    %c0_41 = arith.constant 0 : index
    %c0_42 = arith.constant 0 : index
    %47 = vector.load %arg9[%c0_39, %c1_40, %c0_41, %c0_42] : memref<1x6x128x1xf32, #tpu.memory_space<vmem>>, vector<1x1x128x1xf32>
    %48 = vector.shape_cast %47 : vector<1x1x128x1xf32> to vector<128x1xf32>
    %49 = vector.broadcast %48 : vector<128x1xf32> to vector<128x256xf32>
    %50 = arith.addf %46, %49 : vector<128x256xf32>
    %cst_43 = arith.constant 0.000000e+00 : f32
    %51 = vector.broadcast %cst_43 : f32 to vector<128x256xf32>
    %52 = arith.maximumf %50, %51 : vector<128x256xf32>
    %53 = arith.truncf %52 : vector<128x256xf32> to vector<128x256xbf16>
    %cst_44 = arith.constant dense<0.000000e+00> : vector<1x256xf32>
    %54 = tpu.matmul %28, %53, %cst_44 {dimension_numbers = #tpu.dot_dimension_numbers<[1], [0], [0], [1], [0, 0, 1, 1], [], []>} : vector<1x128xbf16>, vector<128x256xbf16>, vector<1x256xf32> -> vector<1x256xf32>
    %cst_45 = arith.constant dense<0.000000e+00> : vector<3x256xf32>
    %55 = tpu.matmul %27, %53, %cst_45 {dimension_numbers = #tpu.dot_dimension_numbers<[1], [0], [0], [1], [0, 0, 1, 1], [], []>} : vector<3x128xbf16>, vector<128x256xbf16>, vector<3x256xf32> -> vector<3x256xf32>
    %56 = vector.broadcast %29 : vector<3x1xf32> to vector<3x256xf32>
    %57 = arith.addf %55, %56 : vector<3x256xf32>
    %c2 = arith.constant 2 : index
    %c0_46 = arith.constant 0 : index
    %c0_47 = arith.constant 0 : index
    %58 = vector.load %arg8[%c2, %c0_46, %c0_47] : memref<6x128x128xbf16, #tpu.memory_space<vmem>>, vector<1x128x128xbf16>
    %59 = vector.shape_cast %58 : vector<1x128x128xbf16> to vector<128x128xbf16>
    %cst_48 = arith.constant dense<0.000000e+00> : vector<128x256xf32>
    %60 = tpu.matmul %59, %26, %cst_48 {dimension_numbers = #tpu.dot_dimension_numbers<[1], [0], [0], [1], [0, 0, 1, 1], [], []>} : vector<128x128xbf16>, vector<128x256xbf16>, vector<128x256xf32> -> vector<128x256xf32>
    %c0_49 = arith.constant 0 : index
    %c2_50 = arith.constant 2 : index
    %c0_51 = arith.constant 0 : index
    %c0_52 = arith.constant 0 : index
    %61 = vector.load %arg9[%c0_49, %c2_50, %c0_51, %c0_52] : memref<1x6x128x1xf32, #tpu.memory_space<vmem>>, vector<1x1x128x1xf32>
    %62 = vector.shape_cast %61 : vector<1x1x128x1xf32> to vector<128x1xf32>
    %63 = vector.broadcast %62 : vector<128x1xf32> to vector<128x256xf32>
    %64 = arith.addf %60, %63 : vector<128x256xf32>
    %cst_53 = arith.constant 0.000000e+00 : f32
    %65 = vector.broadcast %cst_53 : f32 to vector<128x256xf32>
    %66 = arith.maximumf %64, %65 : vector<128x256xf32>
    %67 = arith.truncf %66 : vector<128x256xf32> to vector<128x256xbf16>
    %cst_54 = arith.constant dense<0.000000e+00> : vector<1x256xf32>
    %68 = tpu.matmul %28, %67, %cst_54 {dimension_numbers = #tpu.dot_dimension_numbers<[1], [0], [0], [1], [0, 0, 1, 1], [], []>} : vector<1x128xbf16>, vector<128x256xbf16>, vector<1x256xf32> -> vector<1x256xf32>
    %cst_55 = arith.constant dense<0.000000e+00> : vector<3x256xf32>
    %69 = tpu.matmul %27, %67, %cst_55 {dimension_numbers = #tpu.dot_dimension_numbers<[1], [0], [0], [1], [0, 0, 1, 1], [], []>} : vector<3x128xbf16>, vector<128x256xbf16>, vector<3x256xf32> -> vector<3x256xf32>
    %70 = vector.broadcast %29 : vector<3x1xf32> to vector<3x256xf32>
    %71 = arith.addf %69, %70 : vector<3x256xf32>
    %c3 = arith.constant 3 : index
    %c0_56 = arith.constant 0 : index
    %c0_57 = arith.constant 0 : index
    %72 = vector.load %arg8[%c3, %c0_56, %c0_57] : memref<6x128x128xbf16, #tpu.memory_space<vmem>>, vector<1x128x128xbf16>
    %73 = vector.shape_cast %72 : vector<1x128x128xbf16> to vector<128x128xbf16>
    %cst_58 = arith.constant dense<0.000000e+00> : vector<128x256xf32>
    %74 = tpu.matmul %73, %26, %cst_58 {dimension_numbers = #tpu.dot_dimension_numbers<[1], [0], [0], [1], [0, 0, 1, 1], [], []>} : vector<128x128xbf16>, vector<128x256xbf16>, vector<128x256xf32> -> vector<128x256xf32>
    %c0_59 = arith.constant 0 : index
    %c3_60 = arith.constant 3 : index
    %c0_61 = arith.constant 0 : index
    %c0_62 = arith.constant 0 : index
    %75 = vector.load %arg9[%c0_59, %c3_60, %c0_61, %c0_62] : memref<1x6x128x1xf32, #tpu.memory_space<vmem>>, vector<1x1x128x1xf32>
    %76 = vector.shape_cast %75 : vector<1x1x128x1xf32> to vector<128x1xf32>
    %77 = vector.broadcast %76 : vector<128x1xf32> to vector<128x256xf32>
    %78 = arith.addf %74, %77 : vector<128x256xf32>
    %cst_63 = arith.constant 0.000000e+00 : f32
    %79 = vector.broadcast %cst_63 : f32 to vector<128x256xf32>
    %80 = arith.maximumf %78, %79 : vector<128x256xf32>
    %81 = arith.truncf %80 : vector<128x256xf32> to vector<128x256xbf16>
    %cst_64 = arith.constant dense<0.000000e+00> : vector<1x256xf32>
    %82 = tpu.matmul %28, %81, %cst_64 {dimension_numbers = #tpu.dot_dimension_numbers<[1], [0], [0], [1], [0, 0, 1, 1], [], []>} : vector<1x128xbf16>, vector<128x256xbf16>, vector<1x256xf32> -> vector<1x256xf32>
    %cst_65 = arith.constant dense<0.000000e+00> : vector<3x256xf32>
    %83 = tpu.matmul %27, %81, %cst_65 {dimension_numbers = #tpu.dot_dimension_numbers<[1], [0], [0], [1], [0, 0, 1, 1], [], []>} : vector<3x128xbf16>, vector<128x256xbf16>, vector<3x256xf32> -> vector<3x256xf32>
    %84 = vector.broadcast %29 : vector<3x1xf32> to vector<3x256xf32>
    %85 = arith.addf %83, %84 : vector<3x256xf32>
    %c4 = arith.constant 4 : index
    %c0_66 = arith.constant 0 : index
    %c0_67 = arith.constant 0 : index
    %86 = vector.load %arg8[%c4, %c0_66, %c0_67] : memref<6x128x128xbf16, #tpu.memory_space<vmem>>, vector<1x128x128xbf16>
    %87 = vector.shape_cast %86 : vector<1x128x128xbf16> to vector<128x128xbf16>
    %cst_68 = arith.constant dense<0.000000e+00> : vector<128x256xf32>
    %88 = tpu.matmul %87, %26, %cst_68 {dimension_numbers = #tpu.dot_dimension_numbers<[1], [0], [0], [1], [0, 0, 1, 1], [], []>} : vector<128x128xbf16>, vector<128x256xbf16>, vector<128x256xf32> -> vector<128x256xf32>
    %c0_69 = arith.constant 0 : index
    %c4_70 = arith.constant 4 : index
    %c0_71 = arith.constant 0 : index
    %c0_72 = arith.constant 0 : index
    %89 = vector.load %arg9[%c0_69, %c4_70, %c0_71, %c0_72] : memref<1x6x128x1xf32, #tpu.memory_space<vmem>>, vector<1x1x128x1xf32>
    %90 = vector.shape_cast %89 : vector<1x1x128x1xf32> to vector<128x1xf32>
    %91 = vector.broadcast %90 : vector<128x1xf32> to vector<128x256xf32>
    %92 = arith.addf %88, %91 : vector<128x256xf32>
    %cst_73 = arith.constant 0.000000e+00 : f32
    %93 = vector.broadcast %cst_73 : f32 to vector<128x256xf32>
    %94 = arith.maximumf %92, %93 : vector<128x256xf32>
    %95 = arith.truncf %94 : vector<128x256xf32> to vector<128x256xbf16>
    %cst_74 = arith.constant dense<0.000000e+00> : vector<1x256xf32>
    %96 = tpu.matmul %28, %95, %cst_74 {dimension_numbers = #tpu.dot_dimension_numbers<[1], [0], [0], [1], [0, 0, 1, 1], [], []>} : vector<1x128xbf16>, vector<128x256xbf16>, vector<1x256xf32> -> vector<1x256xf32>
    %cst_75 = arith.constant dense<0.000000e+00> : vector<3x256xf32>
    %97 = tpu.matmul %27, %95, %cst_75 {dimension_numbers = #tpu.dot_dimension_numbers<[1], [0], [0], [1], [0, 0, 1, 1], [], []>} : vector<3x128xbf16>, vector<128x256xbf16>, vector<3x256xf32> -> vector<3x256xf32>
    %98 = vector.broadcast %29 : vector<3x1xf32> to vector<3x256xf32>
    %99 = arith.addf %97, %98 : vector<3x256xf32>
    %c5 = arith.constant 5 : index
    %c0_76 = arith.constant 0 : index
    %c0_77 = arith.constant 0 : index
    %100 = vector.load %arg8[%c5, %c0_76, %c0_77] : memref<6x128x128xbf16, #tpu.memory_space<vmem>>, vector<1x128x128xbf16>
    %101 = vector.shape_cast %100 : vector<1x128x128xbf16> to vector<128x128xbf16>
    %cst_78 = arith.constant dense<0.000000e+00> : vector<128x256xf32>
    %102 = tpu.matmul %101, %26, %cst_78 {dimension_numbers = #tpu.dot_dimension_numbers<[1], [0], [0], [1], [0, 0, 1, 1], [], []>} : vector<128x128xbf16>, vector<128x256xbf16>, vector<128x256xf32> -> vector<128x256xf32>
    %c0_79 = arith.constant 0 : index
    %c5_80 = arith.constant 5 : index
    %c0_81 = arith.constant 0 : index
    %c0_82 = arith.constant 0 : index
    %103 = vector.load %arg9[%c0_79, %c5_80, %c0_81, %c0_82] : memref<1x6x128x1xf32, #tpu.memory_space<vmem>>, vector<1x1x128x1xf32>
    %104 = vector.shape_cast %103 : vector<1x1x128x1xf32> to vector<128x1xf32>
    %105 = vector.broadcast %104 : vector<128x1xf32> to vector<128x256xf32>
    %106 = arith.addf %102, %105 : vector<128x256xf32>
    %cst_83 = arith.constant 0.000000e+00 : f32
    %107 = vector.broadcast %cst_83 : f32 to vector<128x256xf32>
    %108 = arith.maximumf %106, %107 : vector<128x256xf32>
    %109 = arith.truncf %108 : vector<128x256xf32> to vector<128x256xbf16>
    %cst_84 = arith.constant dense<0.000000e+00> : vector<1x256xf32>
    %110 = tpu.matmul %28, %109, %cst_84 {dimension_numbers = #tpu.dot_dimension_numbers<[1], [0], [0], [1], [0, 0, 1, 1], [], []>} : vector<1x128xbf16>, vector<128x256xbf16>, vector<1x256xf32> -> vector<1x256xf32>
    %cst_85 = arith.constant dense<0.000000e+00> : vector<3x256xf32>
    %111 = tpu.matmul %27, %109, %cst_85 {dimension_numbers = #tpu.dot_dimension_numbers<[1], [0], [0], [1], [0, 0, 1, 1], [], []>} : vector<3x128xbf16>, vector<128x256xbf16>, vector<3x256xf32> -> vector<3x256xf32>
    %112 = vector.broadcast %29 : vector<3x1xf32> to vector<3x256xf32>
    %113 = arith.addf %111, %112 : vector<3x256xf32>
    %114 = arith.maximumf %40, %54 : vector<1x256xf32>
    %115 = arith.maximumf %114, %68 : vector<1x256xf32>
    %116 = arith.maximumf %115, %82 : vector<1x256xf32>
    %117 = arith.maximumf %116, %96 : vector<1x256xf32>
    %118 = arith.maximumf %117, %110 : vector<1x256xf32>
    %119 = arith.subf %40, %118 : vector<1x256xf32>
    %120 = math.exp %119 : vector<1x256xf32>
    %121 = arith.subf %54, %118 : vector<1x256xf32>
    %122 = math.exp %121 : vector<1x256xf32>
    %123 = arith.subf %68, %118 : vector<1x256xf32>
    %124 = math.exp %123 : vector<1x256xf32>
    %125 = arith.subf %82, %118 : vector<1x256xf32>
    %126 = math.exp %125 : vector<1x256xf32>
    %127 = arith.subf %96, %118 : vector<1x256xf32>
    %128 = math.exp %127 : vector<1x256xf32>
    %129 = arith.subf %110, %118 : vector<1x256xf32>
    %130 = math.exp %129 : vector<1x256xf32>
    %131 = arith.addf %120, %122 : vector<1x256xf32>
    %132 = arith.addf %131, %124 : vector<1x256xf32>
    %133 = arith.addf %132, %126 : vector<1x256xf32>
    %134 = arith.addf %133, %128 : vector<1x256xf32>
    %135 = arith.addf %134, %130 : vector<1x256xf32>
    %136 = tpu.reciprocal %135 {approx = true} : vector<1x256xf32> -> vector<1x256xf32>
    %137 = arith.mulf %120, %136 : vector<1x256xf32>
    %138 = vector.broadcast %137 : vector<1x256xf32> to vector<3x256xf32>
    %139 = arith.mulf %43, %138 : vector<3x256xf32>
    %140 = arith.mulf %122, %136 : vector<1x256xf32>
    %141 = vector.broadcast %140 : vector<1x256xf32> to vector<3x256xf32>
    %142 = arith.mulf %57, %141 : vector<3x256xf32>
    %143 = arith.addf %139, %142 : vector<3x256xf32>
    %144 = arith.mulf %124, %136 : vector<1x256xf32>
    %145 = vector.broadcast %144 : vector<1x256xf32> to vector<3x256xf32>
    %146 = arith.mulf %71, %145 : vector<3x256xf32>
    %147 = arith.addf %143, %146 : vector<3x256xf32>
    %148 = arith.mulf %126, %136 : vector<1x256xf32>
    %149 = vector.broadcast %148 : vector<1x256xf32> to vector<3x256xf32>
    %150 = arith.mulf %85, %149 : vector<3x256xf32>
    %151 = arith.addf %147, %150 : vector<3x256xf32>
    %152 = arith.mulf %128, %136 : vector<1x256xf32>
    %153 = vector.broadcast %152 : vector<1x256xf32> to vector<3x256xf32>
    %154 = arith.mulf %99, %153 : vector<3x256xf32>
    %155 = arith.addf %151, %154 : vector<3x256xf32>
    %156 = arith.mulf %130, %136 : vector<1x256xf32>
    %157 = vector.broadcast %156 : vector<1x256xf32> to vector<3x256xf32>
    %158 = arith.mulf %113, %157 : vector<3x256xf32>
    %159 = arith.addf %155, %158 : vector<3x256xf32>
    %c0_86 = arith.constant 0 : index
    %c0_87 = arith.constant 0 : index
    %c0_88 = arith.constant 0 : index
    %160 = vector.load %arg13[%c0_86, %c0_87, %c0_88] : memref<1x3x256xf32, #tpu.memory_space<vmem>>, vector<1x3x256xf32>
    %161 = vector.shape_cast %160 : vector<1x3x256xf32> to vector<3x256xf32>
    %162 = vector.shape_cast %159 : vector<3x256xf32> to vector<1x3x256xf32>
    tpu.vector_store %arg13[%c0_86, %c0_87, %c0_88], %162 {strides = array<i32>} : memref<1x3x256xf32, #tpu.memory_space<vmem>>, vector<1x3x256xf32>,
    return
  }
  func.func @transform_0(%arg0: i32) -> (i32, i32, i32) {
    %c0_i32 = arith.constant 0 : i32
    %c0_i32_0 = arith.constant 0 : i32
    %c0_i32_1 = arith.constant 0 : i32
    return %arg0, %c0_i32, %c0_i32_0 : i32, i32, i32
  }
  func.func @transform_1(%arg0: i32) -> (i32, i32) {
    %c0_i32 = arith.constant 0 : i32
    %c0_i32_0 = arith.constant 0 : i32
    %c0_i32_1 = arith.constant 0 : i32
    return %c0_i32, %c0_i32_0 : i32, i32
  }
  func.func @transform_2(%arg0: i32) -> (i32, i32) {
    %c0_i32 = arith.constant 0 : i32
    %c0_i32_0 = arith.constant 0 : i32
    %c0_i32_1 = arith.constant 0 : i32
    return %c0_i32, %c0_i32_0 : i32, i32
  }
  func.func @transform_3(%arg0: i32) -> (i32, i32) {
    %c0_i32 = arith.constant 0 : i32
    %c0_i32_0 = arith.constant 0 : i32
    %c0_i32_1 = arith.constant 0 : i32
    return %c0_i32, %c0_i32_0 : i32, i32
  }
  func.func @transform_4(%arg0: i32) -> (i32, i32) {
    %c0_i32 = arith.constant 0 : i32
    %c0_i32_0 = arith.constant 0 : i32
    %c0_i32_1 = arith.constant 0 : i32
    return %c0_i32, %c0_i32_0 : i32, i32
  }
  func.func @transform_5(%arg0: i32) -> (i32, i32) {
    %c0_i32 = arith.constant 0 : i32
    %c0_i32_0 = arith.constant 0 : i32
    %c0_i32_1 = arith.constant 0 : i32
    return %c0_i32, %c0_i32_0 : i32, i32
  }
  func.func @transform_6(%arg0: i32) -> (i32, i32) {
    %c0_i32 = arith.constant 0 : i32
    %c0_i32_0 = arith.constant 0 : i32
    %c0_i32_1 = arith.constant 0 : i32
    return %c0_i32, %c0_i32_0 : i32, i32
  }
  func.func @transform_7(%arg0: i32) -> (i32, i32, i32) {
    %c0_i32 = arith.constant 0 : i32
    %c0_i32_0 = arith.constant 0 : i32
    %c0_i32_1 = arith.constant 0 : i32
    %c0_i32_2 = arith.constant 0 : i32
    return %c0_i32, %c0_i32_0, %c0_i32_1 : i32, i32, i32
  }
  func.func @transform_8(%arg0: i32) -> (i32, i32, i32, i32) {
    %c0_i32 = arith.constant 0 : i32
    %c0_i32_0 = arith.constant 0 : i32
    %c0_i32_1 = arith.constant 0 : i32
    %c0_i32_2 = arith.constant 0 : i32
    return %arg0, %c0_i32, %c0_i32_0, %c0_i32_1 : i32, i32, i32, i32
  }
  func.func @transform_9(%arg0: i32) -> (i32, i32) {
    %c0_i32 = arith.constant 0 : i32
    %c0_i32_0 = arith.constant 0 : i32
    %c0_i32_1 = arith.constant 0 : i32
    return %c0_i32, %c0_i32_0 : i32, i32
  }
  func.func @transform_10(%arg0: i32) -> (i32, i32) {
    %c0_i32 = arith.constant 0 : i32
    %c0_i32_0 = arith.constant 0 : i32
    %c0_i32_1 = arith.constant 0 : i32
    return %c0_i32, %c0_i32_0 : i32, i32
  }
  func.func @transform_11(%arg0: i32) -> (i32, i32) {
    %c0_i32 = arith.constant 0 : i32
    %c0_i32_0 = arith.constant 0 : i32
    %c0_i32_1 = arith.constant 0 : i32
    return %c0_i32, %c0_i32_0 : i32, i32
  }
  func.func @transform_12(%arg0: i32) -> (i32, i32, i32) {
    %c0_i32 = arith.constant 0 : i32
    %c0_i32_0 = arith.constant 0 : i32
    %c0_i32_1 = arith.constant 0 : i32
    return %arg0, %c0_i32, %c0_i32_0 : i32, i32, i32
  }
}

</mosaic_0001>

<llo_original>
// kernel: csfn_forward.1
$region0: #{csfn_forward.1}
  #allocation0 [shape = 'u32[]', space=smem, size = 0x4, offset = 0x4, fixed_abs, tag = 'smem constant byte address 0x4 - core index']
  #allocation1 [shape = 'u32[144,128]{1,0:T(1,128)}', space=vmem, size = 0x12000, scoped, tag = 'internal scratch']
  %s0 = inlined_call_operand.vmem [shape: bf16[2,32,256], index: 0, kind: input, shape index: {}]
  %s1 = inlined_call_operand.vmem [shape: bf16[128,32], index: 1, kind: input, shape index: {}]
  %s2 = inlined_call_operand.vmem [shape: f32[128,1], index: 2, kind: input, shape index: {}]
  %s3 = inlined_call_operand.vmem [shape: bf16[128,128], index: 3, kind: input, shape index: {}]
  %s4 = inlined_call_operand.vmem [shape: f32[128,1], index: 4, kind: input, shape index: {}]
  %s5 = inlined_call_operand.vmem [shape: bf16[128,128], index: 5, kind: input, shape index: {}]
  %s6 = inlined_call_operand.vmem [shape: f32[128,1], index: 6, kind: input, shape index: {}]
  %s7 = inlined_call_operand.vmem [shape: bf16[6,128,128], index: 7, kind: input, shape index: {}]
  %s8 = inlined_call_operand.vmem [shape: f32[2,6,128,1], index: 8, kind: input, shape index: {}]
  %s9 = inlined_call_operand.vmem [shape: bf16[3,128], index: 9, kind: input, shape index: {}]
  %s10 = inlined_call_operand.vmem [shape: f32[3,1], index: 10, kind: input, shape index: {}]
  %s11 = inlined_call_operand.vmem [shape: bf16[1,128], index: 11, kind: input, shape index: {}]
  %s12 = inlined_call_operand.vmem [shape: f32[2,3,256], index: 12, kind: output, shape index: {}]
  %s13 = sld [smem:[#allocation0]]
  $region81: #{csfn_forward.1} parent=0
    _
  %s15 = ssub.s32 1, %s13
  %s16 = scalar_select 0, %s15, %s13
  loop: start=0, step=1, limit=4
  $region2: #{csfn_forward.1} parent=0 // loop_pre_header
    _
  $region3: #{csfn_forward.1} parent=0 // loop_header
    %s18 = sphi 0, %s22
    %p19 = scmp.ge.s32.totalorder %s18, 4
    %s28 = sphi 0, %s30
    %s31 = sphi 0, %s28
    %s32 = sphi 0, %s31
    %s48 = sphi 0, %s32
    %s52 = sphi 0, %s52
    %s54 = sphi 0, %s52
    %s55 = sphi 0, %s54
    %s69 = sphi 0, %s55
    %s73 = sphi 0, %s73
    %s75 = sphi 0, %s73
    %s76 = sphi 0, %s75
    %s90 = sphi 0, %s76
    %s94 = sphi 0, %s94
    %s96 = sphi 0, %s94
    %s97 = sphi 0, %s96
    %s111 = sphi 0, %s97
    %s115 = sphi 0, %s115
    %s117 = sphi 0, %s115
    %s118 = sphi 0, %s117
    %s132 = sphi 0, %s118
    %s136 = sphi 0, %s136
    %s138 = sphi 0, %s136
    %s139 = sphi 0, %s138
    %s153 = sphi 0, %s139
    %s157 = sphi 0, %s157
    %s159 = sphi 0, %s157
    %s160 = sphi 0, %s159
    %s174 = sphi 0, %s160
    %s178 = sphi 0, %s178
    %s180 = sphi 0, %s178
    %s181 = sphi 0, %s180
    %s195 = sphi 0, %s181
    %s201 = sphi 0, %s203
    %s204 = sphi 0, %s201
    %s205 = sphi 0, %s204
    %s221 = sphi 0, %s205
    %s225 = sphi 0, %s225
    %s227 = sphi 0, %s225
    %s228 = sphi 0, %s227
    %s242 = sphi 0, %s228
    %s246 = sphi 0, %s246
    %s248 = sphi 0, %s246
    %s249 = sphi 0, %s248
    %s263 = sphi 0, %s249
    %s267 = sphi 0, %s267
    %s269 = sphi 0, %s267
    %s270 = sphi 0, %s269
    %s284 = sphi 0, %s270
    %s290 = sphi 0, %s292
    %s293 = sphi 0, %s290
    %s294 = sphi 0, %s293
    %s310 = sphi 0, %s294
  $region4: #{csfn_forward.1} parent=0 // loop_header_branch
    %21 = sbr.rel (%p19) target = $region8
  $region5: #{csfn_forward.1} parent=0 // loop_body
    %s23 = ssub.s32 %s18, 1
    %s24 = ssub.s32 %s18, 2
    %s25 = sadd.s32 %s18, 1
    %s26 = ssub.s32 %s18, %s25
    %p27 = scmp.eq.s32.totalorder %s26, 0
    %s29 = sadd.s32 %s28, 1
    %s30 = scalar_select %p27, %s28, %s29
    %p33 = pneg %p27
    %p34 = scmp.eq.s32.totalorder %s18, 1
    %p35 = por %p33, %p34
    %p36 = scmp.ne.s32.totalorder %s28, %s31
    %p37 = scmp.eq.s32.totalorder %s18, 0
    %p38 = por %p36, %p37
    %p39 = scmp.ne.s32.totalorder %s28, %s31
    %p40 = scmp.eq.s32.totalorder %s23, 1
    %p41 = por %p39, %p40
    %p42 = scmp.ne.s32.totalorder %s31, %s32
    %p43 = scmp.eq.s32.totalorder %s23, 0
    %p44 = por %p42, %p43
    %p45 = scmp.ne.s32.totalorder %s31, %s32
    %p46 = scmp.eq.s32.totalorder %s24, 1
    %p47 = por %p45, %p46
    %p49 = scmp.ne.s32.totalorder %s32, %s48
    %p50 = scmp.eq.s32.totalorder %s24, 0
    %p51 = por %p49, %p50
    %s53 = sadd.s32 %s52, 1
    %p56 = scmp.eq.s32.totalorder %s18, 1
    %p57 = scmp.ne.s32.totalorder %s52, %s54
    %p58 = scmp.eq.s32.totalorder %s18, 0
    %p59 = por %p57, %p58
    %p60 = scmp.ne.s32.totalorder %s52, %s54
    %p61 = scmp.eq.s32.totalorder %s23, 1
    %p62 = por %p60, %p61
    %p63 = scmp.ne.s32.totalorder %s54, %s55
    %p64 = scmp.eq.s32.totalorder %s23, 0
    %p65 = por %p63, %p64
    %p66 = scmp.ne.s32.totalorder %s54, %s55
    %p67 = scmp.eq.s32.totalorder %s24, 1
    %p68 = por %p66, %p67
    %p70 = scmp.ne.s32.totalorder %s55, %s69
    %p71 = scmp.eq.s32.totalorder %s24, 0
    %p72 = por %p70, %p71
    %s74 = sadd.s32 %s73, 1
    %p77 = scmp.eq.s32.totalorder %s18, 1
    %p78 = scmp.ne.s32.totalorder %s73, %s75
    %p79 = scmp.eq.s32.totalorder %s18, 0
    %p80 = por %p78, %p79
    %p81 = scmp.ne.s32.totalorder %s73, %s75
    %p82 = scmp.eq.s32.totalorder %s23, 1
    %p83 = por %p81, %p82
    %p84 = scmp.ne.s32.totalorder %s75, %s76
    %p85 = scmp.eq.s32.totalorder %s23, 0
    %p86 = por %p84, %p85
    %p87 = scmp.ne.s32.totalorder %s75, %s76
    %p88 = scmp.eq.s32.totalorder %s24, 1
    %p89 = por %p87, %p88
    %p91 = scmp.ne.s32.totalorder %s76, %s90
    %p92 = scmp.eq.s32.totalorder %s24, 0
    %p93 = por %p91, %p92
    %s95 = sadd.s32 %s94, 1
    %p98 = scmp.eq.s32.totalorder %s18, 1
    %p99 = scmp.ne.s32.totalorder %s94, %s96
    %p100 = scmp.eq.s32.totalorder %s18, 0
    %p101 = por %p99, %p100
    %p102 = scmp.ne.s32.totalorder %s94, %s96
    %p103 = scmp.eq.s32.totalorder %s23, 1
    %p104 = por %p102, %p103
    %p105 = scmp.ne.s32.totalorder %s96, %s97
    %p106 = scmp.eq.s32.totalorder %s23, 0
    %p107 = por %p105, %p106
    %p108 = scmp.ne.s32.totalorder %s96, %s97
    %p109 = scmp.eq.s32.totalorder %s24, 1
    %p110 = por %p108, %p109
    %p112 = scmp.ne.s32.totalorder %s97, %s111
    %p113 = scmp.eq.s32.totalorder %s24, 0
    %p114 = por %p112, %p113
    %s116 = sadd.s32 %s115, 1
    %p119 = scmp.eq.s32.totalorder %s18, 1
    %p120 = scmp.ne.s32.totalorder %s115, %s117
    %p121 = scmp.eq.s32.totalorder %s18, 0
    %p122 = por %p120, %p121
    %p123 = scmp.ne.s32.totalorder %s115, %s117
    %p124 = scmp.eq.s32.totalorder %s23, 1
    %p125 = por %p123, %p124
    %p126 = scmp.ne.s32.totalorder %s117, %s118
    %p127 = scmp.eq.s32.totalorder %s23, 0
    %p128 = por %p126, %p127
    %p129 = scmp.ne.s32.totalorder %s117, %s118
    %p130 = scmp.eq.s32.totalorder %s24, 1
    %p131 = por %p129, %p130
    %p133 = scmp.ne.s32.totalorder %s118, %s132
    %p134 = scmp.eq.s32.totalorder %s24, 0
    %p135 = por %p133, %p134
    %s137 = sadd.s32 %s136, 1
    %p140 = scmp.eq.s32.totalorder %s18, 1
    %p141 = scmp.ne.s32.totalorder %s136, %s138
    %p142 = scmp.eq.s32.totalorder %s18, 0
    %p143 = por %p141, %p142
    %p144 = scmp.ne.s32.totalorder %s136, %s138
    %p145 = scmp.eq.s32.totalorder %s23, 1
    %p146 = por %p144, %p145
    %p147 = scmp.ne.s32.totalorder %s138, %s139
    %p148 = scmp.eq.s32.totalorder %s23, 0
    %p149 = por %p147, %p148
    %p150 = scmp.ne.s32.totalorder %s138, %s139
    %p151 = scmp.eq.s32.totalorder %s24, 1
    %p152 = por %p150, %p151
    %p154 = scmp.ne.s32.totalorder %s139, %s153
    %p155 = scmp.eq.s32.totalorder %s24, 0
    %p156 = por %p154, %p155
    %s158 = sadd.s32 %s157, 1
    %p161 = scmp.eq.s32.totalorder %s18, 1
    %p162 = scmp.ne.s32.totalorder %s157, %s159
    %p163 = scmp.eq.s32.totalorder %s18, 0
    %p164 = por %p162, %p163
    %p165 = scmp.ne.s32.totalorder %s157, %s159
    %p166 = scmp.eq.s32.totalorder %s23, 1
    %p167 = por %p165, %p166
    %p168 = scmp.ne.s32.totalorder %s159, %s160
    %p169 = scmp.eq.s32.totalorder %s23, 0
    %p170 = por %p168, %p169
    %p171 = scmp.ne.s32.totalorder %s159, %s160
    %p172 = scmp.eq.s32.totalorder %s24, 1
    %p173 = por %p171, %p172
    %p175 = scmp.ne.s32.totalorder %s160, %s174
    %p176 = scmp.eq.s32.totalorder %s24, 0
    %p177 = por %p175, %p176
    %s179 = sadd.s32 %s178, 1
    %p182 = scmp.eq.s32.totalorder %s18, 1
    %p183 = scmp.ne.s32.totalorder %s178, %s180
    %p184 = scmp.eq.s32.totalorder %s18, 0
    %p185 = por %p183, %p184
    %p186 = scmp.ne.s32.totalorder %s178, %s180
    %p187 = scmp.eq.s32.totalorder %s23, 1
    %p188 = por %p186, %p187
    %p189 = scmp.ne.s32.totalorder %s180, %s181
    %p190 = scmp.eq.s32.totalorder %s23, 0
    %p191 = por %p189, %p190
    %p192 = scmp.ne.s32.totalorder %s180, %s181
    %p193 = scmp.eq.s32.totalorder %s24, 1
    %p194 = por %p192, %p193
    %p196 = scmp.ne.s32.totalorder %s181, %s195
    %p197 = scmp.eq.s32.totalorder %s24, 0
    %p198 = por %p196, %p197
    %s199 = ssub.s32 %s18, %s25
    %p200 = scmp.eq.s32.totalorder %s199, 0
    %s202 = sadd.s32 %s201, 1
    %s203 = scalar_select %p200, %s201, %s202
    %p206 = pneg %p200
    %p207 = scmp.eq.s32.totalorder %s18, 1
    %p208 = por %p206, %p207
    %p209 = scmp.ne.s32.totalorder %s201, %s204
    %p210 = scmp.eq.s32.totalorder %s18, 0
    %p211 = por %p209, %p210
    %p212 = scmp.ne.s32.totalorder %s201, %s204
    %p213 = scmp.eq.s32.totalorder %s23, 1
    %p214 = por %p212, %p213
    %p215 = scmp.ne.s32.totalorder %s204, %s205
    %p216 = scmp.eq.s32.totalorder %s23, 0
    %p217 = por %p215, %p216
    %p218 = scmp.ne.s32.totalorder %s204, %s205
    %p219 = scmp.eq.s32.totalorder %s24, 1
    %p220 = por %p218, %p219
    %p222 = scmp.ne.s32.totalorder %s205, %s221
    %p223 = scmp.eq.s32.totalorder %s24, 0
    %p224 = por %p222, %p223
    %s226 = sadd.s32 %s225, 1
    %p229 = scmp.eq.s32.totalorder %s18, 1
    %p230 = scmp.ne.s32.totalorder %s225, %s227
    %p231 = scmp.eq.s32.totalorder %s18, 0
    %p232 = por %p230, %p231
    %p233 = scmp.ne.s32.totalorder %s225, %s227
    %p234 = scmp.eq.s32.totalorder %s23, 1
    %p235 = por %p233, %p234
    %p236 = scmp.ne.s32.totalorder %s227, %s228
    %p237 = scmp.eq.s32.totalorder %s23, 0
    %p238 = por %p236, %p237
    %p239 = scmp.ne.s32.totalorder %s227, %s228
    %p240 = scmp.eq.s32.totalorder %s24, 1
    %p241 = por %p239, %p240
    %p243 = scmp.ne.s32.totalorder %s228, %s242
    %p244 = scmp.eq.s32.totalorder %s24, 0
    %p245 = por %p243, %p244
    %s247 = sadd.s32 %s246, 1
    %p250 = scmp.eq.s32.totalorder %s18, 1
    %p251 = scmp.ne.s32.totalorder %s246, %s248
    %p252 = scmp.eq.s32.totalorder %s18, 0
    %p253 = por %p251, %p252
    %p254 = scmp.ne.s32.totalorder %s246, %s248
    %p255 = scmp.eq.s32.totalorder %s23, 1
    %p256 = por %p254, %p255
    %p257 = scmp.ne.s32.totalorder %s248, %s249
    %p258 = scmp.eq.s32.totalorder %s23, 0
    %p259 = por %p257, %p258
    %p260 = scmp.ne.s32.totalorder %s248, %s249
    %p261 = scmp.eq.s32.totalorder %s24, 1
    %p262 = por %p260, %p261
    %p264 = scmp.ne.s32.totalorder %s249, %s263
    %p265 = scmp.eq.s32.totalorder %s24, 0
    %p266 = por %p264, %p265
    %s268 = sadd.s32 %s267, 1
    %p271 = scmp.eq.s32.totalorder %s18, 1
    %p272 = scmp.ne.s32.totalorder %s267, %s269
    %p273 = scmp.eq.s32.totalorder %s18, 0
    %p274 = por %p272, %p273
    %p275 = scmp.ne.s32.totalorder %s267, %s269
    %p276 = scmp.eq.s32.totalorder %s23, 1
    %p277 = por %p275, %p276
    %p278 = scmp.ne.s32.totalorder %s269, %s270
    %p279 = scmp.eq.s32.totalorder %s23, 0
    %p280 = por %p278, %p279
    %p281 = scmp.ne.s32.totalorder %s269, %s270
    %p282 = scmp.eq.s32.totalorder %s24, 1
    %p283 = por %p281, %p282
    %p285 = scmp.ne.s32.totalorder %s270, %s284
    %p286 = scmp.eq.s32.totalorder %s24, 0
    %p287 = por %p285, %p286
    %s288 = ssub.s32 %s18, %s25
    %p289 = scmp.eq.s32.totalorder %s288, 0
    %s291 = sadd.s32 %s290, 1
    %s292 = scalar_select %p289, %s290, %s291
    %p295 = pneg %p289
    %p296 = scmp.eq.s32.totalorder %s18, 1
    %p297 = por %p295, %p296
    %p298 = scmp.ne.s32.totalorder %s290, %s293
    %p299 = scmp.eq.s32.totalorder %s18, 0
    %p300 = por %p298, %p299
    %p301 = scmp.ne.s32.totalorder %s290, %s293
    %p302 = scmp.eq.s32.totalorder %s23, 1
    %p303 = por %p301, %p302
    %p304 = scmp.ne.s32.totalorder %s293, %s294
    %p305 = scmp.eq.s32.totalorder %s23, 0
    %p306 = por %p304, %p305
    %p307 = scmp.ne.s32.totalorder %s293, %s294
    %p308 = scmp.eq.s32.totalorder %s24, 1
    %p309 = por %p307, %p308
    %p311 = scmp.ne.s32.totalorder %s294, %s310
    %p312 = scmp.eq.s32.totalorder %s24, 0
    %p313 = por %p311, %p312
    %p314 = scmp.le.s32.totalorder 1, %s18
    %p315 = scmp.lt.s32.totalorder %s18, 3
    %p316 = pnand %p314, %p315
    %p317 = pneg %p316
    // Predicated region
    $region9: #{csfn_forward.1} parent=5 // pred_check
      _
    $region10: #{csfn_forward.1} parent=5 // pred_check_branch
      %319 = sbr.rel (%p316) target = $region12
    $region11: #{csfn_forward.1} parent=5 // pred_region
      %s320 = ssub.s32 %s18, 1
      // Predicated region
      $region13: #{csfn_forward.1} parent=11 // pred_check
        %p321 = pneg %p65
      $region14: #{csfn_forward.1} parent=11 // pred_check_branch
        %323 = sbr.rel (%p321) target = $region16
      $region15: #{csfn_forward.1} parent=11 // pred_region
        _
      $region16: #{csfn_forward.1} parent=11 // pred_fallthru
        _
      // Predicated region
      $region17: #{csfn_forward.1} parent=11 // pred_check
        %p324 = pneg %p86
      $region18: #{csfn_forward.1} parent=11 // pred_check_branch
        %326 = sbr.rel (%p324) target = $region20
      $region19: #{csfn_forward.1} parent=11 // pred_region
        _
      $region20: #{csfn_forward.1} parent=11 // pred_fallthru
        _
      // Predicated region
      $region21: #{csfn_forward.1} parent=11 // pred_check
        %p327 = pneg %p107
      $region22: #{csfn_forward.1} parent=11 // pred_check_branch
        %329 = sbr.rel (%p327) target = $region24
      $region23: #{csfn_forward.1} parent=11 // pred_region
        _
      $region24: #{csfn_forward.1} parent=11 // pred_fallthru
        _
      // Predicated region
      $region25: #{csfn_forward.1} parent=11 // pred_check
        %p330 = pneg %p128
      $region26: #{csfn_forward.1} parent=11 // pred_check_branch
        %332 = sbr.rel (%p330) target = $region28
      $region27: #{csfn_forward.1} parent=11 // pred_region
        _
      $region28: #{csfn_forward.1} parent=11 // pred_fallthru
        _
      // Predicated region
      $region29: #{csfn_forward.1} parent=11 // pred_check
        %p333 = pneg %p149
      $region30: #{csfn_forward.1} parent=11 // pred_check_branch
        %335 = sbr.rel (%p333) target = $region32
      $region31: #{csfn_forward.1} parent=11 // pred_region
        _
      $region32: #{csfn_forward.1} parent=11 // pred_fallthru
        _
      // Predicated region
      $region33: #{csfn_forward.1} parent=11 // pred_check
        %p336 = pneg %p170
      $region34: #{csfn_forward.1} parent=11 // pred_check_branch
        %338 = sbr.rel (%p336) target = $region36
      $region35: #{csfn_forward.1} parent=11 // pred_region
        _
      $region36: #{csfn_forward.1} parent=11 // pred_fallthru
        _
      // Predicated region
      $region37: #{csfn_forward.1} parent=11 // pred_check
        %p339 = pneg %p191
      $region38: #{csfn_forward.1} parent=11 // pred_check_branch
        %341 = sbr.rel (%p339) target = $region40
      $region39: #{csfn_forward.1} parent=11 // pred_region
        _
      $region40: #{csfn_forward.1} parent=11 // pred_fallthru
        _
      // Predicated region
      $region41: #{csfn_forward.1} parent=11 // pred_check
        %p342 = pneg %p238
      $region42: #{csfn_forward.1} parent=11 // pred_check_branch
        %344 = sbr.rel (%p342) target = $region44
      $region43: #{csfn_forward.1} parent=11 // pred_region
        _
      $region44: #{csfn_forward.1} parent=11 // pred_fallthru
        _
      // Predicated region
      $region45: #{csfn_forward.1} parent=11 // pred_check
        %p345 = pneg %p259
      $region46: #{csfn_forward.1} parent=11 // pred_check_branch
        %347 = sbr.rel (%p345) target = $region48
      $region47: #{csfn_forward.1} parent=11 // pred_region
        _
      $region48: #{csfn_forward.1} parent=11 // pred_fallthru
        _
      // Predicated region
      $region49: #{csfn_forward.1} parent=11 // pred_check
        %p348 = pneg %p280
      $region50: #{csfn_forward.1} parent=11 // pred_check_branch
        %350 = sbr.rel (%p348) target = $region52
      $region51: #{csfn_forward.1} parent=11 // pred_region
        _
      $region52: #{csfn_forward.1} parent=11 // pred_fallthru
        _
    $region12: #{csfn_forward.1} parent=5 // pred_fallthru
      _
    %p351 = scmp.lt.s32.totalorder %s18, 2
    // Predicated region
    $region53: #{csfn_forward.1} parent=5 // pred_check
      %p352 = pneg %p351
    $region54: #{csfn_forward.1} parent=5 // pred_check_branch
      %354 = sbr.rel (%p352) target = $region56
    $region55: #{csfn_forward.1} parent=5 // pred_region
      // Predicated region
      $region57: #{csfn_forward.1} parent=55 // pred_check
        %p355 = pneg %p38
      $region58: #{csfn_forward.1} parent=55 // pred_check_branch
        %357 = sbr.rel (%p355) target = $region60
      $region59: #{csfn_forward.1} parent=55 // pred_region
        %p358 = scmp.lt.s32.totalorder %s18, 1
        %s359 = scalar_select %p358, %s18, 1
        %s360 = smul.addr %s359, 8
        %s361 = smul.addr %s360, 4
        %s362 = scalar_lea.vmem %s0, %s361
      $region60: #{csfn_forward.1} parent=55 // pred_fallthru
        _
      // Predicated region
      $region61: #{csfn_forward.1} parent=55 // pred_check
        %p363 = pneg %p211
      $region62: #{csfn_forward.1} parent=55 // pred_check_branch
        %365 = sbr.rel (%p363) target = $region64
      $region63: #{csfn_forward.1} parent=55 // pred_region
        %p366 = scmp.lt.s32.totalorder %s18, 1
        %s367 = scalar_select %p366, %s18, 1
        %s368 = smul.addr %s367, 96
        %s369 = smul.addr %s368, 8
        %s370 = scalar_lea.vmem %s8, %s369
      $region64: #{csfn_forward.1} parent=55 // pred_fallthru
        _
    $region56: #{csfn_forward.1} parent=5 // pred_fallthru
      _
    %p371 = scmp.le.s32.totalorder 1, %s18
    %p372 = scmp.lt.s32.totalorder %s18, 3
    %p373 = pnand %p371, %p372
    %p374 = pneg %p373
    // Predicated region
    $region65: #{csfn_forward.1} parent=5 // pred_check
      _
    $region66: #{csfn_forward.1} parent=5 // pred_check_branch
      %376 = sbr.rel (%p373) target = $region68
    $region67: #{csfn_forward.1} parent=5 // pred_region
      %s377 = ssub.s32 %s18, 1
      %p378 = scmp.lt.s32.totalorder %s23, 1
      %s379 = scalar_select %p378, %s23, 1
      %s380 = smul.addr %s379, 8
      %s381 = smul.addr %s380, 4
      %s382 = scalar_lea.vmem %s0, %s381
      %p383 = pneg %p44
      %p384 = pneg %p41
      %p385 = pneg %p65
      %p386 = pneg %p62
      %p387 = pneg %p86
      %p388 = pneg %p83
      %p389 = pneg %p107
      %p390 = pneg %p104
      %p391 = pneg %p128
      %p392 = pneg %p125
      %p393 = pneg %p149
      %p394 = pneg %p146
      %p395 = pneg %p170
      %p396 = pneg %p167
      %p397 = pneg %p191
      %p398 = pneg %p188
      %p399 = scmp.lt.s32.totalorder %s23, 1
      %s400 = scalar_select %p399, %s23, 1
      %s401 = smul.addr %s400, 96
      %s402 = smul.addr %s401, 8
      %s403 = scalar_lea.vmem %s8, %s402
      %p404 = pneg %p217
      %p405 = pneg %p214
      %p406 = pneg %p238
      %p407 = pneg %p235
      %p408 = pneg %p259
      %p409 = pneg %p256
      %p410 = pneg %p280
      %p411 = pneg %p277
      %p412 = pneg %p306
      %p413 = pneg %p303
      %p414 = scmp.lt.s32.totalorder %s23, 1
      %s415 = scalar_select %p414, %s23, 1
      %s416 = smul.addr %s415, 2
      %s417 = smul.addr %s416, 4
      %s418 = scalar_lea.vmem %s12, %s417
      %p419 = scmp.lt.s32.totalorder %s23, 1
      %s420 = scalar_select %p419, %s23, 1
      %s421 = smul.addr %s420, 8
      %s422 = smul.addr %s421, 4
      %s423 = scalar_lea.vmem %s0, %s422
      %p424 = scmp.lt.s32.totalorder %s23, 1
      %s425 = scalar_select %p424, %s23, 1
      %s426 = smul.addr %s425, 96
      %s427 = smul.addr %s426, 8
      %s428 = scalar_lea.vmem %s8, %s427
      %p429 = scmp.lt.s32.totalorder %s23, 1
      %s430 = scalar_select %p429, %s23, 1
      %s431 = smul.addr %s430, 2
      %s432 = smul.addr %s431, 4
      %s433 = scalar_lea.vmem %s12, %s432
      %v435 = vld [vmem:[%s423] sm:$0xff]
      %v436 = vld [vmem:[%s423 + $0x8] sm:$0xff]
      %v437 = vld [vmem:[%s423 + $0x10] sm:$0xff]
      %v438 = vld [vmem:[%s423 + $0x18] sm:$0xff]
      %v439 = vld [vmem:[%s1] sm:$0xf]
      %v440 = vld [vmem:[%s1 + $0x4] sm:$0xf]
      %v441 = vld [vmem:[%s1 + $0x8] sm:$0xf]
      %v442 = vld [vmem:[%s1 + $0xc] sm:$0xf]
      %v443 = vld [vmem:[%s1 + $0x10] sm:$0xf]
      %v444 = vld [vmem:[%s1 + $0x14] sm:$0xf]
      %v445 = vld [vmem:[%s1 + $0x18] sm:$0xf]
      %v446 = vld [vmem:[%s1 + $0x1c] sm:$0xf]
      %v447 = vld [vmem:[%s1 + $0x20] sm:$0xf]
      %v448 = vld [vmem:[%s1 + $0x24] sm:$0xf]
      %v449 = vld [vmem:[%s1 + $0x28] sm:$0xf]
      %v450 = vld [vmem:[%s1 + $0x2c] sm:$0xf]
      %v451 = vld [vmem:[%s1 + $0x30] sm:$0xf]
      %v452 = vld [vmem:[%s1 + $0x34] sm:$0xf]
      %v453 = vld [vmem:[%s1 + $0x38] sm:$0xf]
      %v454 = vld [vmem:[%s1 + $0x3c] sm:$0xf]
      %v455 = vld [vmem:[%s2] sm:$0xff]
      %v456 = vld [vmem:[%s2 + $0x8] sm:$0xff]
      %v457 = vld [vmem:[%s2 + $0x10] sm:$0xff]
      %v458 = vld [vmem:[%s2 + $0x18] sm:$0xff]
      %v459 = vld [vmem:[%s2 + $0x20] sm:$0xff]
      %v460 = vld [vmem:[%s2 + $0x28] sm:$0xff]
      %v461 = vld [vmem:[%s2 + $0x30] sm:$0xff]
      %v462 = vld [vmem:[%s2 + $0x38] sm:$0xff]
      %v463 = vld [vmem:[%s2 + $0x40] sm:$0xff]
      %v464 = vld [vmem:[%s2 + $0x48] sm:$0xff]
      %v465 = vld [vmem:[%s2 + $0x50] sm:$0xff]
      %v466 = vld [vmem:[%s2 + $0x58] sm:$0xff]
      %v467 = vld [vmem:[%s2 + $0x60] sm:$0xff]
      %v468 = vld [vmem:[%s2 + $0x68] sm:$0xff]
      %v469 = vld [vmem:[%s2 + $0x70] sm:$0xff]
      %v470 = vld [vmem:[%s2 + $0x78] sm:$0xff]
      %472 = vset.pattern.permute.xlu0 0
      %473 = vperm.xlu0 %472, %v455
      %v474 = vpop.permute.xlu0 %473
      %477 = vset.pattern.permute.xlu0 0
      %478 = vperm.xlu0 %477, %v456
      %v479 = vpop.permute.xlu0 %478
      %482 = vset.pattern.permute.xlu0 0
      %483 = vperm.xlu0 %482, %v457
      %v484 = vpop.permute.xlu0 %483
      %487 = vset.pattern.permute.xlu0 0
      %488 = vperm.xlu0 %487, %v458
      %v489 = vpop.permute.xlu0 %488
      %492 = vset.pattern.permute.xlu0 0
      %493 = vperm.xlu0 %492, %v459
      %v494 = vpop.permute.xlu0 %493
      %497 = vset.pattern.permute.xlu0 0
      %498 = vperm.xlu0 %497, %v460
      %v499 = vpop.permute.xlu0 %498
      %502 = vset.pattern.permute.xlu0 0
      %503 = vperm.xlu0 %502, %v461
      %v504 = vpop.permute.xlu0 %503
      %507 = vset.pattern.permute.xlu0 0
      %508 = vperm.xlu0 %507, %v462
      %v509 = vpop.permute.xlu0 %508
      %512 = vset.pattern.permute.xlu0 0
      %513 = vperm.xlu0 %512, %v463
      %v514 = vpop.permute.xlu0 %513
      %517 = vset.pattern.permute.xlu0 0
      %518 = vperm.xlu0 %517, %v464
      %v519 = vpop.permute.xlu0 %518
      %522 = vset.pattern.permute.xlu0 0
      %523 = vperm.xlu0 %522, %v465
      %v524 = vpop.permute.xlu0 %523
      %527 = vset.pattern.permute.xlu0 0
      %528 = vperm.xlu0 %527, %v466
      %v529 = vpop.permute.xlu0 %528
      %532 = vset.pattern.permute.xlu0 0
      %533 = vperm.xlu0 %532, %v467
      %v534 = vpop.permute.xlu0 %533
      %537 = vset.pattern.permute.xlu0 0
      %538 = vperm.xlu0 %537, %v468
      %v539 = vpop.permute.xlu0 %538
      %542 = vset.pattern.permute.xlu0 0
      %543 = vperm.xlu0 %542, %v469
      %v544 = vpop.permute.xlu0 %543
      %547 = vset.pattern.permute.xlu0 0
      %548 = vperm.xlu0 %547, %v470
      %v549 = vpop.permute.xlu0 %548
      %v567 = vunpack.c.l.b16 %v439
      %v568 = vunpack.c.l.b16 %v440
      %v569 = vunpack.c.l.b16 %v441
      %v570 = vunpack.c.l.b16 %v442
      %v571 = vunpack.c.l.b16 %v443
      %v572 = vunpack.c.l.b16 %v444
      %v573 = vunpack.c.l.b16 %v445
      %v574 = vunpack.c.l.b16 %v446
      %v575 = vunpack.c.l.b16 %v447
      %v576 = vunpack.c.l.b16 %v448
      %v577 = vunpack.c.l.b16 %v449
      %v578 = vunpack.c.l.b16 %v450
      %v579 = vunpack.c.l.b16 %v451
      %v580 = vunpack.c.l.b16 %v452
      %v581 = vunpack.c.l.b16 %v453
      %v582 = vunpack.c.l.b16 %v454
      %v583 = vpack.c.b16 %v568, %v567
      %v584 = vpack.c.b16 %v570, %v569
      %v585 = vpack.c.b16 %v572, %v571
      %v586 = vpack.c.b16 %v574, %v573
      %v587 = vpack.c.b16 %v576, %v575
      %v588 = vpack.c.b16 %v578, %v577
      %v589 = vpack.c.b16 %v580, %v579
      %v590 = vpack.c.b16 %v582, %v581
      %v595 = vunpack.c.l.b16 %v435
      %v596 = vunpack.c.h.b16 %v435
      %v597 = vunpack.c.l.b16 %v436
      %v598 = vunpack.c.h.b16 %v436
      %v599 = vunpack.c.l.b16 %v437
      %v600 = vunpack.c.h.b16 %v437
      %v601 = vunpack.c.l.b16 %v438
      %v602 = vunpack.c.h.b16 %v438
      %v603 = vpack.c.b16 %v597, %v595
      %v604 = vpack.c.b16 %v598, %v596
      %v605 = vpack.c.b16 %v601, %v599
      %v606 = vpack.c.b16 %v602, %v600
      %vm611 = vcmask 261120
      %v613 = vsel %vm611, %v583, 0
      %v616 = vsel %vm611, %v584, 0
      %v619 = vsel %vm611, %v585, 0
      %v622 = vsel %vm611, %v586, 0
      %v625 = vsel %vm611, %v587, 0
      %v628 = vsel %vm611, %v588, 0
      %v631 = vsel %vm611, %v589, 0
      %v634 = vsel %vm611, %v590, 0
      %636 = vmatprep.subr.bf16.mxu0 %v604
      %637 = vmatpush1.bf16.msra.mxu0 %v603
      %638 = vmatprep.subr.bf16.mxu0 %v606
      %639 = vmatpush1.bf16.msra.mxu0 %v605
      %640 = vmatprep.subr.bf16.mxu0 0
      %641 = vmatpush1.bf16.msra.mxu0 0
      %642 = vmatprep.subr.bf16.mxu0 0
      %643 = vmatpush1.bf16.msra.mxu0 0
      %644 = vmatprep.subr.bf16.mxu0 0
      %645 = vmatpush1.bf16.msra.mxu0 0
      %646 = vmatprep.subr.bf16.mxu0 0
      %647 = vmatpush1.bf16.msra.mxu0 0
      %648 = vmatprep.subr.bf16.mxu0 0
      %649 = vmatpush1.bf16.msra.mxu0 0
      %650 = vmatprep.subr.bf16.mxu0 0
      %651 = vmatpush1.bf16.msra.mxu0 0
      %652 = vmatprep.subr.bf16.mxu0 0
      %653 = vmatpush1.bf16.msra.mxu0 0
      %654 = vmatprep.subr.bf16.mxu0 0
      %655 = vmatpush1.bf16.msra.mxu0 0
      %656 = vmatprep.subr.bf16.mxu0 0
      %657 = vmatpush1.bf16.msra.mxu0 0
      %658 = vmatprep.subr.bf16.mxu0 0
      %659 = vmatpush1.bf16.msra.mxu0 0
      %660 = vmatprep.subr.bf16.mxu0 0
      %661 = vmatpush1.bf16.msra.mxu0 0
      %662 = vmatprep.subr.bf16.mxu0 0
      %663 = vmatpush1.bf16.msra.mxu0 0
      %664 = vmatprep.subr.bf16.mxu0 0
      %665 = vmatpush1.bf16.msra.mxu0 0
      %666 = vmatprep.subr.bf16.mxu0 0
      %667 = vmatpush1.bf16.msra.mxu0 0
      %668 = vmatprep.mubr.bf16.mxu0 0
      %669 = vmatmul.mubr.bf16.gmra.mrb[0].mxu0 %v613
      %v670 = vpop.f32.mrb[0].mxu0
      %v671 = vadd.f32 %v474, %v670
      %v672 = vpop.f32.mrb[0].mxu0
      %v673 = vadd.f32 %v474, %v672
      %v674 = vpop.f32.mrb[0].mxu0
      %v675 = vadd.f32 %v479, %v674
      %v676 = vpop.f32.mrb[0].mxu0
      %v677 = vadd.f32 %v479, %v676
      %678 = vmatprep.mubr.bf16.mxu0 0
      %679 = vmatmul.mubr.bf16.gmra.mrb[0].mxu0 %v616
      %v680 = vpop.f32.mrb[0].mxu0
      %v681 = vadd.f32 %v484, %v680
      %v682 = vpop.f32.mrb[0].mxu0
      %v683 = vadd.f32 %v484, %v682
      %v684 = vpop.f32.mrb[0].mxu0
      %v685 = vadd.f32 %v489, %v684
      %v686 = vpop.f32.mrb[0].mxu0
      %v687 = vadd.f32 %v489, %v686
      %688 = vmatprep.mubr.bf16.mxu0 0
      %689 = vmatmul.mubr.bf16.gmra.mrb[0].mxu0 %v619
      %v690 = vpop.f32.mrb[0].mxu0
      %v691 = vadd.f32 %v494, %v690
      %v692 = vpop.f32.mrb[0].mxu0
      %v693 = vadd.f32 %v494, %v692
      %v694 = vpop.f32.mrb[0].mxu0
      %v695 = vadd.f32 %v499, %v694
      %v696 = vpop.f32.mrb[0].mxu0
      %v697 = vadd.f32 %v499, %v696
      %698 = vmatprep.mubr.bf16.mxu0 0
      %699 = vmatmul.mubr.bf16.gmra.mrb[0].mxu0 %v622
      %v700 = vpop.f32.mrb[0].mxu0
      %v701 = vadd.f32 %v504, %v700
      %v702 = vpop.f32.mrb[0].mxu0
      %v703 = vadd.f32 %v504, %v702
      %v704 = vpop.f32.mrb[0].mxu0
      %v705 = vadd.f32 %v509, %v704
      %v706 = vpop.f32.mrb[0].mxu0
      %v707 = vadd.f32 %v509, %v706
      %708 = vmatprep.mubr.bf16.mxu0 0
      %709 = vmatmul.mubr.bf16.gmra.mrb[0].mxu0 %v625
      %v710 = vpop.f32.mrb[0].mxu0
      %v711 = vadd.f32 %v514, %v710
      %v712 = vpop.f32.mrb[0].mxu0
      %v713 = vadd.f32 %v514, %v712
      %v714 = vpop.f32.mrb[0].mxu0
      %v715 = vadd.f32 %v519, %v714
      %v716 = vpop.f32.mrb[0].mxu0
      %v717 = vadd.f32 %v519, %v716
      %718 = vmatprep.mubr.bf16.mxu0 0
      %719 = vmatmul.mubr.bf16.gmra.mrb[0].mxu0 %v628
      %v720 = vpop.f32.mrb[0].mxu0
      %v721 = vadd.f32 %v524, %v720
      %v722 = vpop.f32.mrb[0].mxu0
      %v723 = vadd.f32 %v524, %v722
      %v724 = vpop.f32.mrb[0].mxu0
      %v725 = vadd.f32 %v529, %v724
      %v726 = vpop.f32.mrb[0].mxu0
      %v727 = vadd.f32 %v529, %v726
      %728 = vmatprep.mubr.bf16.mxu0 0
      %729 = vmatmul.mubr.bf16.gmra.mrb[0].mxu0 %v631
      %v730 = vpop.f32.mrb[0].mxu0
      %v731 = vadd.f32 %v534, %v730
      %v732 = vpop.f32.mrb[0].mxu0
      %v733 = vadd.f32 %v534, %v732
      %v734 = vpop.f32.mrb[0].mxu0
      %v735 = vadd.f32 %v539, %v734
      %v736 = vpop.f32.mrb[0].mxu0
      %v737 = vadd.f32 %v539, %v736
      %738 = vmatprep.mubr.bf16.mxu0 0
      %739 = vmatmul.mubr.bf16.gmra.mrb[0].mxu0 %v634
      %v740 = vpop.f32.mrb[0].mxu0
      %v741 = vadd.f32 %v544, %v740
      %v742 = vpop.f32.mrb[0].mxu0
      %v743 = vadd.f32 %v544, %v742
      %v744 = vpop.f32.mrb[0].mxu0
      %v745 = vadd.f32 %v549, %v744
      %v746 = vpop.f32.mrb[0].mxu0
      %v747 = vadd.f32 %v549, %v746
      %748 = vdwg.mxu0
      %v749 = vmax.f32 %v671, 0.0
      %v750 = vmax.f32 %v673, 0.0
      %v751 = vmax.f32 %v675, 0.0
      %v752 = vmax.f32 %v677, 0.0
      %v753 = vmax.f32 %v681, 0.0
      %v754 = vmax.f32 %v683, 0.0
      %v755 = vmax.f32 %v685, 0.0
      %v756 = vmax.f32 %v687, 0.0
      %v757 = vmax.f32 %v691, 0.0
      %v758 = vmax.f32 %v693, 0.0
      %v759 = vmax.f32 %v695, 0.0
      %v760 = vmax.f32 %v697, 0.0
      %v761 = vmax.f32 %v701, 0.0
      %v762 = vmax.f32 %v703, 0.0
      %v763 = vmax.f32 %v705, 0.0
      %v764 = vmax.f32 %v707, 0.0
      %v765 = vmax.f32 %v711, 0.0
      %v766 = vmax.f32 %v713, 0.0
      %v767 = vmax.f32 %v715, 0.0
      %v768 = vmax.f32 %v717, 0.0
      %v769 = vmax.f32 %v721, 0.0
      %v770 = vmax.f32 %v723, 0.0
      %v771 = vmax.f32 %v725, 0.0
      %v772 = vmax.f32 %v727, 0.0
      %v773 = vmax.f32 %v731, 0.0
      %v774 = vmax.f32 %v733, 0.0
      %v775 = vmax.f32 %v735, 0.0
      %v776 = vmax.f32 %v737, 0.0
      %v777 = vmax.f32 %v741, 0.0
      %v778 = vmax.f32 %v743, 0.0
      %v779 = vmax.f32 %v745, 0.0
      %v780 = vmax.f32 %v747, 0.0
      %v781 = vld [vmem:[%s3] sm:$0xf]
      %v782 = vld [vmem:[%s3 + $0x4] sm:$0xf]
      %v783 = vld [vmem:[%s3 + $0x8] sm:$0xf]
      %v784 = vld [vmem:[%s3 + $0xc] sm:$0xf]
      %v785 = vld [vmem:[%s3 + $0x10] sm:$0xf]
      %v786 = vld [vmem:[%s3 + $0x14] sm:$0xf]
      %v787 = vld [vmem:[%s3 + $0x18] sm:$0xf]
      %v788 = vld [vmem:[%s3 + $0x1c] sm:$0xf]
      %v789 = vld [vmem:[%s3 + $0x20] sm:$0xf]
      %v790 = vld [vmem:[%s3 + $0x24] sm:$0xf]
      %v791 = vld [vmem:[%s3 + $0x28] sm:$0xf]
      %v792 = vld [vmem:[%s3 + $0x2c] sm:$0xf]
      %v793 = vld [vmem:[%s3 + $0x30] sm:$0xf]
      %v794 = vld [vmem:[%s3 + $0x34] sm:$0xf]
      %v795 = vld [vmem:[%s3 + $0x38] sm:$0xf]
      %v796 = vld [vmem:[%s3 + $0x3c] sm:$0xf]
      %v797 = vpack.c.bf16 %v751, %v749
      %v798 = vpack.c.bf16 %v752, %v750
      %v799 = vpack.c.bf16 %v755, %v753
      %v800 = vpack.c.bf16 %v756, %v754
      %v801 = vpack.c.bf16 %v759, %v757
      %v802 = vpack.c.bf16 %v760, %v758
      %v803 = vpack.c.bf16 %v763, %v761
      %v804 = vpack.c.bf16 %v764, %v762
      %v805 = vpack.c.bf16 %v767, %v765
      %v806 = vpack.c.bf16 %v768, %v766
      %v807 = vpack.c.bf16 %v771, %v769
      %v808 = vpack.c.bf16 %v772, %v770
      %v809 = vpack.c.bf16 %v775, %v773
      %v810 = vpack.c.bf16 %v776, %v774
      %v811 = vpack.c.bf16 %v779, %v777
      %v812 = vpack.c.bf16 %v780, %v778
      %v813 = vld [vmem:[%s4] sm:$0xff]
      %v814 = vld [vmem:[%s4 + $0x8] sm:$0xff]
      %v815 = vld [vmem:[%s4 + $0x10] sm:$0xff]
      %v816 = vld [vmem:[%s4 + $0x18] sm:$0xff]
      %v817 = vld [vmem:[%s4 + $0x20] sm:$0xff]
      %v818 = vld [vmem:[%s4 + $0x28] sm:$0xff]
      %v819 = vld [vmem:[%s4 + $0x30] sm:$0xff]
      %v820 = vld [vmem:[%s4 + $0x38] sm:$0xff]
      %v821 = vld [vmem:[%s4 + $0x40] sm:$0xff]
      %v822 = vld [vmem:[%s4 + $0x48] sm:$0xff]
      %v823 = vld [vmem:[%s4 + $0x50] sm:$0xff]
      %v824 = vld [vmem:[%s4 + $0x58] sm:$0xff]
      %v825 = vld [vmem:[%s4 + $0x60] sm:$0xff]
      %v826 = vld [vmem:[%s4 + $0x68] sm:$0xff]
      %v827 = vld [vmem:[%s4 + $0x70] sm:$0xff]
      %v828 = vld [vmem:[%s4 + $0x78] sm:$0xff]
      %830 = vset.pattern.permute.xlu0 0
      %831 = vperm.xlu0 %830, %v813
      %v832 = vpop.permute.xlu0 %831
      %835 = vset.pattern.permute.xlu0 0
      %836 = vperm.xlu0 %835, %v814
      %v837 = vpop.permute.xlu0 %836
      %840 = vset.pattern.permute.xlu0 0
      %841 = vperm.xlu0 %840, %v815
      %v842 = vpop.permute.xlu0 %841
      %845 = vset.pattern.permute.xlu0 0
      %846 = vperm.xlu0 %845, %v816
      %v847 = vpop.permute.xlu0 %846
      %850 = vset.pattern.permute.xlu0 0
      %851 = vperm.xlu0 %850, %v817
      %v852 = vpop.permute.xlu0 %851
      %855 = vset.pattern.permute.xlu0 0
      %856 = vperm.xlu0 %855, %v818
      %v857 = vpop.permute.xlu0 %856
      %860 = vset.pattern.permute.xlu0 0
      %861 = vperm.xlu0 %860, %v819
      %v862 = vpop.permute.xlu0 %861
      %865 = vset.pattern.permute.xlu0 0
      %866 = vperm.xlu0 %865, %v820
      %v867 = vpop.permute.xlu0 %866
      %870 = vset.pattern.permute.xlu0 0
      %871 = vperm.xlu0 %870, %v821
      %v872 = vpop.permute.xlu0 %871
      %875 = vset.pattern.permute.xlu0 0
      %876 = vperm.xlu0 %875, %v822
      %v877 = vpop.permute.xlu0 %876
      %880 = vset.pattern.permute.xlu0 0
      %881 = vperm.xlu0 %880, %v823
      %v882 = vpop.permute.xlu0 %881
      %885 = vset.pattern.permute.xlu0 0
      %886 = vperm.xlu0 %885, %v824
      %v887 = vpop.permute.xlu0 %886
      %890 = vset.pattern.permute.xlu0 0
      %891 = vperm.xlu0 %890, %v825
      %v892 = vpop.permute.xlu0 %891
      %895 = vset.pattern.permute.xlu0 0
      %896 = vperm.xlu0 %895, %v826
      %v897 = vpop.permute.xlu0 %896
      %900 = vset.pattern.permute.xlu0 0
      %901 = vperm.xlu0 %900, %v827
      %v902 = vpop.permute.xlu0 %901
      %905 = vset.pattern.permute.xlu0 0
      %906 = vperm.xlu0 %905, %v828
      %v907 = vpop.permute.xlu0 %906
      %v925 = vunpack.c.l.b16 %v781
      %v926 = vunpack.c.l.b16 %v782
      %v927 = vunpack.c.l.b16 %v783
      %v928 = vunpack.c.l.b16 %v784
      %v929 = vunpack.c.l.b16 %v785
      %v930 = vunpack.c.l.b16 %v786
      %v931 = vunpack.c.l.b16 %v787
      %v932 = vunpack.c.l.b16 %v788
      %v933 = vunpack.c.l.b16 %v789
      %v934 = vunpack.c.l.b16 %v790
      %v935 = vunpack.c.l.b16 %v791
      %v936 = vunpack.c.l.b16 %v792
      %v937 = vunpack.c.l.b16 %v793
      %v938 = vunpack.c.l.b16 %v794
      %v939 = vunpack.c.l.b16 %v795
      %v940 = vunpack.c.l.b16 %v796
      %v941 = vpack.c.b16 %v926, %v925
      %v942 = vpack.c.b16 %v928, %v927
      %v943 = vpack.c.b16 %v930, %v929
      %v944 = vpack.c.b16 %v932, %v931
      %v945 = vpack.c.b16 %v934, %v933
      %v946 = vpack.c.b16 %v936, %v935
      %v947 = vpack.c.b16 %v938, %v937
      %v948 = vpack.c.b16 %v940, %v939
      %957 = vmatprep.subr.bf16.mxu0 %v798
      %958 = vmatpush1.bf16.msra.mxu0 %v797
      %959 = vmatprep.subr.bf16.mxu0 %v800
      %960 = vmatpush1.bf16.msra.mxu0 %v799
      %961 = vmatprep.subr.bf16.mxu0 %v802
      %962 = vmatpush1.bf16.msra.mxu0 %v801
      %963 = vmatprep.subr.bf16.mxu0 %v804
      %964 = vmatpush1.bf16.msra.mxu0 %v803
      %965 = vmatprep.subr.bf16.mxu0 %v806
      %966 = vmatpush1.bf16.msra.mxu0 %v805
      %967 = vmatprep.subr.bf16.mxu0 %v808
      %968 = vmatpush1.bf16.msra.mxu0 %v807
      %969 = vmatprep.subr.bf16.mxu0 %v810
      %970 = vmatpush1.bf16.msra.mxu0 %v809
      %971 = vmatprep.subr.bf16.mxu0 %v812
      %972 = vmatpush1.bf16.msra.mxu0 %v811
      %973 = vmatprep.subr.bf16.mxu0 0
      %974 = vmatpush1.bf16.msra.mxu0 0
      %975 = vmatprep.subr.bf16.mxu0 0
      %976 = vmatpush1.bf16.msra.mxu0 0
      %977 = vmatprep.subr.bf16.mxu0 0
      %978 = vmatpush1.bf16.msra.mxu0 0
      %979 = vmatprep.subr.bf16.mxu0 0
      %980 = vmatpush1.bf16.msra.mxu0 0
      %981 = vmatprep.subr.bf16.mxu0 0
      %982 = vmatpush1.bf16.msra.mxu0 0
      %983 = vmatprep.subr.bf16.mxu0 0
      %984 = vmatpush1.bf16.msra.mxu0 0
      %985 = vmatprep.subr.bf16.mxu0 0
      %986 = vmatpush1.bf16.msra.mxu0 0
      %987 = vmatprep.subr.bf16.mxu0 0
      %988 = vmatpush1.bf16.msra.mxu0 0
      %989 = vmatprep.mubr.bf16.mxu0 0
      %990 = vmatmul.mubr.bf16.gmra.mrb[0].mxu0 %v941
      %v991 = vpop.f32.mrb[0].mxu0
      %v992 = vadd.f32 %v832, %v991
      %v993 = vpop.f32.mrb[0].mxu0
      %v994 = vadd.f32 %v832, %v993
      %v995 = vpop.f32.mrb[0].mxu0
      %v996 = vadd.f32 %v837, %v995
      %v997 = vpop.f32.mrb[0].mxu0
      %v998 = vadd.f32 %v837, %v997
      %999 = vmatprep.mubr.bf16.mxu0 0
      %1000 = vmatmul.mubr.bf16.gmra.mrb[0].mxu0 %v942
      %v1001 = vpop.f32.mrb[0].mxu0
      %v1002 = vadd.f32 %v842, %v1001
      %v1003 = vpop.f32.mrb[0].mxu0
      %v1004 = vadd.f32 %v842, %v1003
      %v1005 = vpop.f32.mrb[0].mxu0
      %v1006 = vadd.f32 %v847, %v1005
      %v1007 = vpop.f32.mrb[0].mxu0
      %v1008 = vadd.f32 %v847, %v1007
      %1009 = vmatprep.mubr.bf16.mxu0 0
      %1010 = vmatmul.mubr.bf16.gmra.mrb[0].mxu0 %v943
      %v1011 = vpop.f32.mrb[0].mxu0
      %v1012 = vadd.f32 %v852, %v1011
      %v1013 = vpop.f32.mrb[0].mxu0
      %v1014 = vadd.f32 %v852, %v1013
      %v1015 = vpop.f32.mrb[0].mxu0
      %v1016 = vadd.f32 %v857, %v1015
      %v1017 = vpop.f32.mrb[0].mxu0
      %v1018 = vadd.f32 %v857, %v1017
      %1019 = vmatprep.mubr.bf16.mxu0 0
      %1020 = vmatmul.mubr.bf16.gmra.mrb[0].mxu0 %v944
      %v1021 = vpop.f32.mrb[0].mxu0
      %v1022 = vadd.f32 %v862, %v1021
      %v1023 = vpop.f32.mrb[0].mxu0
      %v1024 = vadd.f32 %v862, %v1023
      %v1025 = vpop.f32.mrb[0].mxu0
      %v1026 = vadd.f32 %v867, %v1025
      %v1027 = vpop.f32.mrb[0].mxu0
      %v1028 = vadd.f32 %v867, %v1027
      %1029 = vmatprep.mubr.bf16.mxu0 0
      %1030 = vmatmul.mubr.bf16.gmra.mrb[0].mxu0 %v945
      %v1031 = vpop.f32.mrb[0].mxu0
      %v1032 = vadd.f32 %v872, %v1031
      %v1033 = vpop.f32.mrb[0].mxu0
      %v1034 = vadd.f32 %v872, %v1033
      %v1035 = vpop.f32.mrb[0].mxu0
      %v1036 = vadd.f32 %v877, %v1035
      %v1037 = vpop.f32.mrb[0].mxu0
      %v1038 = vadd.f32 %v877, %v1037
      %1039 = vmatprep.mubr.bf16.mxu0 0
      %1040 = vmatmul.mubr.bf16.gmra.mrb[0].mxu0 %v946
      %v1041 = vpop.f32.mrb[0].mxu0
      %v1042 = vadd.f32 %v882, %v1041
      %v1043 = vpop.f32.mrb[0].mxu0
      %v1044 = vadd.f32 %v882, %v1043
      %v1045 = vpop.f32.mrb[0].mxu0
      %v1046 = vadd.f32 %v887, %v1045
      %v1047 = vpop.f32.mrb[0].mxu0
      %v1048 = vadd.f32 %v887, %v1047
      %1049 = vmatprep.mubr.bf16.mxu0 0
      %1050 = vmatmul.mubr.bf16.gmra.mrb[0].mxu0 %v947
      %v1051 = vpop.f32.mrb[0].mxu0
      %v1052 = vadd.f32 %v892, %v1051
      %v1053 = vpop.f32.mrb[0].mxu0
      %v1054 = vadd.f32 %v892, %v1053
      %v1055 = vpop.f32.mrb[0].mxu0
      %v1056 = vadd.f32 %v897, %v1055
      %v1057 = vpop.f32.mrb[0].mxu0
      %v1058 = vadd.f32 %v897, %v1057
      %1059 = vmatprep.mubr.bf16.mxu0 0
      %1060 = vmatmul.mubr.bf16.gmra.mrb[0].mxu0 %v948
      %v1061 = vpop.f32.mrb[0].mxu0
      %v1062 = vadd.f32 %v902, %v1061
      %v1063 = vpop.f32.mrb[0].mxu0
      %v1064 = vadd.f32 %v902, %v1063
      %v1065 = vpop.f32.mrb[0].mxu0
      %v1066 = vadd.f32 %v907, %v1065
      %v1067 = vpop.f32.mrb[0].mxu0
      %v1068 = vadd.f32 %v907, %v1067
      %1069 = vdwg.mxu0
      %v1070 = vmax.f32 %v992, 0.0
      %v1071 = vmax.f32 %v994, 0.0
      %v1072 = vmax.f32 %v996, 0.0
      %v1073 = vmax.f32 %v998, 0.0
      %v1074 = vmax.f32 %v1002, 0.0
      %v1075 = vmax.f32 %v1004, 0.0
      %v1076 = vmax.f32 %v1006, 0.0
      %v1077 = vmax.f32 %v1008, 0.0
      %v1078 = vmax.f32 %v1012, 0.0
      %v1079 = vmax.f32 %v1014, 0.0
      %v1080 = vmax.f32 %v1016, 0.0
      %v1081 = vmax.f32 %v1018, 0.0
      %v1082 = vmax.f32 %v1022, 0.0
      %v1083 = vmax.f32 %v1024, 0.0
      %v1084 = vmax.f32 %v1026, 0.0
      %v1085 = vmax.f32 %v1028, 0.0
      %v1086 = vmax.f32 %v1032, 0.0
      %v1087 = vmax.f32 %v1034, 0.0
      %v1088 = vmax.f32 %v1036, 0.0
      %v1089 = vmax.f32 %v1038, 0.0
      %v1090 = vmax.f32 %v1042, 0.0
      %v1091 = vmax.f32 %v1044, 0.0
      %v1092 = vmax.f32 %v1046, 0.0
      %v1093 = vmax.f32 %v1048, 0.0
      %v1094 = vmax.f32 %v1052, 0.0
      %v1095 = vmax.f32 %v1054, 0.0
      %v1096 = vmax.f32 %v1056, 0.0
      %v1097 = vmax.f32 %v1058, 0.0
      %v1098 = vmax.f32 %v1062, 0.0
      %v1099 = vmax.f32 %v1064, 0.0
      %v1100 = vmax.f32 %v1066, 0.0
      %v1101 = vmax.f32 %v1068, 0.0
      %v1102 = vld [vmem:[%s5] sm:$0xf]
      %v1103 = vld [vmem:[%s5 + $0x4] sm:$0xf]
      %v1104 = vld [vmem:[%s5 + $0x8] sm:$0xf]
      %v1105 = vld [vmem:[%s5 + $0xc] sm:$0xf]
      %v1106 = vld [vmem:[%s5 + $0x10] sm:$0xf]
      %v1107 = vld [vmem:[%s5 + $0x14] sm:$0xf]
      %v1108 = vld [vmem:[%s5 + $0x18] sm:$0xf]
      %v1109 = vld [vmem:[%s5 + $0x1c] sm:$0xf]
      %v1110 = vld [vmem:[%s5 + $0x20] sm:$0xf]
      %v1111 = vld [vmem:[%s5 + $0x24] sm:$0xf]
      %v1112 = vld [vmem:[%s5 + $0x28] sm:$0xf]
      %v1113 = vld [vmem:[%s5 + $0x2c] sm:$0xf]
      %v1114 = vld [vmem:[%s5 + $0x30] sm:$0xf]
      %v1115 = vld [vmem:[%s5 + $0x34] sm:$0xf]
      %v1116 = vld [vmem:[%s5 + $0x38] sm:$0xf]
      %v1117 = vld [vmem:[%s5 + $0x3c] sm:$0xf]
      %v1118 = vpack.c.bf16 %v1072, %v1070
      %v1119 = vpack.c.bf16 %v1073, %v1071
      %v1120 = vpack.c.bf16 %v1076, %v1074
      %v1121 = vpack.c.bf16 %v1077, %v1075
      %v1122 = vpack.c.bf16 %v1080, %v1078
      %v1123 = vpack.c.bf16 %v1081, %v1079
      %v1124 = vpack.c.bf16 %v1084, %v1082
      %v1125 = vpack.c.bf16 %v1085, %v1083
      %v1126 = vpack.c.bf16 %v1088, %v1086
      %v1127 = vpack.c.bf16 %v1089, %v1087
      %v1128 = vpack.c.bf16 %v1092, %v1090
      %v1129 = vpack.c.bf16 %v1093, %v1091
      %v1130 = vpack.c.bf16 %v1096, %v1094
      %v1131 = vpack.c.bf16 %v1097, %v1095
      %v1132 = vpack.c.bf16 %v1100, %v1098
      %v1133 = vpack.c.bf16 %v1101, %v1099
      %v1134 = vld [vmem:[%s6] sm:$0xff]
      %v1135 = vld [vmem:[%s6 + $0x8] sm:$0xff]
      %v1136 = vld [vmem:[%s6 + $0x10] sm:$0xff]
      %v1137 = vld [vmem:[%s6 + $0x18] sm:$0xff]
      %v1138 = vld [vmem:[%s6 + $0x20] sm:$0xff]
      %v1139 = vld [vmem:[%s6 + $0x28] sm:$0xff]
      %v1140 = vld [vmem:[%s6 + $0x30] sm:$0xff]
      %v1141 = vld [vmem:[%s6 + $0x38] sm:$0xff]
      %v1142 = vld [vmem:[%s6 + $0x40] sm:$0xff]
      %v1143 = vld [vmem:[%s6 + $0x48] sm:$0xff]
      %v1144 = vld [vmem:[%s6 + $0x50] sm:$0xff]
      %v1145 = vld [vmem:[%s6 + $0x58] sm:$0xff]
      %v1146 = vld [vmem:[%s6 + $0x60] sm:$0xff]
      %v1147 = vld [vmem:[%s6 + $0x68] sm:$0xff]
      %v1148 = vld [vmem:[%s6 + $0x70] sm:$0xff]
      %v1149 = vld [vmem:[%s6 + $0x78] sm:$0xff]
      %1151 = vset.pattern.permute.xlu0 0
      %1152 = vperm.xlu0 %1151, %v1134
      %v1153 = vpop.permute.xlu0 %1152
      %1156 = vset.pattern.permute.xlu0 0
      %1157 = vperm.xlu0 %1156, %v1135
      %v1158 = vpop.permute.xlu0 %1157
      %1161 = vset.pattern.permute.xlu0 0
      %1162 = vperm.xlu0 %1161, %v1136
      %v1163 = vpop.permute.xlu0 %1162
      %1166 = vset.pattern.permute.xlu0 0
      %1167 = vperm.xlu0 %1166, %v1137
      %v1168 = vpop.permute.xlu0 %1167
      %1171 = vset.pattern.permute.xlu0 0
      %1172 = vperm.xlu0 %1171, %v1138
      %v1173 = vpop.permute.xlu0 %1172
      %1176 = vset.pattern.permute.xlu0 0
      %1177 = vperm.xlu0 %1176, %v1139
      %v1178 = vpop.permute.xlu0 %1177
      %1181 = vset.pattern.permute.xlu0 0
      %1182 = vperm.xlu0 %1181, %v1140
      %v1183 = vpop.permute.xlu0 %1182
      %1186 = vset.pattern.permute.xlu0 0
      %1187 = vperm.xlu0 %1186, %v1141
      %v1188 = vpop.permute.xlu0 %1187
      %1191 = vset.pattern.permute.xlu0 0
      %1192 = vperm.xlu0 %1191, %v1142
      %v1193 = vpop.permute.xlu0 %1192
      %1196 = vset.pattern.permute.xlu0 0
      %1197 = vperm.xlu0 %1196, %v1143
      %v1198 = vpop.permute.xlu0 %1197
      %1201 = vset.pattern.permute.xlu0 0
      %1202 = vperm.xlu0 %1201, %v1144
      %v1203 = vpop.permute.xlu0 %1202
      %1206 = vset.pattern.permute.xlu0 0
      %1207 = vperm.xlu0 %1206, %v1145
      %v1208 = vpop.permute.xlu0 %1207
      %1211 = vset.pattern.permute.xlu0 0
      %1212 = vperm.xlu0 %1211, %v1146
      %v1213 = vpop.permute.xlu0 %1212
      %1216 = vset.pattern.permute.xlu0 0
      %1217 = vperm.xlu0 %1216, %v1147
      %v1218 = vpop.permute.xlu0 %1217
      %1221 = vset.pattern.permute.xlu0 0
      %1222 = vperm.xlu0 %1221, %v1148
      %v1223 = vpop.permute.xlu0 %1222
      %1226 = vset.pattern.permute.xlu0 0
      %1227 = vperm.xlu0 %1226, %v1149
      %v1228 = vpop.permute.xlu0 %1227
      %v1246 = vunpack.c.l.b16 %v1102
      %v1247 = vunpack.c.l.b16 %v1103
      %v1248 = vunpack.c.l.b16 %v1104
      %v1249 = vunpack.c.l.b16 %v1105
      %v1250 = vunpack.c.l.b16 %v1106
      %v1251 = vunpack.c.l.b16 %v1107
      %v1252 = vunpack.c.l.b16 %v1108
      %v1253 = vunpack.c.l.b16 %v1109
      %v1254 = vunpack.c.l.b16 %v1110
      %v1255 = vunpack.c.l.b16 %v1111
      %v1256 = vunpack.c.l.b16 %v1112
      %v1257 = vunpack.c.l.b16 %v1113
      %v1258 = vunpack.c.l.b16 %v1114
      %v1259 = vunpack.c.l.b16 %v1115
      %v1260 = vunpack.c.l.b16 %v1116
      %v1261 = vunpack.c.l.b16 %v1117
      %v1262 = vpack.c.b16 %v1247, %v1246
      %v1263 = vpack.c.b16 %v1249, %v1248
      %v1264 = vpack.c.b16 %v1251, %v1250
      %v1265 = vpack.c.b16 %v1253, %v1252
      %v1266 = vpack.c.b16 %v1255, %v1254
      %v1267 = vpack.c.b16 %v1257, %v1256
      %v1268 = vpack.c.b16 %v1259, %v1258
      %v1269 = vpack.c.b16 %v1261, %v1260
      %1278 = vmatprep.subr.bf16.mxu0 %v1119
      %1279 = vmatpush1.bf16.msra.mxu0 %v1118
      %1280 = vmatprep.subr.bf16.mxu0 %v1121
      %1281 = vmatpush1.bf16.msra.mxu0 %v1120
      %1282 = vmatprep.subr.bf16.mxu0 %v1123
      %1283 = vmatpush1.bf16.msra.mxu0 %v1122
      %1284 = vmatprep.subr.bf16.mxu0 %v1125
      %1285 = vmatpush1.bf16.msra.mxu0 %v1124
      %1286 = vmatprep.subr.bf16.mxu0 %v1127
      %1287 = vmatpush1.bf16.msra.mxu0 %v1126
      %1288 = vmatprep.subr.bf16.mxu0 %v1129
      %1289 = vmatpush1.bf16.msra.mxu0 %v1128
      %1290 = vmatprep.subr.bf16.mxu0 %v1131
      %1291 = vmatpush1.bf16.msra.mxu0 %v1130
      %1292 = vmatprep.subr.bf16.mxu0 %v1133
      %1293 = vmatpush1.bf16.msra.mxu0 %v1132
      %1294 = vmatprep.subr.bf16.mxu0 0
      %1295 = vmatpush1.bf16.msra.mxu0 0
      %1296 = vmatprep.subr.bf16.mxu0 0
      %1297 = vmatpush1.bf16.msra.mxu0 0
      %1298 = vmatprep.subr.bf16.mxu0 0
      %1299 = vmatpush1.bf16.msra.mxu0 0
      %1300 = vmatprep.subr.bf16.mxu0 0
      %1301 = vmatpush1.bf16.msra.mxu0 0
      %1302 = vmatprep.subr.bf16.mxu0 0
      %1303 = vmatpush1.bf16.msra.mxu0 0
      %1304 = vmatprep.subr.bf16.mxu0 0
      %1305 = vmatpush1.bf16.msra.mxu0 0
      %1306 = vmatprep.subr.bf16.mxu0 0
      %1307 = vmatpush1.bf16.msra.mxu0 0
      %1308 = vmatprep.subr.bf16.mxu0 0
      %1309 = vmatpush1.bf16.msra.mxu0 0
      %1310 = vmatprep.mubr.bf16.mxu0 0
      %1311 = vmatmul.mubr.bf16.gmra.mrb[0].mxu0 %v1262
      %v1312 = vpop.f32.mrb[0].mxu0
      %v1313 = vadd.f32 %v1153, %v1312
      %v1314 = vpop.f32.mrb[0].mxu0
      %v1315 = vadd.f32 %v1153, %v1314
      %v1316 = vpop.f32.mrb[0].mxu0
      %v1317 = vadd.f32 %v1158, %v1316
      %v1318 = vpop.f32.mrb[0].mxu0
      %v1319 = vadd.f32 %v1158, %v1318
      %1320 = vmatprep.mubr.bf16.mxu0 0
      %1321 = vmatmul.mubr.bf16.gmra.mrb[0].mxu0 %v1263
      %v1322 = vpop.f32.mrb[0].mxu0
      %v1323 = vadd.f32 %v1163, %v1322
      %v1324 = vpop.f32.mrb[0].mxu0
      %v1325 = vadd.f32 %v1163, %v1324
      %v1326 = vpop.f32.mrb[0].mxu0
      %v1327 = vadd.f32 %v1168, %v1326
      %v1328 = vpop.f32.mrb[0].mxu0
      %v1329 = vadd.f32 %v1168, %v1328
      %1330 = vmatprep.mubr.bf16.mxu0 0
      %1331 = vmatmul.mubr.bf16.gmra.mrb[0].mxu0 %v1264
      %v1332 = vpop.f32.mrb[0].mxu0
      %v1333 = vadd.f32 %v1173, %v1332
      %v1334 = vpop.f32.mrb[0].mxu0
      %v1335 = vadd.f32 %v1173, %v1334
      %v1336 = vpop.f32.mrb[0].mxu0
      %v1337 = vadd.f32 %v1178, %v1336
      %v1338 = vpop.f32.mrb[0].mxu0
      %v1339 = vadd.f32 %v1178, %v1338
      %1340 = vmatprep.mubr.bf16.mxu0 0
      %1341 = vmatmul.mubr.bf16.gmra.mrb[0].mxu0 %v1265
      %v1342 = vpop.f32.mrb[0].mxu0
      %v1343 = vadd.f32 %v1183, %v1342
      %v1344 = vpop.f32.mrb[0].mxu0
      %v1345 = vadd.f32 %v1183, %v1344
      %v1346 = vpop.f32.mrb[0].mxu0
      %v1347 = vadd.f32 %v1188, %v1346
      %v1348 = vpop.f32.mrb[0].mxu0
      %v1349 = vadd.f32 %v1188, %v1348
      %1350 = vmatprep.mubr.bf16.mxu0 0
      %1351 = vmatmul.mubr.bf16.gmra.mrb[0].mxu0 %v1266
      %v1352 = vpop.f32.mrb[0].mxu0
      %v1353 = vadd.f32 %v1193, %v1352
      %v1354 = vpop.f32.mrb[0].mxu0
      %v1355 = vadd.f32 %v1193, %v1354
      %v1356 = vpop.f32.mrb[0].mxu0
      %v1357 = vadd.f32 %v1198, %v1356
      %v1358 = vpop.f32.mrb[0].mxu0
      %v1359 = vadd.f32 %v1198, %v1358
      %1360 = vmatprep.mubr.bf16.mxu0 0
      %1361 = vmatmul.mubr.bf16.gmra.mrb[0].mxu0 %v1267
      %v1362 = vpop.f32.mrb[0].mxu0
      %v1363 = vadd.f32 %v1203, %v1362
      %v1364 = vpop.f32.mrb[0].mxu0
      %v1365 = vadd.f32 %v1203, %v1364
      %v1366 = vpop.f32.mrb[0].mxu0
      %v1367 = vadd.f32 %v1208, %v1366
      %v1368 = vpop.f32.mrb[0].mxu0
      %v1369 = vadd.f32 %v1208, %v1368
      %1370 = vmatprep.mubr.bf16.mxu0 0
      %1371 = vmatmul.mubr.bf16.gmra.mrb[0].mxu0 %v1268
      %v1372 = vpop.f32.mrb[0].mxu0
      %v1373 = vadd.f32 %v1213, %v1372
      %v1374 = vpop.f32.mrb[0].mxu0
      %v1375 = vadd.f32 %v1213, %v1374
      %v1376 = vpop.f32.mrb[0].mxu0
      %v1377 = vadd.f32 %v1218, %v1376
      %v1378 = vpop.f32.mrb[0].mxu0
      %v1379 = vadd.f32 %v1218, %v1378
      %1380 = vmatprep.mubr.bf16.mxu0 0
      %1381 = vmatmul.mubr.bf16.gmra.mrb[0].mxu0 %v1269
      %v1382 = vpop.f32.mrb[0].mxu0
      %v1383 = vadd.f32 %v1223, %v1382
      %v1384 = vpop.f32.mrb[0].mxu0
      %v1385 = vadd.f32 %v1223, %v1384
      %v1386 = vpop.f32.mrb[0].mxu0
      %v1387 = vadd.f32 %v1228, %v1386
      %v1388 = vpop.f32.mrb[0].mxu0
      %v1389 = vadd.f32 %v1228, %v1388
      %1390 = vdwg.mxu0
      %v1391 = vadd.f32 %v749, %v1313
      %v1392 = vadd.f32 %v750, %v1315
      %v1393 = vadd.f32 %v751, %v1317
      %v1394 = vadd.f32 %v752, %v1319
      %v1395 = vadd.f32 %v753, %v1323
      %v1396 = vadd.f32 %v754, %v1325
      %v1397 = vadd.f32 %v755, %v1327
      %v1398 = vadd.f32 %v756, %v1329
      %v1399 = vadd.f32 %v757, %v1333
      %v1400 = vadd.f32 %v758, %v1335
      %v1401 = vadd.f32 %v759, %v1337
      %v1402 = vadd.f32 %v760, %v1339
      %v1403 = vadd.f32 %v761, %v1343
      %v1404 = vadd.f32 %v762, %v1345
      %v1405 = vadd.f32 %v763, %v1347
      %v1406 = vadd.f32 %v764, %v1349
      %v1407 = vadd.f32 %v765, %v1353
      %v1408 = vadd.f32 %v766, %v1355
      %v1409 = vadd.f32 %v767, %v1357
      %v1410 = vadd.f32 %v768, %v1359
      %v1411 = vadd.f32 %v769, %v1363
      %v1412 = vadd.f32 %v770, %v1365
      %v1413 = vadd.f32 %v771, %v1367
      %v1414 = vadd.f32 %v772, %v1369
      %v1415 = vadd.f32 %v773, %v1373
      %v1416 = vadd.f32 %v774, %v1375
      %v1417 = vadd.f32 %v775, %v1377
      %v1418 = vadd.f32 %v776, %v1379
      %v1419 = vadd.f32 %v777, %v1383
      %v1420 = vadd.f32 %v778, %v1385
      %v1421 = vadd.f32 %v779, %v1387
      %v1422 = vadd.f32 %v780, %v1389
      %v1423 = vmax.f32 %v1391, 0.0
      %v1424 = vmax.f32 %v1392, 0.0
      %v1425 = vmax.f32 %v1393, 0.0
      %v1426 = vmax.f32 %v1394, 0.0
      %v1427 = vmax.f32 %v1395, 0.0
      %v1428 = vmax.f32 %v1396, 0.0
      %v1429 = vmax.f32 %v1397, 0.0
      %v1430 = vmax.f32 %v1398, 0.0
      %v1431 = vmax.f32 %v1399, 0.0
      %v1432 = vmax.f32 %v1400, 0.0
      %v1433 = vmax.f32 %v1401, 0.0
      %v1434 = vmax.f32 %v1402, 0.0
      %v1435 = vmax.f32 %v1403, 0.0
      %v1436 = vmax.f32 %v1404, 0.0
      %v1437 = vmax.f32 %v1405, 0.0
      %v1438 = vmax.f32 %v1406, 0.0
      %v1439 = vmax.f32 %v1407, 0.0
      %v1440 = vmax.f32 %v1408, 0.0
      %v1441 = vmax.f32 %v1409, 0.0
      %v1442 = vmax.f32 %v1410, 0.0
      %v1443 = vmax.f32 %v1411, 0.0
      %v1444 = vmax.f32 %v1412, 0.0
      %v1445 = vmax.f32 %v1413, 0.0
      %v1446 = vmax.f32 %v1414, 0.0
      %v1447 = vmax.f32 %v1415, 0.0
      %v1448 = vmax.f32 %v1416, 0.0
      %v1449 = vmax.f32 %v1417, 0.0
      %v1450 = vmax.f32 %v1418, 0.0
      %v1451 = vmax.f32 %v1419, 0.0
      %v1452 = vmax.f32 %v1420, 0.0
      %v1453 = vmax.f32 %v1421, 0.0
      %v1454 = vmax.f32 %v1422, 0.0
      %v1455 = vpack.c.bf16 %v1425, %v1423
      %v1456 = vpack.c.bf16 %v1426, %v1424
      %v1457 = vpack.c.bf16 %v1429, %v1427
      %v1458 = vpack.c.bf16 %v1430, %v1428
      %v1459 = vpack.c.bf16 %v1433, %v1431
      %v1460 = vpack.c.bf16 %v1434, %v1432
      %v1461 = vpack.c.bf16 %v1437, %v1435
      %v1462 = vpack.c.bf16 %v1438, %v1436
      %v1463 = vpack.c.bf16 %v1441, %v1439
      %v1464 = vpack.c.bf16 %v1442, %v1440
      %v1465 = vpack.c.bf16 %v1445, %v1443
      %v1466 = vpack.c.bf16 %v1446, %v1444
      %v1467 = vpack.c.bf16 %v1449, %v1447
      %v1468 = vpack.c.bf16 %v1450, %v1448
      %v1469 = vpack.c.bf16 %v1453, %v1451
      %v1470 = vpack.c.bf16 %v1454, %v1452
      %v1471 = vld [vmem:[%s9] sm:$0x3]
      %v1472 = vld [vmem:[%s11] sm:$0x1]
      %v1473 = vld [vmem:[%s10] sm:$0x7]
      %v1474 = vld [vmem:[%s7] sm:$0xf]
      %v1475 = vld [vmem:[%s7 + $0x4] sm:$0xf]
      %v1476 = vld [vmem:[%s7 + $0x8] sm:$0xf]
      %v1477 = vld [vmem:[%s7 + $0xc] sm:$0xf]
      %v1478 = vld [vmem:[%s7 + $0x10] sm:$0xf]
      %v1479 = vld [vmem:[%s7 + $0x14] sm:$0xf]
      %v1480 = vld [vmem:[%s7 + $0x18] sm:$0xf]
      %v1481 = vld [vmem:[%s7 + $0x1c] sm:$0xf]
      %v1482 = vld [vmem:[%s7 + $0x20] sm:$0xf]
      %v1483 = vld [vmem:[%s7 + $0x24] sm:$0xf]
      %v1484 = vld [vmem:[%s7 + $0x28] sm:$0xf]
      %v1485 = vld [vmem:[%s7 + $0x2c] sm:$0xf]
      %v1486 = vld [vmem:[%s7 + $0x30] sm:$0xf]
      %v1487 = vld [vmem:[%s7 + $0x34] sm:$0xf]
      %v1488 = vld [vmem:[%s7 + $0x38] sm:$0xf]
      %v1489 = vld [vmem:[%s7 + $0x3c] sm:$0xf]
      %v1490 = vld [vmem:[%s428] sm:$0xff]
      %v1491 = vld [vmem:[%s428 + $0x8] sm:$0xff]
      %v1492 = vld [vmem:[%s428 + $0x10] sm:$0xff]
      %v1493 = vld [vmem:[%s428 + $0x18] sm:$0xff]
      %v1494 = vld [vmem:[%s428 + $0x20] sm:$0xff]
      %v1495 = vld [vmem:[%s428 + $0x28] sm:$0xff]
      %v1496 = vld [vmem:[%s428 + $0x30] sm:$0xff]
      %v1497 = vld [vmem:[%s428 + $0x38] sm:$0xff]
      %v1498 = vld [vmem:[%s428 + $0x40] sm:$0xff]
      %v1499 = vld [vmem:[%s428 + $0x48] sm:$0xff]
      %v1500 = vld [vmem:[%s428 + $0x50] sm:$0xff]
      %v1501 = vld [vmem:[%s428 + $0x58] sm:$0xff]
      %v1502 = vld [vmem:[%s428 + $0x60] sm:$0xff]
      %v1503 = vld [vmem:[%s428 + $0x68] sm:$0xff]
      %v1504 = vld [vmem:[%s428 + $0x70] sm:$0xff]
      %v1505 = vld [vmem:[%s428 + $0x78] sm:$0xff]
      %1507 = vset.pattern.permute.xlu0 0
      %1508 = vperm.xlu0 %1507, %v1490
      %v1509 = vpop.permute.xlu0 %1508
      %1512 = vset.pattern.permute.xlu0 0
      %1513 = vperm.xlu0 %1512, %v1491
      %v1514 = vpop.permute.xlu0 %1513
      %1517 = vset.pattern.permute.xlu0 0
      %1518 = vperm.xlu0 %1517, %v1492
      %v1519 = vpop.permute.xlu0 %1518
      %1522 = vset.pattern.permute.xlu0 0
      %1523 = vperm.xlu0 %1522, %v1493
      %v1524 = vpop.permute.xlu0 %1523
      %1527 = vset.pattern.permute.xlu0 0
      %1528 = vperm.xlu0 %1527, %v1494
      %v1529 = vpop.permute.xlu0 %1528
      %1532 = vset.pattern.permute.xlu0 0
      %1533 = vperm.xlu0 %1532, %v1495
      %v1534 = vpop.permute.xlu0 %1533
      %1537 = vset.pattern.permute.xlu0 0
      %1538 = vperm.xlu0 %1537, %v1496
      %v1539 = vpop.permute.xlu0 %1538
      %1542 = vset.pattern.permute.xlu0 0
      %1543 = vperm.xlu0 %1542, %v1497
      %v1544 = vpop.permute.xlu0 %1543
      %1547 = vset.pattern.permute.xlu0 0
      %1548 = vperm.xlu0 %1547, %v1498
      %v1549 = vpop.permute.xlu0 %1548
      %1552 = vset.pattern.permute.xlu0 0
      %1553 = vperm.xlu0 %1552, %v1499
      %v1554 = vpop.permute.xlu0 %1553
      %1557 = vset.pattern.permute.xlu0 0
      %1558 = vperm.xlu0 %1557, %v1500
      %v1559 = vpop.permute.xlu0 %1558
      %1562 = vset.pattern.permute.xlu0 0
      %1563 = vperm.xlu0 %1562, %v1501
      %v1564 = vpop.permute.xlu0 %1563
      %1567 = vset.pattern.permute.xlu0 0
      %1568 = vperm.xlu0 %1567, %v1502
      %v1569 = vpop.permute.xlu0 %1568
      %1572 = vset.pattern.permute.xlu0 0
      %1573 = vperm.xlu0 %1572, %v1503
      %v1574 = vpop.permute.xlu0 %1573
      %1577 = vset.pattern.permute.xlu0 0
      %1578 = vperm.xlu0 %1577, %v1504
      %v1579 = vpop.permute.xlu0 %1578
      %1582 = vset.pattern.permute.xlu0 0
      %1583 = vperm.xlu0 %1582, %v1505
      %v1584 = vpop.permute.xlu0 %1583
      %v1602 = vunpack.c.l.b16 %v1474
      %v1603 = vunpack.c.l.b16 %v1475
      %v1604 = vunpack.c.l.b16 %v1476
      %v1605 = vunpack.c.l.b16 %v1477
      %v1606 = vunpack.c.l.b16 %v1478
      %v1607 = vunpack.c.l.b16 %v1479
      %v1608 = vunpack.c.l.b16 %v1480
      %v1609 = vunpack.c.l.b16 %v1481
      %v1610 = vunpack.c.l.b16 %v1482
      %v1611 = vunpack.c.l.b16 %v1483
      %v1612 = vunpack.c.l.b16 %v1484
      %v1613 = vunpack.c.l.b16 %v1485
      %v1614 = vunpack.c.l.b16 %v1486
      %v1615 = vunpack.c.l.b16 %v1487
      %v1616 = vunpack.c.l.b16 %v1488
      %v1617 = vunpack.c.l.b16 %v1489
      %v1618 = vpack.c.b16 %v1603, %v1602
      %v1619 = vpack.c.b16 %v1605, %v1604
      %v1620 = vpack.c.b16 %v1607, %v1606
      %v1621 = vpack.c.b16 %v1609, %v1608
      %v1622 = vpack.c.b16 %v1611, %v1610
      %v1623 = vpack.c.b16 %v1613, %v1612
      %v1624 = vpack.c.b16 %v1615, %v1614
      %v1625 = vpack.c.b16 %v1617, %v1616
      %1634 = vmatprep.subr.bf16.mxu0 %v1456
      %1635 = vmatpush1.bf16.msra.mxu0 %v1455
      %1636 = vmatprep.subr.bf16.mxu0 %v1458
      %1637 = vmatpush1.bf16.msra.mxu0 %v1457
      %1638 = vmatprep.subr.bf16.mxu0 %v1460
      %1639 = vmatpush1.bf16.msra.mxu0 %v1459
      %1640 = vmatprep.subr.bf16.mxu0 %v1462
      %1641 = vmatpush1.bf16.msra.mxu0 %v1461
      %1642 = vmatprep.subr.bf16.mxu0 %v1464
      %1643 = vmatpush1.bf16.msra.mxu0 %v1463
      %1644 = vmatprep.subr.bf16.mxu0 %v1466
      %1645 = vmatpush1.bf16.msra.mxu0 %v1465
      %1646 = vmatprep.subr.bf16.mxu0 %v1468
      %1647 = vmatpush1.bf16.msra.mxu0 %v1467
      %1648 = vmatprep.subr.bf16.mxu0 %v1470
      %1649 = vmatpush1.bf16.msra.mxu0 %v1469
      %1650 = vmatprep.subr.bf16.mxu0 0
      %1651 = vmatpush1.bf16.msra.mxu0 0
      %1652 = vmatprep.subr.bf16.mxu0 0
      %1653 = vmatpush1.bf16.msra.mxu0 0
      %1654 = vmatprep.subr.bf16.mxu0 0
      %1655 = vmatpush1.bf16.msra.mxu0 0
      %1656 = vmatprep.subr.bf16.mxu0 0
      %1657 = vmatpush1.bf16.msra.mxu0 0
      %1658 = vmatprep.subr.bf16.mxu0 0
      %1659 = vmatpush1.bf16.msra.mxu0 0
      %1660 = vmatprep.subr.bf16.mxu0 0
      %1661 = vmatpush1.bf16.msra.mxu0 0
      %1662 = vmatprep.subr.bf16.mxu0 0
      %1663 = vmatpush1.bf16.msra.mxu0 0
      %1664 = vmatprep.subr.bf16.mxu0 0
      %1665 = vmatpush1.bf16.msra.mxu0 0
      %1666 = vmatprep.mubr.bf16.mxu0 0
      %1667 = vmatmul.mubr.bf16.gmra.mrb[0].mxu0 %v1618
      %v1668 = vpop.f32.mrb[0].mxu0
      %v1669 = vadd.f32 %v1509, %v1668
      %v1670 = vpop.f32.mrb[0].mxu0
      %v1671 = vadd.f32 %v1509, %v1670
      %v1672 = vpop.f32.mrb[0].mxu0
      %v1673 = vadd.f32 %v1514, %v1672
      %v1674 = vpop.f32.mrb[0].mxu0
      %v1675 = vadd.f32 %v1514, %v1674
      %1676 = vmatprep.mubr.bf16.mxu0 0
      %1677 = vmatmul.mubr.bf16.gmra.mrb[0].mxu0 %v1619
      %v1678 = vpop.f32.mrb[0].mxu0
      %v1679 = vadd.f32 %v1519, %v1678
      %v1680 = vpop.f32.mrb[0].mxu0
      %v1681 = vadd.f32 %v1519, %v1680
      %v1682 = vpop.f32.mrb[0].mxu0
      %v1683 = vadd.f32 %v1524, %v1682
      %v1684 = vpop.f32.mrb[0].mxu0
      %v1685 = vadd.f32 %v1524, %v1684
      %1686 = vmatprep.mubr.bf16.mxu0 0
      %1687 = vmatmul.mubr.bf16.gmra.mrb[0].mxu0 %v1620
      %v1688 = vpop.f32.mrb[0].mxu0
      %v1689 = vadd.f32 %v1529, %v1688
      %v1690 = vpop.f32.mrb[0].mxu0
      %v1691 = vadd.f32 %v1529, %v1690
      %v1692 = vpop.f32.mrb[0].mxu0
      %v1693 = vadd.f32 %v1534, %v1692
      %v1694 = vpop.f32.mrb[0].mxu0
      %v1695 = vadd.f32 %v1534, %v1694
      %1696 = vmatprep.mubr.bf16.mxu0 0
      %1697 = vmatmul.mubr.bf16.gmra.mrb[0].mxu0 %v1621
      %v1698 = vpop.f32.mrb[0].mxu0
      %v1699 = vadd.f32 %v1539, %v1698
      %v1700 = vpop.f32.mrb[0].mxu0
      %v1701 = vadd.f32 %v1539, %v1700
      %v1702 = vpop.f32.mrb[0].mxu0
      %v1703 = vadd.f32 %v1544, %v1702
      %v1704 = vpop.f32.mrb[0].mxu0
      %v1705 = vadd.f32 %v1544, %v1704
      %1706 = vmatprep.mubr.bf16.mxu0 0
      %1707 = vmatmul.mubr.bf16.gmra.mrb[0].mxu0 %v1622
      %v1708 = vpop.f32.mrb[0].mxu0
      %v1709 = vadd.f32 %v1549, %v1708
      %v1710 = vpop.f32.mrb[0].mxu0
      %v1711 = vadd.f32 %v1549, %v1710
      %v1712 = vpop.f32.mrb[0].mxu0
      %v1713 = vadd.f32 %v1554, %v1712
      %v1714 = vpop.f32.mrb[0].mxu0
      %v1715 = vadd.f32 %v1554, %v1714
      %1716 = vmatprep.mubr.bf16.mxu0 0
      %1717 = vmatmul.mubr.bf16.gmra.mrb[0].mxu0 %v1623
      %v1718 = vpop.f32.mrb[0].mxu0
      %v1719 = vadd.f32 %v1559, %v1718
      %v1720 = vpop.f32.mrb[0].mxu0
      %v1721 = vadd.f32 %v1559, %v1720
      %v1722 = vpop.f32.mrb[0].mxu0
      %v1723 = vadd.f32 %v1564, %v1722
      %v1724 = vpop.f32.mrb[0].mxu0
      %v1725 = vadd.f32 %v1564, %v1724
      %1726 = vmatprep.mubr.bf16.mxu0 0
      %1727 = vmatmul.mubr.bf16.gmra.mrb[0].mxu0 %v1624
      %v1728 = vpop.f32.mrb[0].mxu0
      %v1729 = vadd.f32 %v1569, %v1728
      %v1730 = vpop.f32.mrb[0].mxu0
      %v1731 = vadd.f32 %v1569, %v1730
      %v1732 = vpop.f32.mrb[0].mxu0
      %v1733 = vadd.f32 %v1574, %v1732
      %v1734 = vpop.f32.mrb[0].mxu0
      %v1735 = vadd.f32 %v1574, %v1734
      %1736 = vmatprep.mubr.bf16.mxu0 0
      %1737 = vmatmul.mubr.bf16.gmra.mrb[0].mxu0 %v1625
      %v1738 = vpop.f32.mrb[0].mxu0
      %v1739 = vadd.f32 %v1579, %v1738
      %v1740 = vpop.f32.mrb[0].mxu0
      %v1741 = vadd.f32 %v1579, %v1740
      %v1742 = vpop.f32.mrb[0].mxu0
      %v1743 = vadd.f32 %v1584, %v1742
      %v1744 = vpop.f32.mrb[0].mxu0
      %v1745 = vadd.f32 %v1584, %v1744
      %1746 = vdwg.mxu0
      %v1747 = vmax.f32 %v1669, 0.0
      %v1748 = vmax.f32 %v1671, 0.0
      %v1749 = vmax.f32 %v1673, 0.0
      %v1750 = vmax.f32 %v1675, 0.0
      %v1751 = vmax.f32 %v1679, 0.0
      %v1752 = vmax.f32 %v1681, 0.0
      %v1753 = vmax.f32 %v1683, 0.0
      %v1754 = vmax.f32 %v1685, 0.0
      %v1755 = vmax.f32 %v1689, 0.0
      %v1756 = vmax.f32 %v1691, 0.0
      %v1757 = vmax.f32 %v1693, 0.0
      %v1758 = vmax.f32 %v1695, 0.0
      %v1759 = vmax.f32 %v1699, 0.0
      %v1760 = vmax.f32 %v1701, 0.0
      %v1761 = vmax.f32 %v1703, 0.0
      %v1762 = vmax.f32 %v1705, 0.0
      %v1763 = vmax.f32 %v1709, 0.0
      %v1764 = vmax.f32 %v1711, 0.0
      %v1765 = vmax.f32 %v1713, 0.0
      %v1766 = vmax.f32 %v1715, 0.0
      %v1767 = vmax.f32 %v1719, 0.0
      %v1768 = vmax.f32 %v1721, 0.0
      %v1769 = vmax.f32 %v1723, 0.0
      %v1770 = vmax.f32 %v1725, 0.0
      %v1771 = vmax.f32 %v1729, 0.0
      %v1772 = vmax.f32 %v1731, 0.0
      %v1773 = vmax.f32 %v1733, 0.0
      %v1774 = vmax.f32 %v1735, 0.0
      %v1775 = vmax.f32 %v1739, 0.0
      %v1776 = vmax.f32 %v1741, 0.0
      %v1777 = vmax.f32 %v1743, 0.0
      %v1778 = vmax.f32 %v1745, 0.0
      %v1779 = vpack.c.bf16 %v1749, %v1747
      %v1780 = vpack.c.bf16 %v1750, %v1748
      %v1781 = vpack.c.bf16 %v1753, %v1751
      %v1782 = vpack.c.bf16 %v1754, %v1752
      %v1783 = vpack.c.bf16 %v1757, %v1755
      %v1784 = vpack.c.bf16 %v1758, %v1756
      %v1785 = vpack.c.bf16 %v1761, %v1759
      %v1786 = vpack.c.bf16 %v1762, %v1760
      %v1787 = vpack.c.bf16 %v1765, %v1763
      %v1788 = vpack.c.bf16 %v1766, %v1764
      %v1789 = vpack.c.bf16 %v1769, %v1767
      %v1790 = vpack.c.bf16 %v1770, %v1768
      %v1791 = vpack.c.bf16 %v1773, %v1771
      %v1792 = vpack.c.bf16 %v1774, %v1772
      %v1793 = vpack.c.bf16 %v1777, %v1775
      %v1794 = vpack.c.bf16 %v1778, %v1776
      %1795 = vmatprep.subr.bf16.mxu0 %v1780
      %1796 = vmatpush1.bf16.msra.mxu0 %v1779
      %1797 = vmatprep.subr.bf16.mxu0 %v1782
      %1798 = vmatpush1.bf16.msra.mxu0 %v1781
      %1799 = vmatprep.subr.bf16.mxu0 %v1784
      %1800 = vmatpush1.bf16.msra.mxu0 %v1783
      %1801 = vmatprep.subr.bf16.mxu0 %v1786
      %1802 = vmatpush1.bf16.msra.mxu0 %v1785
      %1803 = vmatprep.subr.bf16.mxu0 %v1788
      %1804 = vmatpush1.bf16.msra.mxu0 %v1787
      %1805 = vmatprep.subr.bf16.mxu0 %v1790
      %1806 = vmatpush1.bf16.msra.mxu0 %v1789
      %1807 = vmatprep.subr.bf16.mxu0 %v1792
      %1808 = vmatpush1.bf16.msra.mxu0 %v1791
      %1809 = vmatprep.subr.bf16.mxu0 %v1794
      %1810 = vmatpush1.bf16.msra.mxu0 %v1793
      %1811 = vmatprep.subr.bf16.mxu0 0
      %1812 = vmatpush1.bf16.msra.mxu0 0
      %1813 = vmatprep.subr.bf16.mxu0 0
      %1814 = vmatpush1.bf16.msra.mxu0 0
      %1815 = vmatprep.subr.bf16.mxu0 0
      %1816 = vmatpush1.bf16.msra.mxu0 0
      %1817 = vmatprep.subr.bf16.mxu0 0
      %1818 = vmatpush1.bf16.msra.mxu0 0
      %1819 = vmatprep.subr.bf16.mxu0 0
      %1820 = vmatpush1.bf16.msra.mxu0 0
      %1821 = vmatprep.subr.bf16.mxu0 0
      %1822 = vmatpush1.bf16.msra.mxu0 0
      %1823 = vmatprep.subr.bf16.mxu0 0
      %1824 = vmatpush1.bf16.msra.mxu0 0
      %1825 = vmatprep.subr.bf16.mxu0 0
      %1826 = vmatpush1.bf16.msra.mxu0 0
      %1827 = vmatprep.mubr.bf16.mxu0 0
      %1828 = vmatmul.mubr.bf16.gmra.mrb[0].mxu0 %v1472
      %v1829 = vpop.f32.mrb[0].mxu0
      %v1830 = vadd.f32 0.0, %v1829
      %v1831 = vpop.f32.mrb[0].mxu0
      %v1832 = vadd.f32 0.0, %v1831
      %v1833 = vpop.f32.mrb[0].mxu0
      %v1834 = vpop.f32.mrb[0].mxu0
      %1835 = vdwg.mxu0
      %1837 = vset.pattern.permute.xlu0 0
      %1838 = vperm.xlu0 %1837, %v1473
      %v1839 = vpop.permute.xlu0 %1838
      %1841 = vmatprep.subr.bf16.mxu0 %v1780
      %1842 = vmatpush1.bf16.msra.mxu0 %v1779
      %1843 = vmatprep.subr.bf16.mxu0 %v1782
      %1844 = vmatpush1.bf16.msra.mxu0 %v1781
      %1845 = vmatprep.subr.bf16.mxu0 %v1784
      %1846 = vmatpush1.bf16.msra.mxu0 %v1783
      %1847 = vmatprep.subr.bf16.mxu0 %v1786
      %1848 = vmatpush1.bf16.msra.mxu0 %v1785
      %1849 = vmatprep.subr.bf16.mxu0 %v1788
      %1850 = vmatpush1.bf16.msra.mxu0 %v1787
      %1851 = vmatprep.subr.bf16.mxu0 %v1790
      %1852 = vmatpush1.bf16.msra.mxu0 %v1789
      %1853 = vmatprep.subr.bf16.mxu0 %v1792
      %1854 = vmatpush1.bf16.msra.mxu0 %v1791
      %1855 = vmatprep.subr.bf16.mxu0 %v1794
      %1856 = vmatpush1.bf16.msra.mxu0 %v1793
      %1857 = vmatprep.subr.bf16.mxu0 0
      %1858 = vmatpush1.bf16.msra.mxu0 0
      %1859 = vmatprep.subr.bf16.mxu0 0
      %1860 = vmatpush1.bf16.msra.mxu0 0
      %1861 = vmatprep.subr.bf16.mxu0 0
      %1862 = vmatpush1.bf16.msra.mxu0 0
      %1863 = vmatprep.subr.bf16.mxu0 0
      %1864 = vmatpush1.bf16.msra.mxu0 0
      %1865 = vmatprep.subr.bf16.mxu0 0
      %1866 = vmatpush1.bf16.msra.mxu0 0
      %1867 = vmatprep.subr.bf16.mxu0 0
      %1868 = vmatpush1.bf16.msra.mxu0 0
      %1869 = vmatprep.subr.bf16.mxu0 0
      %1870 = vmatpush1.bf16.msra.mxu0 0
      %1871 = vmatprep.subr.bf16.mxu0 0
      %1872 = vmatpush1.bf16.msra.mxu0 0
      %1873 = vmatprep.mubr.bf16.mxu0 0
      %1874 = vmatmul.mubr.bf16.gmra.mrb[0].mxu0 %v1471
      %v1875 = vpop.f32.mrb[0].mxu0
      %v1876 = vadd.f32 %v1839, %v1875
      %v1877 = vpop.f32.mrb[0].mxu0
      %v1878 = vadd.f32 %v1839, %v1877
      %v1879 = vpop.f32.mrb[0].mxu0
      %v1880 = vpop.f32.mrb[0].mxu0
      %1881 = vdwg.mxu0
      %s1882 = scalar_lea.vmem %s7, 64
      %v1883 = vld [vmem:[%s1882] sm:$0xf]
      %v1884 = vld [vmem:[%s1882 + $0x4] sm:$0xf]
      %v1885 = vld [vmem:[%s1882 + $0x8] sm:$0xf]
      %v1886 = vld [vmem:[%s1882 + $0xc] sm:$0xf]
      %v1887 = vld [vmem:[%s1882 + $0x10] sm:$0xf]
      %v1888 = vld [vmem:[%s1882 + $0x14] sm:$0xf]
      %v1889 = vld [vmem:[%s1882 + $0x18] sm:$0xf]
      %v1890 = vld [vmem:[%s1882 + $0x1c] sm:$0xf]
      %v1891 = vld [vmem:[%s1882 + $0x20] sm:$0xf]
      %v1892 = vld [vmem:[%s1882 + $0x24] sm:$0xf]
      %v1893 = vld [vmem:[%s1882 + $0x28] sm:$0xf]
      %v1894 = vld [vmem:[%s1882 + $0x2c] sm:$0xf]
      %v1895 = vld [vmem:[%s1882 + $0x30] sm:$0xf]
      %v1896 = vld [vmem:[%s1882 + $0x34] sm:$0xf]
      %v1897 = vld [vmem:[%s1882 + $0x38] sm:$0xf]
      %v1898 = vld [vmem:[%s1882 + $0x3c] sm:$0xf]
      %s1899 = scalar_lea.vmem %s428, 128
      %v1900 = vld [vmem:[%s1899] sm:$0xff]
      %v1901 = vld [vmem:[%s1899 + $0x8] sm:$0xff]
      %v1902 = vld [vmem:[%s1899 + $0x10] sm:$0xff]
      %v1903 = vld [vmem:[%s1899 + $0x18] sm:$0xff]
      %v1904 = vld [vmem:[%s1899 + $0x20] sm:$0xff]
      %v1905 = vld [vmem:[%s1899 + $0x28] sm:$0xff]
      %v1906 = vld [vmem:[%s1899 + $0x30] sm:$0xff]
      %v1907 = vld [vmem:[%s1899 + $0x38] sm:$0xff]
      %v1908 = vld [vmem:[%s1899 + $0x40] sm:$0xff]
      %v1909 = vld [vmem:[%s1899 + $0x48] sm:$0xff]
      %v1910 = vld [vmem:[%s1899 + $0x50] sm:$0xff]
      %v1911 = vld [vmem:[%s1899 + $0x58] sm:$0xff]
      %v1912 = vld [vmem:[%s1899 + $0x60] sm:$0xff]
      %v1913 = vld [vmem:[%s1899 + $0x68] sm:$0xff]
      %v1914 = vld [vmem:[%s1899 + $0x70] sm:$0xff]
      %v1915 = vld [vmem:[%s1899 + $0x78] sm:$0xff]
      %1917 = vset.pattern.permute.xlu0 0
      %1918 = vperm.xlu0 %1917, %v1900
      %v1919 = vpop.permute.xlu0 %1918
      %1922 = vset.pattern.permute.xlu0 0
      %1923 = vperm.xlu0 %1922, %v1901
      %v1924 = vpop.permute.xlu0 %1923
      %1927 = vset.pattern.permute.xlu0 0
      %1928 = vperm.xlu0 %1927, %v1902
      %v1929 = vpop.permute.xlu0 %1928
      %1932 = vset.pattern.permute.xlu0 0
      %1933 = vperm.xlu0 %1932, %v1903
      %v1934 = vpop.permute.xlu0 %1933
      %1937 = vset.pattern.permute.xlu0 0
      %1938 = vperm.xlu0 %1937, %v1904
      %v1939 = vpop.permute.xlu0 %1938
      %1942 = vset.pattern.permute.xlu0 0
      %1943 = vperm.xlu0 %1942, %v1905
      %v1944 = vpop.permute.xlu0 %1943
      %1947 = vset.pattern.permute.xlu0 0
      %1948 = vperm.xlu0 %1947, %v1906
      %v1949 = vpop.permute.xlu0 %1948
      %1952 = vset.pattern.permute.xlu0 0
      %1953 = vperm.xlu0 %1952, %v1907
      %v1954 = vpop.permute.xlu0 %1953
      %1957 = vset.pattern.permute.xlu0 0
      %1958 = vperm.xlu0 %1957, %v1908
      %v1959 = vpop.permute.xlu0 %1958
      %1962 = vset.pattern.permute.xlu0 0
      %1963 = vperm.xlu0 %1962, %v1909
      %v1964 = vpop.permute.xlu0 %1963
      %1967 = vset.pattern.permute.xlu0 0
      %1968 = vperm.xlu0 %1967, %v1910
      %v1969 = vpop.permute.xlu0 %1968
      %1972 = vset.pattern.permute.xlu0 0
      %1973 = vperm.xlu0 %1972, %v1911
      %v1974 = vpop.permute.xlu0 %1973
      %1977 = vset.pattern.permute.xlu0 0
      %1978 = vperm.xlu0 %1977, %v1912
      %v1979 = vpop.permute.xlu0 %1978
      %1982 = vset.pattern.permute.xlu0 0
      %1983 = vperm.xlu0 %1982, %v1913
      %v1984 = vpop.permute.xlu0 %1983
      %1987 = vset.pattern.permute.xlu0 0
      %1988 = vperm.xlu0 %1987, %v1914
      %v1989 = vpop.permute.xlu0 %1988
      %1992 = vset.pattern.permute.xlu0 0
      %1993 = vperm.xlu0 %1992, %v1915
      %v1994 = vpop.permute.xlu0 %1993
      %v2012 = vunpack.c.l.b16 %v1883
      %v2013 = vunpack.c.l.b16 %v1884
      %v2014 = vunpack.c.l.b16 %v1885
      %v2015 = vunpack.c.l.b16 %v1886
      %v2016 = vunpack.c.l.b16 %v1887
      %v2017 = vunpack.c.l.b16 %v1888
      %v2018 = vunpack.c.l.b16 %v1889
      %v2019 = vunpack.c.l.b16 %v1890
      %v2020 = vunpack.c.l.b16 %v1891
      %v2021 = vunpack.c.l.b16 %v1892
      %v2022 = vunpack.c.l.b16 %v1893
      %v2023 = vunpack.c.l.b16 %v1894
      %v2024 = vunpack.c.l.b16 %v1895
      %v2025 = vunpack.c.l.b16 %v1896
      %v2026 = vunpack.c.l.b16 %v1897
      %v2027 = vunpack.c.l.b16 %v1898
      %v2028 = vpack.c.b16 %v2013, %v2012
      %v2029 = vpack.c.b16 %v2015, %v2014
      %v2030 = vpack.c.b16 %v2017, %v2016
      %v2031 = vpack.c.b16 %v2019, %v2018
      %v2032 = vpack.c.b16 %v2021, %v2020
      %v2033 = vpack.c.b16 %v2023, %v2022
      %v2034 = vpack.c.b16 %v2025, %v2024
      %v2035 = vpack.c.b16 %v2027, %v2026
      %2044 = vmatprep.subr.bf16.mxu0 %v1456
      %2045 = vmatpush1.bf16.msra.mxu0 %v1455
      %2046 = vmatprep.subr.bf16.mxu0 %v1458
      %2047 = vmatpush1.bf16.msra.mxu0 %v1457
      %2048 = vmatprep.subr.bf16.mxu0 %v1460
      %2049 = vmatpush1.bf16.msra.mxu0 %v1459
      %2050 = vmatprep.subr.bf16.mxu0 %v1462
      %2051 = vmatpush1.bf16.msra.mxu0 %v1461
      %2052 = vmatprep.subr.bf16.mxu0 %v1464
      %2053 = vmatpush1.bf16.msra.mxu0 %v1463
      %2054 = vmatprep.subr.bf16.mxu0 %v1466
      %2055 = vmatpush1.bf16.msra.mxu0 %v1465
      %2056 = vmatprep.subr.bf16.mxu0 %v1468
      %2057 = vmatpush1.bf16.msra.mxu0 %v1467
      %2058 = vmatprep.subr.bf16.mxu0 %v1470
      %2059 = vmatpush1.bf16.msra.mxu0 %v1469
      %2060 = vmatprep.subr.bf16.mxu0 0
      %2061 = vmatpush1.bf16.msra.mxu0 0
      %2062 = vmatprep.subr.bf16.mxu0 0
      %2063 = vmatpush1.bf16.msra.mxu0 0
      %2064 = vmatprep.subr.bf16.mxu0 0
      %2065 = vmatpush1.bf16.msra.mxu0 0
      %2066 = vmatprep.subr.bf16.mxu0 0
      %2067 = vmatpush1.bf16.msra.mxu0 0
      %2068 = vmatprep.subr.bf16.mxu0 0
      %2069 = vmatpush1.bf16.msra.mxu0 0
      %2070 = vmatprep.subr.bf16.mxu0 0
      %2071 = vmatpush1.bf16.msra.mxu0 0
      %2072 = vmatprep.subr.bf16.mxu0 0
      %2073 = vmatpush1.bf16.msra.mxu0 0
      %2074 = vmatprep.subr.bf16.mxu0 0
      %2075 = vmatpush1.bf16.msra.mxu0 0
      %2076 = vmatprep.mubr.bf16.mxu0 0
      %2077 = vmatmul.mubr.bf16.gmra.mrb[0].mxu0 %v2028
      %v2078 = vpop.f32.mrb[0].mxu0
      %v2079 = vadd.f32 %v1919, %v2078
      %v2080 = vpop.f32.mrb[0].mxu0
      %v2081 = vadd.f32 %v1919, %v2080
      %v2082 = vpop.f32.mrb[0].mxu0
      %v2083 = vadd.f32 %v1924, %v2082
      %v2084 = vpop.f32.mrb[0].mxu0
      %v2085 = vadd.f32 %v1924, %v2084
      %2086 = vmatprep.mubr.bf16.mxu0 0
      %2087 = vmatmul.mubr.bf16.gmra.mrb[0].mxu0 %v2029
      %v2088 = vpop.f32.mrb[0].mxu0
      %v2089 = vadd.f32 %v1929, %v2088
      %v2090 = vpop.f32.mrb[0].mxu0
      %v2091 = vadd.f32 %v1929, %v2090
      %v2092 = vpop.f32.mrb[0].mxu0
      %v2093 = vadd.f32 %v1934, %v2092
      %v2094 = vpop.f32.mrb[0].mxu0
      %v2095 = vadd.f32 %v1934, %v2094
      %2096 = vmatprep.mubr.bf16.mxu0 0
      %2097 = vmatmul.mubr.bf16.gmra.mrb[0].mxu0 %v2030
      %v2098 = vpop.f32.mrb[0].mxu0
      %v2099 = vadd.f32 %v1939, %v2098
      %v2100 = vpop.f32.mrb[0].mxu0
      %v2101 = vadd.f32 %v1939, %v2100
      %v2102 = vpop.f32.mrb[0].mxu0
      %v2103 = vadd.f32 %v1944, %v2102
      %v2104 = vpop.f32.mrb[0].mxu0
      %v2105 = vadd.f32 %v1944, %v2104
      %2106 = vmatprep.mubr.bf16.mxu0 0
      %2107 = vmatmul.mubr.bf16.gmra.mrb[0].mxu0 %v2031
      %v2108 = vpop.f32.mrb[0].mxu0
      %v2109 = vadd.f32 %v1949, %v2108
      %v2110 = vpop.f32.mrb[0].mxu0
      %v2111 = vadd.f32 %v1949, %v2110
      %v2112 = vpop.f32.mrb[0].mxu0
      %v2113 = vadd.f32 %v1954, %v2112
      %v2114 = vpop.f32.mrb[0].mxu0
      %v2115 = vadd.f32 %v1954, %v2114
      %2116 = vmatprep.mubr.bf16.mxu0 0
      %2117 = vmatmul.mubr.bf16.gmra.mrb[0].mxu0 %v2032
      %v2118 = vpop.f32.mrb[0].mxu0
      %v2119 = vadd.f32 %v1959, %v2118
      %v2120 = vpop.f32.mrb[0].mxu0
      %v2121 = vadd.f32 %v1959, %v2120
      %v2122 = vpop.f32.mrb[0].mxu0
      %v2123 = vadd.f32 %v1964, %v2122
      %v2124 = vpop.f32.mrb[0].mxu0
      %v2125 = vadd.f32 %v1964, %v2124
      %2126 = vmatprep.mubr.bf16.mxu0 0
      %2127 = vmatmul.mubr.bf16.gmra.mrb[0].mxu0 %v2033
      %v2128 = vpop.f32.mrb[0].mxu0
      %v2129 = vadd.f32 %v1969, %v2128
      %v2130 = vpop.f32.mrb[0].mxu0
      %v2131 = vadd.f32 %v1969, %v2130
      %v2132 = vpop.f32.mrb[0].mxu0
      %v2133 = vadd.f32 %v1974, %v2132
      %v2134 = vpop.f32.mrb[0].mxu0
      %v2135 = vadd.f32 %v1974, %v2134
      %2136 = vmatprep.mubr.bf16.mxu0 0
      %2137 = vmatmul.mubr.bf16.gmra.mrb[0].mxu0 %v2034
      %v2138 = vpop.f32.mrb[0].mxu0
      %v2139 = vadd.f32 %v1979, %v2138
      %v2140 = vpop.f32.mrb[0].mxu0
      %v2141 = vadd.f32 %v1979, %v2140
      %v2142 = vpop.f32.mrb[0].mxu0
      %v2143 = vadd.f32 %v1984, %v2142
      %v2144 = vpop.f32.mrb[0].mxu0
      %v2145 = vadd.f32 %v1984, %v2144
      %2146 = vmatprep.mubr.bf16.mxu0 0
      %2147 = vmatmul.mubr.bf16.gmra.mrb[0].mxu0 %v2035
      %v2148 = vpop.f32.mrb[0].mxu0
      %v2149 = vadd.f32 %v1989, %v2148
      %v2150 = vpop.f32.mrb[0].mxu0
      %v2151 = vadd.f32 %v1989, %v2150
      %v2152 = vpop.f32.mrb[0].mxu0
      %v2153 = vadd.f32 %v1994, %v2152
      %v2154 = vpop.f32.mrb[0].mxu0
      %v2155 = vadd.f32 %v1994, %v2154
      %2156 = vdwg.mxu0
      %v2157 = vmax.f32 %v2079, 0.0
      %v2158 = vmax.f32 %v2081, 0.0
      %v2159 = vmax.f32 %v2083, 0.0
      %v2160 = vmax.f32 %v2085, 0.0
      %v2161 = vmax.f32 %v2089, 0.0
      %v2162 = vmax.f32 %v2091, 0.0
      %v2163 = vmax.f32 %v2093, 0.0
      %v2164 = vmax.f32 %v2095, 0.0
      %v2165 = vmax.f32 %v2099, 0.0
      %v2166 = vmax.f32 %v2101, 0.0
      %v2167 = vmax.f32 %v2103, 0.0
      %v2168 = vmax.f32 %v2105, 0.0
      %v2169 = vmax.f32 %v2109, 0.0
      %v2170 = vmax.f32 %v2111, 0.0
      %v2171 = vmax.f32 %v2113, 0.0
      %v2172 = vmax.f32 %v2115, 0.0
      %v2173 = vmax.f32 %v2119, 0.0
      %v2174 = vmax.f32 %v2121, 0.0
      %v2175 = vmax.f32 %v2123, 0.0
      %v2176 = vmax.f32 %v2125, 0.0
      %v2177 = vmax.f32 %v2129, 0.0
      %v2178 = vmax.f32 %v2131, 0.0
      %v2179 = vmax.f32 %v2133, 0.0
      %v2180 = vmax.f32 %v2135, 0.0
      %v2181 = vmax.f32 %v2139, 0.0
      %v2182 = vmax.f32 %v2141, 0.0
      %v2183 = vmax.f32 %v2143, 0.0
      %v2184 = vmax.f32 %v2145, 0.0
      %v2185 = vmax.f32 %v2149, 0.0
      %v2186 = vmax.f32 %v2151, 0.0
      %v2187 = vmax.f32 %v2153, 0.0
      %v2188 = vmax.f32 %v2155, 0.0
      %v2189 = vpack.c.bf16 %v2159, %v2157
      %v2190 = vpack.c.bf16 %v2160, %v2158
      %v2191 = vpack.c.bf16 %v2163, %v2161
      %v2192 = vpack.c.bf16 %v2164, %v2162
      %v2193 = vpack.c.bf16 %v2167, %v2165
      %v2194 = vpack.c.bf16 %v2168, %v2166
      %v2195 = vpack.c.bf16 %v2171, %v2169
      %v2196 = vpack.c.bf16 %v2172, %v2170
      %v2197 = vpack.c.bf16 %v2175, %v2173
      %v2198 = vpack.c.bf16 %v2176, %v2174
      %v2199 = vpack.c.bf16 %v2179, %v2177
      %v2200 = vpack.c.bf16 %v2180, %v2178
      %v2201 = vpack.c.bf16 %v2183, %v2181
      %v2202 = vpack.c.bf16 %v2184, %v2182
      %v2203 = vpack.c.bf16 %v2187, %v2185
      %v2204 = vpack.c.bf16 %v2188, %v2186
      %2205 = vmatprep.subr.bf16.mxu0 %v2190
      %2206 = vmatpush1.bf16.msra.mxu0 %v2189
      %2207 = vmatprep.subr.bf16.mxu0 %v2192
      %2208 = vmatpush1.bf16.msra.mxu0 %v2191
      %2209 = vmatprep.subr.bf16.mxu0 %v2194
      %2210 = vmatpush1.bf16.msra.mxu0 %v2193
      %2211 = vmatprep.subr.bf16.mxu0 %v2196
      %2212 = vmatpush1.bf16.msra.mxu0 %v2195
      %2213 = vmatprep.subr.bf16.mxu0 %v2198
      %2214 = vmatpush1.bf16.msra.mxu0 %v2197
      %2215 = vmatprep.subr.bf16.mxu0 %v2200
      %2216 = vmatpush1.bf16.msra.mxu0 %v2199
      %2217 = vmatprep.subr.bf16.mxu0 %v2202
      %2218 = vmatpush1.bf16.msra.mxu0 %v2201
      %2219 = vmatprep.subr.bf16.mxu0 %v2204
      %2220 = vmatpush1.bf16.msra.mxu0 %v2203
      %2221 = vmatprep.subr.bf16.mxu0 0
      %2222 = vmatpush1.bf16.msra.mxu0 0
      %2223 = vmatprep.subr.bf16.mxu0 0
      %2224 = vmatpush1.bf16.msra.mxu0 0
      %2225 = vmatprep.subr.bf16.mxu0 0
      %2226 = vmatpush1.bf16.msra.mxu0 0
      %2227 = vmatprep.subr.bf16.mxu0 0
      %2228 = vmatpush1.bf16.msra.mxu0 0
      %2229 = vmatprep.subr.bf16.mxu0 0
      %2230 = vmatpush1.bf16.msra.mxu0 0
      %2231 = vmatprep.subr.bf16.mxu0 0
      %2232 = vmatpush1.bf16.msra.mxu0 0
      %2233 = vmatprep.subr.bf16.mxu0 0
      %2234 = vmatpush1.bf16.msra.mxu0 0
      %2235 = vmatprep.subr.bf16.mxu0 0
      %2236 = vmatpush1.bf16.msra.mxu0 0
      %2237 = vmatprep.mubr.bf16.mxu0 0
      %2238 = vmatmul.mubr.bf16.gmra.mrb[0].mxu0 %v1472
      %v2239 = vpop.f32.mrb[0].mxu0
      %v2240 = vadd.f32 0.0, %v2239
      %v2241 = vpop.f32.mrb[0].mxu0
      %v2242 = vadd.f32 0.0, %v2241
      %v2243 = vpop.f32.mrb[0].mxu0
      %v2244 = vpop.f32.mrb[0].mxu0
      %2245 = vdwg.mxu0
      %2246 = vmatprep.subr.bf16.mxu0 %v2190
      %2247 = vmatpush1.bf16.msra.mxu0 %v2189
      %2248 = vmatprep.subr.bf16.mxu0 %v2192
      %2249 = vmatpush1.bf16.msra.mxu0 %v2191
      %2250 = vmatprep.subr.bf16.mxu0 %v2194
      %2251 = vmatpush1.bf16.msra.mxu0 %v2193
      %2252 = vmatprep.subr.bf16.mxu0 %v2196
      %2253 = vmatpush1.bf16.msra.mxu0 %v2195
      %2254 = vmatprep.subr.bf16.mxu0 %v2198
      %2255 = vmatpush1.bf16.msra.mxu0 %v2197
      %2256 = vmatprep.subr.bf16.mxu0 %v2200
      %2257 = vmatpush1.bf16.msra.mxu0 %v2199
      %2258 = vmatprep.subr.bf16.mxu0 %v2202
      %2259 = vmatpush1.bf16.msra.mxu0 %v2201
      %2260 = vmatprep.subr.bf16.mxu0 %v2204
      %2261 = vmatpush1.bf16.msra.mxu0 %v2203
      %2262 = vmatprep.subr.bf16.mxu0 0
      %2263 = vmatpush1.bf16.msra.mxu0 0
      %2264 = vmatprep.subr.bf16.mxu0 0
      %2265 = vmatpush1.bf16.msra.mxu0 0
      %2266 = vmatprep.subr.bf16.mxu0 0
      %2267 = vmatpush1.bf16.msra.mxu0 0
      %2268 = vmatprep.subr.bf16.mxu0 0
      %2269 = vmatpush1.bf16.msra.mxu0 0
      %2270 = vmatprep.subr.bf16.mxu0 0
      %2271 = vmatpush1.bf16.msra.mxu0 0
      %2272 = vmatprep.subr.bf16.mxu0 0
      %2273 = vmatpush1.bf16.msra.mxu0 0
      %2274 = vmatprep.subr.bf16.mxu0 0
      %2275 = vmatpush1.bf16.msra.mxu0 0
      %2276 = vmatprep.subr.bf16.mxu0 0
      %2277 = vmatpush1.bf16.msra.mxu0 0
      %2278 = vmatprep.mubr.bf16.mxu0 0
      %2279 = vmatmul.mubr.bf16.gmra.mrb[0].mxu0 %v1471
      %v2280 = vpop.f32.mrb[0].mxu0
      %v2281 = vadd.f32 %v1839, %v2280
      %v2282 = vpop.f32.mrb[0].mxu0
      %v2283 = vadd.f32 %v1839, %v2282
      %v2284 = vpop.f32.mrb[0].mxu0
      %v2285 = vpop.f32.mrb[0].mxu0
      %2286 = vdwg.mxu0
      %s2287 = scalar_lea.vmem %s7, 128
      %v2288 = vld [vmem:[%s2287] sm:$0xf]
      %v2289 = vld [vmem:[%s2287 + $0x4] sm:$0xf]
      %v2290 = vld [vmem:[%s2287 + $0x8] sm:$0xf]
      %v2291 = vld [vmem:[%s2287 + $0xc] sm:$0xf]
      %v2292 = vld [vmem:[%s2287 + $0x10] sm:$0xf]
      %v2293 = vld [vmem:[%s2287 + $0x14] sm:$0xf]
      %v2294 = vld [vmem:[%s2287 + $0x18] sm:$0xf]
      %v2295 = vld [vmem:[%s2287 + $0x1c] sm:$0xf]
      %v2296 = vld [vmem:[%s2287 + $0x20] sm:$0xf]
      %v2297 = vld [vmem:[%s2287 + $0x24] sm:$0xf]
      %v2298 = vld [vmem:[%s2287 + $0x28] sm:$0xf]
      %v2299 = vld [vmem:[%s2287 + $0x2c] sm:$0xf]
      %v2300 = vld [vmem:[%s2287 + $0x30] sm:$0xf]
      %v2301 = vld [vmem:[%s2287 + $0x34] sm:$0xf]
      %v2302 = vld [vmem:[%s2287 + $0x38] sm:$0xf]
      %v2303 = vld [vmem:[%s2287 + $0x3c] sm:$0xf]
      %s2304 = scalar_lea.vmem %s428, 256
      %v2305 = vld [vmem:[%s2304] sm:$0xff]
      %v2306 = vld [vmem:[%s2304 + $0x8] sm:$0xff]
      %v2307 = vld [vmem:[%s2304 + $0x10] sm:$0xff]
      %v2308 = vld [vmem:[%s2304 + $0x18] sm:$0xff]
      %v2309 = vld [vmem:[%s2304 + $0x20] sm:$0xff]
      %v2310 = vld [vmem:[%s2304 + $0x28] sm:$0xff]
      %v2311 = vld [vmem:[%s2304 + $0x30] sm:$0xff]
      %v2312 = vld [vmem:[%s2304 + $0x38] sm:$0xff]
      %v2313 = vld [vmem:[%s2304 + $0x40] sm:$0xff]
      %v2314 = vld [vmem:[%s2304 + $0x48] sm:$0xff]
      %v2315 = vld [vmem:[%s2304 + $0x50] sm:$0xff]
      %v2316 = vld [vmem:[%s2304 + $0x58] sm:$0xff]
      %v2317 = vld [vmem:[%s2304 + $0x60] sm:$0xff]
      %v2318 = vld [vmem:[%s2304 + $0x68] sm:$0xff]
      %v2319 = vld [vmem:[%s2304 + $0x70] sm:$0xff]
      %v2320 = vld [vmem:[%s2304 + $0x78] sm:$0xff]
      %2322 = vset.pattern.permute.xlu0 0
      %2323 = vperm.xlu0 %2322, %v2305
      %v2324 = vpop.permute.xlu0 %2323
      %2327 = vset.pattern.permute.xlu0 0
      %2328 = vperm.xlu0 %2327, %v2306
      %v2329 = vpop.permute.xlu0 %2328
      %2332 = vset.pattern.permute.xlu0 0
      %2333 = vperm.xlu0 %2332, %v2307
      %v2334 = vpop.permute.xlu0 %2333
      %2337 = vset.pattern.permute.xlu0 0
      %2338 = vperm.xlu0 %2337, %v2308
      %v2339 = vpop.permute.xlu0 %2338
      %2342 = vset.pattern.permute.xlu0 0
      %2343 = vperm.xlu0 %2342, %v2309
      %v2344 = vpop.permute.xlu0 %2343
      %2347 = vset.pattern.permute.xlu0 0
      %2348 = vperm.xlu0 %2347, %v2310
      %v2349 = vpop.permute.xlu0 %2348
      %2352 = vset.pattern.permute.xlu0 0
      %2353 = vperm.xlu0 %2352, %v2311
      %v2354 = vpop.permute.xlu0 %2353
      %2357 = vset.pattern.permute.xlu0 0
      %2358 = vperm.xlu0 %2357, %v2312
      %v2359 = vpop.permute.xlu0 %2358
      %2362 = vset.pattern.permute.xlu0 0
      %2363 = vperm.xlu0 %2362, %v2313
      %v2364 = vpop.permute.xlu0 %2363
      %2367 = vset.pattern.permute.xlu0 0
      %2368 = vperm.xlu0 %2367, %v2314
      %v2369 = vpop.permute.xlu0 %2368
      %2372 = vset.pattern.permute.xlu0 0
      %2373 = vperm.xlu0 %2372, %v2315
      %v2374 = vpop.permute.xlu0 %2373
      %2377 = vset.pattern.permute.xlu0 0
      %2378 = vperm.xlu0 %2377, %v2316
      %v2379 = vpop.permute.xlu0 %2378
      %2382 = vset.pattern.permute.xlu0 0
      %2383 = vperm.xlu0 %2382, %v2317
      %v2384 = vpop.permute.xlu0 %2383
      %2387 = vset.pattern.permute.xlu0 0
      %2388 = vperm.xlu0 %2387, %v2318
      %v2389 = vpop.permute.xlu0 %2388
      %2392 = vset.pattern.permute.xlu0 0
      %2393 = vperm.xlu0 %2392, %v2319
      %v2394 = vpop.permute.xlu0 %2393
      %2397 = vset.pattern.permute.xlu0 0
      %2398 = vperm.xlu0 %2397, %v2320
      %v2399 = vpop.permute.xlu0 %2398
      %v2417 = vunpack.c.l.b16 %v2288
      %v2418 = vunpack.c.l.b16 %v2289
      %v2419 = vunpack.c.l.b16 %v2290
      %v2420 = vunpack.c.l.b16 %v2291
      %v2421 = vunpack.c.l.b16 %v2292
      %v2422 = vunpack.c.l.b16 %v2293
      %v2423 = vunpack.c.l.b16 %v2294
      %v2424 = vunpack.c.l.b16 %v2295
      %v2425 = vunpack.c.l.b16 %v2296
      %v2426 = vunpack.c.l.b16 %v2297
      %v2427 = vunpack.c.l.b16 %v2298
      %v2428 = vunpack.c.l.b16 %v2299
      %v2429 = vunpack.c.l.b16 %v2300
      %v2430 = vunpack.c.l.b16 %v2301
      %v2431 = vunpack.c.l.b16 %v2302
      %v2432 = vunpack.c.l.b16 %v2303
      %v2433 = vpack.c.b16 %v2418, %v2417
      %v2434 = vpack.c.b16 %v2420, %v2419
      %v2435 = vpack.c.b16 %v2422, %v2421
      %v2436 = vpack.c.b16 %v2424, %v2423
      %v2437 = vpack.c.b16 %v2426, %v2425
      %v2438 = vpack.c.b16 %v2428, %v2427
      %v2439 = vpack.c.b16 %v2430, %v2429
      %v2440 = vpack.c.b16 %v2432, %v2431
      %2449 = vmatprep.subr.bf16.mxu0 %v1456
      %2450 = vmatpush1.bf16.msra.mxu0 %v1455
      %2451 = vmatprep.subr.bf16.mxu0 %v1458
      %2452 = vmatpush1.bf16.msra.mxu0 %v1457
      %2453 = vmatprep.subr.bf16.mxu0 %v1460
      %2454 = vmatpush1.bf16.msra.mxu0 %v1459
      %2455 = vmatprep.subr.bf16.mxu0 %v1462
      %2456 = vmatpush1.bf16.msra.mxu0 %v1461
      %2457 = vmatprep.subr.bf16.mxu0 %v1464
      %2458 = vmatpush1.bf16.msra.mxu0 %v1463
      %2459 = vmatprep.subr.bf16.mxu0 %v1466
      %2460 = vmatpush1.bf16.msra.mxu0 %v1465
      %2461 = vmatprep.subr.bf16.mxu0 %v1468
      %2462 = vmatpush1.bf16.msra.mxu0 %v1467
      %2463 = vmatprep.subr.bf16.mxu0 %v1470
      %2464 = vmatpush1.bf16.msra.mxu0 %v1469
      %2465 = vmatprep.subr.bf16.mxu0 0
      %2466 = vmatpush1.bf16.msra.mxu0 0
      %2467 = vmatprep.subr.bf16.mxu0 0
      %2468 = vmatpush1.bf16.msra.mxu0 0
      %2469 = vmatprep.subr.bf16.mxu0 0
      %2470 = vmatpush1.bf16.msra.mxu0 0
      %2471 = vmatprep.subr.bf16.mxu0 0
      %2472 = vmatpush1.bf16.msra.mxu0 0
      %2473 = vmatprep.subr.bf16.mxu0 0
      %2474 = vmatpush1.bf16.msra.mxu0 0
      %2475 = vmatprep.subr.bf16.mxu0 0
      %2476 = vmatpush1.bf16.msra.mxu0 0
      %2477 = vmatprep.subr.bf16.mxu0 0
      %2478 = vmatpush1.bf16.msra.mxu0 0
      %2479 = vmatprep.subr.bf16.mxu0 0
      %2480 = vmatpush1.bf16.msra.mxu0 0
      %2481 = vmatprep.mubr.bf16.mxu0 0
      %2482 = vmatmul.mubr.bf16.gmra.mrb[0].mxu0 %v2433
      %v2483 = vpop.f32.mrb[0].mxu0
      %v2484 = vadd.f32 %v2324, %v2483
      %v2485 = vpop.f32.mrb[0].mxu0
      %v2486 = vadd.f32 %v2324, %v2485
      %v2487 = vpop.f32.mrb[0].mxu0
      %v2488 = vadd.f32 %v2329, %v2487
      %v2489 = vpop.f32.mrb[0].mxu0
      %v2490 = vadd.f32 %v2329, %v2489
      %2491 = vmatprep.mubr.bf16.mxu0 0
      %2492 = vmatmul.mubr.bf16.gmra.mrb[0].mxu0 %v2434
      %v2493 = vpop.f32.mrb[0].mxu0
      %v2494 = vadd.f32 %v2334, %v2493
      %v2495 = vpop.f32.mrb[0].mxu0
      %v2496 = vadd.f32 %v2334, %v2495
      %v2497 = vpop.f32.mrb[0].mxu0
      %v2498 = vadd.f32 %v2339, %v2497
      %v2499 = vpop.f32.mrb[0].mxu0
      %v2500 = vadd.f32 %v2339, %v2499
      %2501 = vmatprep.mubr.bf16.mxu0 0
      %2502 = vmatmul.mubr.bf16.gmra.mrb[0].mxu0 %v2435
      %v2503 = vpop.f32.mrb[0].mxu0
      %v2504 = vadd.f32 %v2344, %v2503
      %v2505 = vpop.f32.mrb[0].mxu0
      %v2506 = vadd.f32 %v2344, %v2505
      %v2507 = vpop.f32.mrb[0].mxu0
      %v2508 = vadd.f32 %v2349, %v2507
      %v2509 = vpop.f32.mrb[0].mxu0
      %v2510 = vadd.f32 %v2349, %v2509
      %2511 = vmatprep.mubr.bf16.mxu0 0
      %2512 = vmatmul.mubr.bf16.gmra.mrb[0].mxu0 %v2436
      %v2513 = vpop.f32.mrb[0].mxu0
      %v2514 = vadd.f32 %v2354, %v2513
      %v2515 = vpop.f32.mrb[0].mxu0
      %v2516 = vadd.f32 %v2354, %v2515
      %v2517 = vpop.f32.mrb[0].mxu0
      %v2518 = vadd.f32 %v2359, %v2517
      %v2519 = vpop.f32.mrb[0].mxu0
      %v2520 = vadd.f32 %v2359, %v2519
      %2521 = vmatprep.mubr.bf16.mxu0 0
      %2522 = vmatmul.mubr.bf16.gmra.mrb[0].mxu0 %v2437
      %v2523 = vpop.f32.mrb[0].mxu0
      %v2524 = vadd.f32 %v2364, %v2523
      %v2525 = vpop.f32.mrb[0].mxu0
      %v2526 = vadd.f32 %v2364, %v2525
      %v2527 = vpop.f32.mrb[0].mxu0
      %v2528 = vadd.f32 %v2369, %v2527
      %v2529 = vpop.f32.mrb[0].mxu0
      %v2530 = vadd.f32 %v2369, %v2529
      %2531 = vmatprep.mubr.bf16.mxu0 0
      %2532 = vmatmul.mubr.bf16.gmra.mrb[0].mxu0 %v2438
      %v2533 = vpop.f32.mrb[0].mxu0
      %v2534 = vadd.f32 %v2374, %v2533
      %v2535 = vpop.f32.mrb[0].mxu0
      %v2536 = vadd.f32 %v2374, %v2535
      %v2537 = vpop.f32.mrb[0].mxu0
      %v2538 = vadd.f32 %v2379, %v2537
      %v2539 = vpop.f32.mrb[0].mxu0
      %v2540 = vadd.f32 %v2379, %v2539
      %2541 = vmatprep.mubr.bf16.mxu0 0
      %2542 = vmatmul.mubr.bf16.gmra.mrb[0].mxu0 %v2439
      %v2543 = vpop.f32.mrb[0].mxu0
      %v2544 = vadd.f32 %v2384, %v2543
      %v2545 = vpop.f32.mrb[0].mxu0
      %v2546 = vadd.f32 %v2384, %v2545
      %v2547 = vpop.f32.mrb[0].mxu0
      %v2548 = vadd.f32 %v2389, %v2547
      %v2549 = vpop.f32.mrb[0].mxu0
      %v2550 = vadd.f32 %v2389, %v2549
      %2551 = vmatprep.mubr.bf16.mxu0 0
      %2552 = vmatmul.mubr.bf16.gmra.mrb[0].mxu0 %v2440
      %v2553 = vpop.f32.mrb[0].mxu0
      %v2554 = vadd.f32 %v2394, %v2553
      %v2555 = vpop.f32.mrb[0].mxu0
      %v2556 = vadd.f32 %v2394, %v2555
      %v2557 = vpop.f32.mrb[0].mxu0
      %v2558 = vadd.f32 %v2399, %v2557
      %v2559 = vpop.f32.mrb[0].mxu0
      %v2560 = vadd.f32 %v2399, %v2559
      %2561 = vdwg.mxu0
      %v2562 = vmax.f32 %v2484, 0.0
      %v2563 = vmax.f32 %v2486, 0.0
      %v2564 = vmax.f32 %v2488, 0.0
      %v2565 = vmax.f32 %v2490, 0.0
      %v2566 = vmax.f32 %v2494, 0.0
      %v2567 = vmax.f32 %v2496, 0.0
      %v2568 = vmax.f32 %v2498, 0.0
      %v2569 = vmax.f32 %v2500, 0.0
      %v2570 = vmax.f32 %v2504, 0.0
      %v2571 = vmax.f32 %v2506, 0.0
      %v2572 = vmax.f32 %v2508, 0.0
      %v2573 = vmax.f32 %v2510, 0.0
      %v2574 = vmax.f32 %v2514, 0.0
      %v2575 = vmax.f32 %v2516, 0.0
      %v2576 = vmax.f32 %v2518, 0.0
      %v2577 = vmax.f32 %v2520, 0.0
      %v2578 = vmax.f32 %v2524, 0.0
      %v2579 = vmax.f32 %v2526, 0.0
      %v2580 = vmax.f32 %v2528, 0.0
      %v2581 = vmax.f32 %v2530, 0.0
      %v2582 = vmax.f32 %v2534, 0.0
      %v2583 = vmax.f32 %v2536, 0.0
      %v2584 = vmax.f32 %v2538, 0.0
      %v2585 = vmax.f32 %v2540, 0.0
      %v2586 = vmax.f32 %v2544, 0.0
      %v2587 = vmax.f32 %v2546, 0.0
      %v2588 = vmax.f32 %v2548, 0.0
      %v2589 = vmax.f32 %v2550, 0.0
      %v2590 = vmax.f32 %v2554, 0.0
      %v2591 = vmax.f32 %v2556, 0.0
      %v2592 = vmax.f32 %v2558, 0.0
      %v2593 = vmax.f32 %v2560, 0.0
      %v2594 = vpack.c.bf16 %v2564, %v2562
      %v2595 = vpack.c.bf16 %v2565, %v2563
      %v2596 = vpack.c.bf16 %v2568, %v2566
      %v2597 = vpack.c.bf16 %v2569, %v2567
      %v2598 = vpack.c.bf16 %v2572, %v2570
      %v2599 = vpack.c.bf16 %v2573, %v2571
      %v2600 = vpack.c.bf16 %v2576, %v2574
      %v2601 = vpack.c.bf16 %v2577, %v2575
      %v2602 = vpack.c.bf16 %v2580, %v2578
      %v2603 = vpack.c.bf16 %v2581, %v2579
      %v2604 = vpack.c.bf16 %v2584, %v2582
      %v2605 = vpack.c.bf16 %v2585, %v2583
      %v2606 = vpack.c.bf16 %v2588, %v2586
      %v2607 = vpack.c.bf16 %v2589, %v2587
      %v2608 = vpack.c.bf16 %v2592, %v2590
      %v2609 = vpack.c.bf16 %v2593, %v2591
      %2610 = vmatprep.subr.bf16.mxu0 %v2595
      %2611 = vmatpush1.bf16.msra.mxu0 %v2594
      %2612 = vmatprep.subr.bf16.mxu0 %v2597
      %2613 = vmatpush1.bf16.msra.mxu0 %v2596
      %2614 = vmatprep.subr.bf16.mxu0 %v2599
      %2615 = vmatpush1.bf16.msra.mxu0 %v2598
      %2616 = vmatprep.subr.bf16.mxu0 %v2601
      %2617 = vmatpush1.bf16.msra.mxu0 %v2600
      %2618 = vmatprep.subr.bf16.mxu0 %v2603
      %2619 = vmatpush1.bf16.msra.mxu0 %v2602
      %2620 = vmatprep.subr.bf16.mxu0 %v2605
      %2621 = vmatpush1.bf16.msra.mxu0 %v2604
      %2622 = vmatprep.subr.bf16.mxu0 %v2607
      %2623 = vmatpush1.bf16.msra.mxu0 %v2606
      %2624 = vmatprep.subr.bf16.mxu0 %v2609
      %2625 = vmatpush1.bf16.msra.mxu0 %v2608
      %2626 = vmatprep.subr.bf16.mxu0 0
      %2627 = vmatpush1.bf16.msra.mxu0 0
      %2628 = vmatprep.subr.bf16.mxu0 0
      %2629 = vmatpush1.bf16.msra.mxu0 0
      %2630 = vmatprep.subr.bf16.mxu0 0
      %2631 = vmatpush1.bf16.msra.mxu0 0
      %2632 = vmatprep.subr.bf16.mxu0 0
      %2633 = vmatpush1.bf16.msra.mxu0 0
      %2634 = vmatprep.subr.bf16.mxu0 0
      %2635 = vmatpush1.bf16.msra.mxu0 0
      %2636 = vmatprep.subr.bf16.mxu0 0
      %2637 = vmatpush1.bf16.msra.mxu0 0
      %2638 = vmatprep.subr.bf16.mxu0 0
      %2639 = vmatpush1.bf16.msra.mxu0 0
      %2640 = vmatprep.subr.bf16.mxu0 0
      %2641 = vmatpush1.bf16.msra.mxu0 0
      %2642 = vmatprep.mubr.bf16.mxu0 0
      %2643 = vmatmul.mubr.bf16.gmra.mrb[0].mxu0 %v1472
      %v2644 = vpop.f32.mrb[0].mxu0
      %v2645 = vadd.f32 0.0, %v2644
      %v2646 = vpop.f32.mrb[0].mxu0
      %v2647 = vadd.f32 0.0, %v2646
      %v2648 = vpop.f32.mrb[0].mxu0
      %v2649 = vpop.f32.mrb[0].mxu0
      %2650 = vdwg.mxu0
      %2651 = vmatprep.subr.bf16.mxu0 %v2595
      %2652 = vmatpush1.bf16.msra.mxu0 %v2594
      %2653 = vmatprep.subr.bf16.mxu0 %v2597
      %2654 = vmatpush1.bf16.msra.mxu0 %v2596
      %2655 = vmatprep.subr.bf16.mxu0 %v2599
      %2656 = vmatpush1.bf16.msra.mxu0 %v2598
      %2657 = vmatprep.subr.bf16.mxu0 %v2601
      %2658 = vmatpush1.bf16.msra.mxu0 %v2600
      %2659 = vmatprep.subr.bf16.mxu0 %v2603
      %2660 = vmatpush1.bf16.msra.mxu0 %v2602
      %2661 = vmatprep.subr.bf16.mxu0 %v2605
      %2662 = vmatpush1.bf16.msra.mxu0 %v2604
      %2663 = vmatprep.subr.bf16.mxu0 %v2607
      %2664 = vmatpush1.bf16.msra.mxu0 %v2606
      %2665 = vmatprep.subr.bf16.mxu0 %v2609
      %2666 = vmatpush1.bf16.msra.mxu0 %v2608
      %2667 = vmatprep.subr.bf16.mxu0 0
      %2668 = vmatpush1.bf16.msra.mxu0 0
      %2669 = vmatprep.subr.bf16.mxu0 0
      %2670 = vmatpush1.bf16.msra.mxu0 0
      %2671 = vmatprep.subr.bf16.mxu0 0
      %2672 = vmatpush1.bf16.msra.mxu0 0
      %2673 = vmatprep.subr.bf16.mxu0 0
      %2674 = vmatpush1.bf16.msra.mxu0 0
      %2675 = vmatprep.subr.bf16.mxu0 0
      %2676 = vmatpush1.bf16.msra.mxu0 0
      %2677 = vmatprep.subr.bf16.mxu0 0
      %2678 = vmatpush1.bf16.msra.mxu0 0
      %2679 = vmatprep.subr.bf16.mxu0 0
      %2680 = vmatpush1.bf16.msra.mxu0 0
      %2681 = vmatprep.subr.bf16.mxu0 0
      %2682 = vmatpush1.bf16.msra.mxu0 0
      %2683 = vmatprep.mubr.bf16.mxu0 0
      %2684 = vmatmul.mubr.bf16.gmra.mrb[0].mxu0 %v1471
      %v2685 = vpop.f32.mrb[0].mxu0
      %v2686 = vadd.f32 %v1839, %v2685
      %v2687 = vpop.f32.mrb[0].mxu0
      %v2688 = vadd.f32 %v1839, %v2687
      %v2689 = vpop.f32.mrb[0].mxu0
      %v2690 = vpop.f32.mrb[0].mxu0
      %2691 = vdwg.mxu0
      %s2692 = scalar_lea.vmem %s7, 192
      %v2693 = vld [vmem:[%s2692] sm:$0xf]
      %v2694 = vld [vmem:[%s2692 + $0x4] sm:$0xf]
      %v2695 = vld [vmem:[%s2692 + $0x8] sm:$0xf]
      %v2696 = vld [vmem:[%s2692 + $0xc] sm:$0xf]
      %v2697 = vld [vmem:[%s2692 + $0x10] sm:$0xf]
      %v2698 = vld [vmem:[%s2692 + $0x14] sm:$0xf]
      %v2699 = vld [vmem:[%s2692 + $0x18] sm:$0xf]
      %v2700 = vld [vmem:[%s2692 + $0x1c] sm:$0xf]
      %v2701 = vld [vmem:[%s2692 + $0x20] sm:$0xf]
      %v2702 = vld [vmem:[%s2692 + $0x24] sm:$0xf]
      %v2703 = vld [vmem:[%s2692 + $0x28] sm:$0xf]
      %v2704 = vld [vmem:[%s2692 + $0x2c] sm:$0xf]
      %v2705 = vld [vmem:[%s2692 + $0x30] sm:$0xf]
      %v2706 = vld [vmem:[%s2692 + $0x34] sm:$0xf]
      %v2707 = vld [vmem:[%s2692 + $0x38] sm:$0xf]
      %v2708 = vld [vmem:[%s2692 + $0x3c] sm:$0xf]
      %s2709 = scalar_lea.vmem %s428, 384
      %v2710 = vld [vmem:[%s2709] sm:$0xff]
      %v2711 = vld [vmem:[%s2709 + $0x8] sm:$0xff]
      %v2712 = vld [vmem:[%s2709 + $0x10] sm:$0xff]
      %v2713 = vld [vmem:[%s2709 + $0x18] sm:$0xff]
      %v2714 = vld [vmem:[%s2709 + $0x20] sm:$0xff]
      %v2715 = vld [vmem:[%s2709 + $0x28] sm:$0xff]
      %v2716 = vld [vmem:[%s2709 + $0x30] sm:$0xff]
      %v2717 = vld [vmem:[%s2709 + $0x38] sm:$0xff]
      %v2718 = vld [vmem:[%s2709 + $0x40] sm:$0xff]
      %v2719 = vld [vmem:[%s2709 + $0x48] sm:$0xff]
      %v2720 = vld [vmem:[%s2709 + $0x50] sm:$0xff]
      %v2721 = vld [vmem:[%s2709 + $0x58] sm:$0xff]
      %v2722 = vld [vmem:[%s2709 + $0x60] sm:$0xff]
      %v2723 = vld [vmem:[%s2709 + $0x68] sm:$0xff]
      %v2724 = vld [vmem:[%s2709 + $0x70] sm:$0xff]
      %v2725 = vld [vmem:[%s2709 + $0x78] sm:$0xff]
      %2727 = vset.pattern.permute.xlu0 0
      %2728 = vperm.xlu0 %2727, %v2710
      %v2729 = vpop.permute.xlu0 %2728
      %2732 = vset.pattern.permute.xlu0 0
      %2733 = vperm.xlu0 %2732, %v2711
      %v2734 = vpop.permute.xlu0 %2733
      %2737 = vset.pattern.permute.xlu0 0
      %2738 = vperm.xlu0 %2737, %v2712
      %v2739 = vpop.permute.xlu0 %2738
      %2742 = vset.pattern.permute.xlu0 0
      %2743 = vperm.xlu0 %2742, %v2713
      %v2744 = vpop.permute.xlu0 %2743
      %2747 = vset.pattern.permute.xlu0 0
      %2748 = vperm.xlu0 %2747, %v2714
      %v2749 = vpop.permute.xlu0 %2748
      %2752 = vset.pattern.permute.xlu0 0
      %2753 = vperm.xlu0 %2752, %v2715
      %v2754 = vpop.permute.xlu0 %2753
      %2757 = vset.pattern.permute.xlu0 0
      %2758 = vperm.xlu0 %2757, %v2716
      %v2759 = vpop.permute.xlu0 %2758
      %2762 = vset.pattern.permute.xlu0 0
      %2763 = vperm.xlu0 %2762, %v2717
      %v2764 = vpop.permute.xlu0 %2763
      %2767 = vset.pattern.permute.xlu0 0
      %2768 = vperm.xlu0 %2767, %v2718
      %v2769 = vpop.permute.xlu0 %2768
      %2772 = vset.pattern.permute.xlu0 0
      %2773 = vperm.xlu0 %2772, %v2719
      %v2774 = vpop.permute.xlu0 %2773
      %2777 = vset.pattern.permute.xlu0 0
      %2778 = vperm.xlu0 %2777, %v2720
      %v2779 = vpop.permute.xlu0 %2778
      %2782 = vset.pattern.permute.xlu0 0
      %2783 = vperm.xlu0 %2782, %v2721
      %v2784 = vpop.permute.xlu0 %2783
      %2787 = vset.pattern.permute.xlu0 0
      %2788 = vperm.xlu0 %2787, %v2722
      %v2789 = vpop.permute.xlu0 %2788
      %2792 = vset.pattern.permute.xlu0 0
      %2793 = vperm.xlu0 %2792, %v2723
      %v2794 = vpop.permute.xlu0 %2793
      %2797 = vset.pattern.permute.xlu0 0
      %2798 = vperm.xlu0 %2797, %v2724
      %v2799 = vpop.permute.xlu0 %2798
      %2802 = vset.pattern.permute.xlu0 0
      %2803 = vperm.xlu0 %2802, %v2725
      %v2804 = vpop.permute.xlu0 %2803
      %v2822 = vunpack.c.l.b16 %v2693
      %v2823 = vunpack.c.l.b16 %v2694
      %v2824 = vunpack.c.l.b16 %v2695
      %v2825 = vunpack.c.l.b16 %v2696
      %v2826 = vunpack.c.l.b16 %v2697
      %v2827 = vunpack.c.l.b16 %v2698
      %v2828 = vunpack.c.l.b16 %v2699
      %v2829 = vunpack.c.l.b16 %v2700
      %v2830 = vunpack.c.l.b16 %v2701
      %v2831 = vunpack.c.l.b16 %v2702
      %v2832 = vunpack.c.l.b16 %v2703
      %v2833 = vunpack.c.l.b16 %v2704
      %v2834 = vunpack.c.l.b16 %v2705
      %v2835 = vunpack.c.l.b16 %v2706
      %v2836 = vunpack.c.l.b16 %v2707
      %v2837 = vunpack.c.l.b16 %v2708
      %v2838 = vpack.c.b16 %v2823, %v2822
      %v2839 = vpack.c.b16 %v2825, %v2824
      %v2840 = vpack.c.b16 %v2827, %v2826
      %v2841 = vpack.c.b16 %v2829, %v2828
      %v2842 = vpack.c.b16 %v2831, %v2830
      %v2843 = vpack.c.b16 %v2833, %v2832
      %v2844 = vpack.c.b16 %v2835, %v2834
      %v2845 = vpack.c.b16 %v2837, %v2836
      %2854 = vmatprep.subr.bf16.mxu0 %v1456
      %2855 = vmatpush1.bf16.msra.mxu0 %v1455
      %2856 = vmatprep.subr.bf16.mxu0 %v1458
      %2857 = vmatpush1.bf16.msra.mxu0 %v1457
      %2858 = vmatprep.subr.bf16.mxu0 %v1460
      %2859 = vmatpush1.bf16.msra.mxu0 %v1459
      %2860 = vmatprep.subr.bf16.mxu0 %v1462
      %2861 = vmatpush1.bf16.msra.mxu0 %v1461
      %2862 = vmatprep.subr.bf16.mxu0 %v1464
      %2863 = vmatpush1.bf16.msra.mxu0 %v1463
      %2864 = vmatprep.subr.bf16.mxu0 %v1466
      %2865 = vmatpush1.bf16.msra.mxu0 %v1465
      %2866 = vmatprep.subr.bf16.mxu0 %v1468
      %2867 = vmatpush1.bf16.msra.mxu0 %v1467
      %2868 = vmatprep.subr.bf16.mxu0 %v1470
      %2869 = vmatpush1.bf16.msra.mxu0 %v1469
      %2870 = vmatprep.subr.bf16.mxu0 0
      %2871 = vmatpush1.bf16.msra.mxu0 0
      %2872 = vmatprep.subr.bf16.mxu0 0
      %2873 = vmatpush1.bf16.msra.mxu0 0
      %2874 = vmatprep.subr.bf16.mxu0 0
      %2875 = vmatpush1.bf16.msra.mxu0 0
      %2876 = vmatprep.subr.bf16.mxu0 0
      %2877 = vmatpush1.bf16.msra.mxu0 0
      %2878 = vmatprep.subr.bf16.mxu0 0
      %2879 = vmatpush1.bf16.msra.mxu0 0
      %2880 = vmatprep.subr.bf16.mxu0 0
      %2881 = vmatpush1.bf16.msra.mxu0 0
      %2882 = vmatprep.subr.bf16.mxu0 0
      %2883 = vmatpush1.bf16.msra.mxu0 0
      %2884 = vmatprep.subr.bf16.mxu0 0
      %2885 = vmatpush1.bf16.msra.mxu0 0
      %2886 = vmatprep.mubr.bf16.mxu0 0
      %2887 = vmatmul.mubr.bf16.gmra.mrb[0].mxu0 %v2838
      %v2888 = vpop.f32.mrb[0].mxu0
      %v2889 = vadd.f32 %v2729, %v2888
      %v2890 = vpop.f32.mrb[0].mxu0
      %v2891 = vadd.f32 %v2729, %v2890
      %v2892 = vpop.f32.mrb[0].mxu0
      %v2893 = vadd.f32 %v2734, %v2892
      %v2894 = vpop.f32.mrb[0].mxu0
      %v2895 = vadd.f32 %v2734, %v2894
      %2896 = vmatprep.mubr.bf16.mxu0 0
      %2897 = vmatmul.mubr.bf16.gmra.mrb[0].mxu0 %v2839
      %v2898 = vpop.f32.mrb[0].mxu0
      %v2899 = vadd.f32 %v2739, %v2898
      %v2900 = vpop.f32.mrb[0].mxu0
      %v2901 = vadd.f32 %v2739, %v2900
      %v2902 = vpop.f32.mrb[0].mxu0
      %v2903 = vadd.f32 %v2744, %v2902
      %v2904 = vpop.f32.mrb[0].mxu0
      %v2905 = vadd.f32 %v2744, %v2904
      %2906 = vmatprep.mubr.bf16.mxu0 0
      %2907 = vmatmul.mubr.bf16.gmra.mrb[0].mxu0 %v2840
      %v2908 = vpop.f32.mrb[0].mxu0
      %v2909 = vadd.f32 %v2749, %v2908
      %v2910 = vpop.f32.mrb[0].mxu0
      %v2911 = vadd.f32 %v2749, %v2910
      %v2912 = vpop.f32.mrb[0].mxu0
      %v2913 = vadd.f32 %v2754, %v2912
      %v2914 = vpop.f32.mrb[0].mxu0
      %v2915 = vadd.f32 %v2754, %v2914
      %2916 = vmatprep.mubr.bf16.mxu0 0
      %2917 = vmatmul.mubr.bf16.gmra.mrb[0].mxu0 %v2841
      %v2918 = vpop.f32.mrb[0].mxu0
      %v2919 = vadd.f32 %v2759, %v2918
      %v2920 = vpop.f32.mrb[0].mxu0
      %v2921 = vadd.f32 %v2759, %v2920
      %v2922 = vpop.f32.mrb[0].mxu0
      %v2923 = vadd.f32 %v2764, %v2922
      %v2924 = vpop.f32.mrb[0].mxu0
      %v2925 = vadd.f32 %v2764, %v2924
      %2926 = vmatprep.mubr.bf16.mxu0 0
      %2927 = vmatmul.mubr.bf16.gmra.mrb[0].mxu0 %v2842
      %v2928 = vpop.f32.mrb[0].mxu0
      %v2929 = vadd.f32 %v2769, %v2928
      %v2930 = vpop.f32.mrb[0].mxu0
      %v2931 = vadd.f32 %v2769, %v2930
      %v2932 = vpop.f32.mrb[0].mxu0
      %v2933 = vadd.f32 %v2774, %v2932
      %v2934 = vpop.f32.mrb[0].mxu0
      %v2935 = vadd.f32 %v2774, %v2934
      %2936 = vmatprep.mubr.bf16.mxu0 0
      %2937 = vmatmul.mubr.bf16.gmra.mrb[0].mxu0 %v2843
      %v2938 = vpop.f32.mrb[0].mxu0
      %v2939 = vadd.f32 %v2779, %v2938
      %v2940 = vpop.f32.mrb[0].mxu0
      %v2941 = vadd.f32 %v2779, %v2940
      %v2942 = vpop.f32.mrb[0].mxu0
      %v2943 = vadd.f32 %v2784, %v2942
      %v2944 = vpop.f32.mrb[0].mxu0
      %v2945 = vadd.f32 %v2784, %v2944
      %2946 = vmatprep.mubr.bf16.mxu0 0
      %2947 = vmatmul.mubr.bf16.gmra.mrb[0].mxu0 %v2844
      %v2948 = vpop.f32.mrb[0].mxu0
      %v2949 = vadd.f32 %v2789, %v2948
      %v2950 = vpop.f32.mrb[0].mxu0
      %v2951 = vadd.f32 %v2789, %v2950
      %v2952 = vpop.f32.mrb[0].mxu0
      %v2953 = vadd.f32 %v2794, %v2952
      %v2954 = vpop.f32.mrb[0].mxu0
      %v2955 = vadd.f32 %v2794, %v2954
      %2956 = vmatprep.mubr.bf16.mxu0 0
      %2957 = vmatmul.mubr.bf16.gmra.mrb[0].mxu0 %v2845
      %v2958 = vpop.f32.mrb[0].mxu0
      %v2959 = vadd.f32 %v2799, %v2958
      %v2960 = vpop.f32.mrb[0].mxu0
      %v2961 = vadd.f32 %v2799, %v2960
      %v2962 = vpop.f32.mrb[0].mxu0
      %v2963 = vadd.f32 %v2804, %v2962
      %v2964 = vpop.f32.mrb[0].mxu0
      %v2965 = vadd.f32 %v2804, %v2964
      %2966 = vdwg.mxu0
      %v2967 = vmax.f32 %v2889, 0.0
      %v2968 = vmax.f32 %v2891, 0.0
      %v2969 = vmax.f32 %v2893, 0.0
      %v2970 = vmax.f32 %v2895, 0.0
      %v2971 = vmax.f32 %v2899, 0.0
      %v2972 = vmax.f32 %v2901, 0.0
      %v2973 = vmax.f32 %v2903, 0.0
      %v2974 = vmax.f32 %v2905, 0.0
      %v2975 = vmax.f32 %v2909, 0.0
      %v2976 = vmax.f32 %v2911, 0.0
      %v2977 = vmax.f32 %v2913, 0.0
      %v2978 = vmax.f32 %v2915, 0.0
      %v2979 = vmax.f32 %v2919, 0.0
      %v2980 = vmax.f32 %v2921, 0.0
      %v2981 = vmax.f32 %v2923, 0.0
      %v2982 = vmax.f32 %v2925, 0.0
      %v2983 = vmax.f32 %v2929, 0.0
      %v2984 = vmax.f32 %v2931, 0.0
      %v2985 = vmax.f32 %v2933, 0.0
      %v2986 = vmax.f32 %v2935, 0.0
      %v2987 = vmax.f32 %v2939, 0.0
      %v2988 = vmax.f32 %v2941, 0.0
      %v2989 = vmax.f32 %v2943, 0.0
      %v2990 = vmax.f32 %v2945, 0.0
      %v2991 = vmax.f32 %v2949, 0.0
      %v2992 = vmax.f32 %v2951, 0.0
      %v2993 = vmax.f32 %v2953, 0.0
      %v2994 = vmax.f32 %v2955, 0.0
      %v2995 = vmax.f32 %v2959, 0.0
      %v2996 = vmax.f32 %v2961, 0.0
      %v2997 = vmax.f32 %v2963, 0.0
      %v2998 = vmax.f32 %v2965, 0.0
      %v2999 = vpack.c.bf16 %v2969, %v2967
      %v3000 = vpack.c.bf16 %v2970, %v2968
      %v3001 = vpack.c.bf16 %v2973, %v2971
      %v3002 = vpack.c.bf16 %v2974, %v2972
      %v3003 = vpack.c.bf16 %v2977, %v2975
      %v3004 = vpack.c.bf16 %v2978, %v2976
      %v3005 = vpack.c.bf16 %v2981, %v2979
      %v3006 = vpack.c.bf16 %v2982, %v2980
      %v3007 = vpack.c.bf16 %v2985, %v2983
      %v3008 = vpack.c.bf16 %v2986, %v2984
      %v3009 = vpack.c.bf16 %v2989, %v2987
      %v3010 = vpack.c.bf16 %v2990, %v2988
      %v3011 = vpack.c.bf16 %v2993, %v2991
      %v3012 = vpack.c.bf16 %v2994, %v2992
      %v3013 = vpack.c.bf16 %v2997, %v2995
      %v3014 = vpack.c.bf16 %v2998, %v2996
      %3015 = vmatprep.subr.bf16.mxu0 %v3000
      %3016 = vmatpush1.bf16.msra.mxu0 %v2999
      %3017 = vmatprep.subr.bf16.mxu0 %v3002
      %3018 = vmatpush1.bf16.msra.mxu0 %v3001
      %3019 = vmatprep.subr.bf16.mxu0 %v3004
      %3020 = vmatpush1.bf16.msra.mxu0 %v3003
      %3021 = vmatprep.subr.bf16.mxu0 %v3006
      %3022 = vmatpush1.bf16.msra.mxu0 %v3005
      %3023 = vmatprep.subr.bf16.mxu0 %v3008
      %3024 = vmatpush1.bf16.msra.mxu0 %v3007
      %3025 = vmatprep.subr.bf16.mxu0 %v3010
      %3026 = vmatpush1.bf16.msra.mxu0 %v3009
      %3027 = vmatprep.subr.bf16.mxu0 %v3012
      %3028 = vmatpush1.bf16.msra.mxu0 %v3011
      %3029 = vmatprep.subr.bf16.mxu0 %v3014
      %3030 = vmatpush1.bf16.msra.mxu0 %v3013
      %3031 = vmatprep.subr.bf16.mxu0 0
      %3032 = vmatpush1.bf16.msra.mxu0 0
      %3033 = vmatprep.subr.bf16.mxu0 0
      %3034 = vmatpush1.bf16.msra.mxu0 0
      %3035 = vmatprep.subr.bf16.mxu0 0
      %3036 = vmatpush1.bf16.msra.mxu0 0
      %3037 = vmatprep.subr.bf16.mxu0 0
      %3038 = vmatpush1.bf16.msra.mxu0 0
      %3039 = vmatprep.subr.bf16.mxu0 0
      %3040 = vmatpush1.bf16.msra.mxu0 0
      %3041 = vmatprep.subr.bf16.mxu0 0
      %3042 = vmatpush1.bf16.msra.mxu0 0
      %3043 = vmatprep.subr.bf16.mxu0 0
      %3044 = vmatpush1.bf16.msra.mxu0 0
      %3045 = vmatprep.subr.bf16.mxu0 0
      %3046 = vmatpush1.bf16.msra.mxu0 0
      %3047 = vmatprep.mubr.bf16.mxu0 0
      %3048 = vmatmul.mubr.bf16.gmra.mrb[0].mxu0 %v1472
      %v3049 = vpop.f32.mrb[0].mxu0
      %v3050 = vadd.f32 0.0, %v3049
      %v3051 = vpop.f32.mrb[0].mxu0
      %v3052 = vadd.f32 0.0, %v3051
      %v3053 = vpop.f32.mrb[0].mxu0
      %v3054 = vpop.f32.mrb[0].mxu0
      %3055 = vdwg.mxu0
      %3056 = vmatprep.subr.bf16.mxu0 %v3000
      %3057 = vmatpush1.bf16.msra.mxu0 %v2999
      %3058 = vmatprep.subr.bf16.mxu0 %v3002
      %3059 = vmatpush1.bf16.msra.mxu0 %v3001
      %3060 = vmatprep.subr.bf16.mxu0 %v3004
      %3061 = vmatpush1.bf16.msra.mxu0 %v3003
      %3062 = vmatprep.subr.bf16.mxu0 %v3006
      %3063 = vmatpush1.bf16.msra.mxu0 %v3005
      %3064 = vmatprep.subr.bf16.mxu0 %v3008
      %3065 = vmatpush1.bf16.msra.mxu0 %v3007
      %3066 = vmatprep.subr.bf16.mxu0 %v3010
      %3067 = vmatpush1.bf16.msra.mxu0 %v3009
      %3068 = vmatprep.subr.bf16.mxu0 %v3012
      %3069 = vmatpush1.bf16.msra.mxu0 %v3011
      %3070 = vmatprep.subr.bf16.mxu0 %v3014
      %3071 = vmatpush1.bf16.msra.mxu0 %v3013
      %3072 = vmatprep.subr.bf16.mxu0 0
      %3073 = vmatpush1.bf16.msra.mxu0 0
      %3074 = vmatprep.subr.bf16.mxu0 0
      %3075 = vmatpush1.bf16.msra.mxu0 0
      %3076 = vmatprep.subr.bf16.mxu0 0
      %3077 = vmatpush1.bf16.msra.mxu0 0
      %3078 = vmatprep.subr.bf16.mxu0 0
      %3079 = vmatpush1.bf16.msra.mxu0 0
      %3080 = vmatprep.subr.bf16.mxu0 0
      %3081 = vmatpush1.bf16.msra.mxu0 0
      %3082 = vmatprep.subr.bf16.mxu0 0
      %3083 = vmatpush1.bf16.msra.mxu0 0
      %3084 = vmatprep.subr.bf16.mxu0 0
      %3085 = vmatpush1.bf16.msra.mxu0 0
      %3086 = vmatprep.subr.bf16.mxu0 0
      %3087 = vmatpush1.bf16.msra.mxu0 0
      %3088 = vmatprep.mubr.bf16.mxu0 0
      %3089 = vmatmul.mubr.bf16.gmra.mrb[0].mxu0 %v1471
      %v3090 = vpop.f32.mrb[0].mxu0
      %v3091 = vadd.f32 %v1839, %v3090
      %v3092 = vpop.f32.mrb[0].mxu0
      %v3093 = vadd.f32 %v1839, %v3092
      %v3094 = vpop.f32.mrb[0].mxu0
      %v3095 = vpop.f32.mrb[0].mxu0
      %3096 = vdwg.mxu0
      %s3097 = scalar_lea.vmem %s7, 256
      %v3098 = vld [vmem:[%s3097] sm:$0xf]
      %v3099 = vld [vmem:[%s3097 + $0x4] sm:$0xf]
      %v3100 = vld [vmem:[%s3097 + $0x8] sm:$0xf]
      %v3101 = vld [vmem:[%s3097 + $0xc] sm:$0xf]
      %v3102 = vld [vmem:[%s3097 + $0x10] sm:$0xf]
      %v3103 = vld [vmem:[%s3097 + $0x14] sm:$0xf]
      %v3104 = vld [vmem:[%s3097 + $0x18] sm:$0xf]
      %v3105 = vld [vmem:[%s3097 + $0x1c] sm:$0xf]
      %v3106 = vld [vmem:[%s3097 + $0x20] sm:$0xf]
      %v3107 = vld [vmem:[%s3097 + $0x24] sm:$0xf]
      %v3108 = vld [vmem:[%s3097 + $0x28] sm:$0xf]
      %v3109 = vld [vmem:[%s3097 + $0x2c] sm:$0xf]
      %v3110 = vld [vmem:[%s3097 + $0x30] sm:$0xf]
      %v3111 = vld [vmem:[%s3097 + $0x34] sm:$0xf]
      %v3112 = vld [vmem:[%s3097 + $0x38] sm:$0xf]
      %v3113 = vld [vmem:[%s3097 + $0x3c] sm:$0xf]
      %s3114 = scalar_lea.vmem %s428, 512
      %v3115 = vld [vmem:[%s3114] sm:$0xff]
      %v3116 = vld [vmem:[%s3114 + $0x8] sm:$0xff]
      %v3117 = vld [vmem:[%s3114 + $0x10] sm:$0xff]
      %v3118 = vld [vmem:[%s3114 + $0x18] sm:$0xff]
      %v3119 = vld [vmem:[%s3114 + $0x20] sm:$0xff]
      %v3120 = vld [vmem:[%s3114 + $0x28] sm:$0xff]
      %v3121 = vld [vmem:[%s3114 + $0x30] sm:$0xff]
      %v3122 = vld [vmem:[%s3114 + $0x38] sm:$0xff]
      %v3123 = vld [vmem:[%s3114 + $0x40] sm:$0xff]
      %v3124 = vld [vmem:[%s3114 + $0x48] sm:$0xff]
      %v3125 = vld [vmem:[%s3114 + $0x50] sm:$0xff]
      %v3126 = vld [vmem:[%s3114 + $0x58] sm:$0xff]
      %v3127 = vld [vmem:[%s3114 + $0x60] sm:$0xff]
      %v3128 = vld [vmem:[%s3114 + $0x68] sm:$0xff]
      %v3129 = vld [vmem:[%s3114 + $0x70] sm:$0xff]
      %v3130 = vld [vmem:[%s3114 + $0x78] sm:$0xff]
      %3132 = vset.pattern.permute.xlu0 0
      %3133 = vperm.xlu0 %3132, %v3115
      %v3134 = vpop.permute.xlu0 %3133
      %3137 = vset.pattern.permute.xlu0 0
      %3138 = vperm.xlu0 %3137, %v3116
      %v3139 = vpop.permute.xlu0 %3138
      %3142 = vset.pattern.permute.xlu0 0
      %3143 = vperm.xlu0 %3142, %v3117
      %v3144 = vpop.permute.xlu0 %3143
      %3147 = vset.pattern.permute.xlu0 0
      %3148 = vperm.xlu0 %3147, %v3118
      %v3149 = vpop.permute.xlu0 %3148
      %3152 = vset.pattern.permute.xlu0 0
      %3153 = vperm.xlu0 %3152, %v3119
      %v3154 = vpop.permute.xlu0 %3153
      %3157 = vset.pattern.permute.xlu0 0
      %3158 = vperm.xlu0 %3157, %v3120
      %v3159 = vpop.permute.xlu0 %3158
      %3162 = vset.pattern.permute.xlu0 0
      %3163 = vperm.xlu0 %3162, %v3121
      %v3164 = vpop.permute.xlu0 %3163
      %3167 = vset.pattern.permute.xlu0 0
      %3168 = vperm.xlu0 %3167, %v3122
      %v3169 = vpop.permute.xlu0 %3168
      %3172 = vset.pattern.permute.xlu0 0
      %3173 = vperm.xlu0 %3172, %v3123
      %v3174 = vpop.permute.xlu0 %3173
      %3177 = vset.pattern.permute.xlu0 0
      %3178 = vperm.xlu0 %3177, %v3124
      %v3179 = vpop.permute.xlu0 %3178
      %3182 = vset.pattern.permute.xlu0 0
      %3183 = vperm.xlu0 %3182, %v3125
      %v3184 = vpop.permute.xlu0 %3183
      %3187 = vset.pattern.permute.xlu0 0
      %3188 = vperm.xlu0 %3187, %v3126
      %v3189 = vpop.permute.xlu0 %3188
      %3192 = vset.pattern.permute.xlu0 0
      %3193 = vperm.xlu0 %3192, %v3127
      %v3194 = vpop.permute.xlu0 %3193
      %3197 = vset.pattern.permute.xlu0 0
      %3198 = vperm.xlu0 %3197, %v3128
      %v3199 = vpop.permute.xlu0 %3198
      %3202 = vset.pattern.permute.xlu0 0
      %3203 = vperm.xlu0 %3202, %v3129
      %v3204 = vpop.permute.xlu0 %3203
      %3207 = vset.pattern.permute.xlu0 0
      %3208 = vperm.xlu0 %3207, %v3130
      %v3209 = vpop.permute.xlu0 %3208
      %v3227 = vunpack.c.l.b16 %v3098
      %v3228 = vunpack.c.l.b16 %v3099
      %v3229 = vunpack.c.l.b16 %v3100
      %v3230 = vunpack.c.l.b16 %v3101
      %v3231 = vunpack.c.l.b16 %v3102
      %v3232 = vunpack.c.l.b16 %v3103
      %v3233 = vunpack.c.l.b16 %v3104
      %v3234 = vunpack.c.l.b16 %v3105
      %v3235 = vunpack.c.l.b16 %v3106
      %v3236 = vunpack.c.l.b16 %v3107
      %v3237 = vunpack.c.l.b16 %v3108
      %v3238 = vunpack.c.l.b16 %v3109
      %v3239 = vunpack.c.l.b16 %v3110
      %v3240 = vunpack.c.l.b16 %v3111
      %v3241 = vunpack.c.l.b16 %v3112
      %v3242 = vunpack.c.l.b16 %v3113
      %v3243 = vpack.c.b16 %v3228, %v3227
      %v3244 = vpack.c.b16 %v3230, %v3229
      %v3245 = vpack.c.b16 %v3232, %v3231
      %v3246 = vpack.c.b16 %v3234, %v3233
      %v3247 = vpack.c.b16 %v3236, %v3235
      %v3248 = vpack.c.b16 %v3238, %v3237
      %v3249 = vpack.c.b16 %v3240, %v3239
      %v3250 = vpack.c.b16 %v3242, %v3241
      %3259 = vmatprep.subr.bf16.mxu0 %v1456
      %3260 = vmatpush1.bf16.msra.mxu0 %v1455
      %3261 = vmatprep.subr.bf16.mxu0 %v1458
      %3262 = vmatpush1.bf16.msra.mxu0 %v1457
      %3263 = vmatprep.subr.bf16.mxu0 %v1460
      %3264 = vmatpush1.bf16.msra.mxu0 %v1459
      %3265 = vmatprep.subr.bf16.mxu0 %v1462
      %3266 = vmatpush1.bf16.msra.mxu0 %v1461
      %3267 = vmatprep.subr.bf16.mxu0 %v1464
      %3268 = vmatpush1.bf16.msra.mxu0 %v1463
      %3269 = vmatprep.subr.bf16.mxu0 %v1466
      %3270 = vmatpush1.bf16.msra.mxu0 %v1465
      %3271 = vmatprep.subr.bf16.mxu0 %v1468
      %3272 = vmatpush1.bf16.msra.mxu0 %v1467
      %3273 = vmatprep.subr.bf16.mxu0 %v1470
      %3274 = vmatpush1.bf16.msra.mxu0 %v1469
      %3275 = vmatprep.subr.bf16.mxu0 0
      %3276 = vmatpush1.bf16.msra.mxu0 0
      %3277 = vmatprep.subr.bf16.mxu0 0
      %3278 = vmatpush1.bf16.msra.mxu0 0
      %3279 = vmatprep.subr.bf16.mxu0 0
      %3280 = vmatpush1.bf16.msra.mxu0 0
      %3281 = vmatprep.subr.bf16.mxu0 0
      %3282 = vmatpush1.bf16.msra.mxu0 0
      %3283 = vmatprep.subr.bf16.mxu0 0
      %3284 = vmatpush1.bf16.msra.mxu0 0
      %3285 = vmatprep.subr.bf16.mxu0 0
      %3286 = vmatpush1.bf16.msra.mxu0 0
      %3287 = vmatprep.subr.bf16.mxu0 0
      %3288 = vmatpush1.bf16.msra.mxu0 0
      %3289 = vmatprep.subr.bf16.mxu0 0
      %3290 = vmatpush1.bf16.msra.mxu0 0
      %3291 = vmatprep.mubr.bf16.mxu0 0
      %3292 = vmatmul.mubr.bf16.gmra.mrb[0].mxu0 %v3243
      %v3293 = vpop.f32.mrb[0].mxu0
      %v3294 = vadd.f32 %v3134, %v3293
      %v3295 = vpop.f32.mrb[0].mxu0
      %v3296 = vadd.f32 %v3134, %v3295
      %v3297 = vpop.f32.mrb[0].mxu0
      %v3298 = vadd.f32 %v3139, %v3297
      %v3299 = vpop.f32.mrb[0].mxu0
      %v3300 = vadd.f32 %v3139, %v3299
      %3301 = vmatprep.mubr.bf16.mxu0 0
      %3302 = vmatmul.mubr.bf16.gmra.mrb[0].mxu0 %v3244
      %v3303 = vpop.f32.mrb[0].mxu0
      %v3304 = vadd.f32 %v3144, %v3303
      %v3305 = vpop.f32.mrb[0].mxu0
      %v3306 = vadd.f32 %v3144, %v3305
      %v3307 = vpop.f32.mrb[0].mxu0
      %v3308 = vadd.f32 %v3149, %v3307
      %v3309 = vpop.f32.mrb[0].mxu0
      %v3310 = vadd.f32 %v3149, %v3309
      %3311 = vmatprep.mubr.bf16.mxu0 0
      %3312 = vmatmul.mubr.bf16.gmra.mrb[0].mxu0 %v3245
      %v3313 = vpop.f32.mrb[0].mxu0
      %v3314 = vadd.f32 %v3154, %v3313
      %v3315 = vpop.f32.mrb[0].mxu0
      %v3316 = vadd.f32 %v3154, %v3315
      %v3317 = vpop.f32.mrb[0].mxu0
      %v3318 = vadd.f32 %v3159, %v3317
      %v3319 = vpop.f32.mrb[0].mxu0
      %v3320 = vadd.f32 %v3159, %v3319
      %3321 = vmatprep.mubr.bf16.mxu0 0
      %3322 = vmatmul.mubr.bf16.gmra.mrb[0].mxu0 %v3246
      %v3323 = vpop.f32.mrb[0].mxu0
      %v3324 = vadd.f32 %v3164, %v3323
      %v3325 = vpop.f32.mrb[0].mxu0
      %v3326 = vadd.f32 %v3164, %v3325
      %v3327 = vpop.f32.mrb[0].mxu0
      %v3328 = vadd.f32 %v3169, %v3327
      %v3329 = vpop.f32.mrb[0].mxu0
      %v3330 = vadd.f32 %v3169, %v3329
      %3331 = vmatprep.mubr.bf16.mxu0 0
      %3332 = vmatmul.mubr.bf16.gmra.mrb[0].mxu0 %v3247
      %v3333 = vpop.f32.mrb[0].mxu0
      %v3334 = vadd.f32 %v3174, %v3333
      %v3335 = vpop.f32.mrb[0].mxu0
      %v3336 = vadd.f32 %v3174, %v3335
      %v3337 = vpop.f32.mrb[0].mxu0
      %v3338 = vadd.f32 %v3179, %v3337
      %v3339 = vpop.f32.mrb[0].mxu0
      %v3340 = vadd.f32 %v3179, %v3339
      %3341 = vmatprep.mubr.bf16.mxu0 0
      %3342 = vmatmul.mubr.bf16.gmra.mrb[0].mxu0 %v3248
      %v3343 = vpop.f32.mrb[0].mxu0
      %v3344 = vadd.f32 %v3184, %v3343
      %v3345 = vpop.f32.mrb[0].mxu0
      %v3346 = vadd.f32 %v3184, %v3345
      %v3347 = vpop.f32.mrb[0].mxu0
      %v3348 = vadd.f32 %v3189, %v3347
      %v3349 = vpop.f32.mrb[0].mxu0
      %v3350 = vadd.f32 %v3189, %v3349
      %3351 = vmatprep.mubr.bf16.mxu0 0
      %3352 = vmatmul.mubr.bf16.gmra.mrb[0].mxu0 %v3249
      %v3353 = vpop.f32.mrb[0].mxu0
      %v3354 = vadd.f32 %v3194, %v3353
      %v3355 = vpop.f32.mrb[0].mxu0
      %v3356 = vadd.f32 %v3194, %v3355
      %v3357 = vpop.f32.mrb[0].mxu0
      %v3358 = vadd.f32 %v3199, %v3357
      %v3359 = vpop.f32.mrb[0].mxu0
      %v3360 = vadd.f32 %v3199, %v3359
      %3361 = vmatprep.mubr.bf16.mxu0 0
      %3362 = vmatmul.mubr.bf16.gmra.mrb[0].mxu0 %v3250
      %v3363 = vpop.f32.mrb[0].mxu0
      %v3364 = vadd.f32 %v3204, %v3363
      %v3365 = vpop.f32.mrb[0].mxu0
      %v3366 = vadd.f32 %v3204, %v3365
      %v3367 = vpop.f32.mrb[0].mxu0
      %v3368 = vadd.f32 %v3209, %v3367
      %v3369 = vpop.f32.mrb[0].mxu0
      %v3370 = vadd.f32 %v3209, %v3369
      %3371 = vdwg.mxu0
      %v3372 = vmax.f32 %v3294, 0.0
      %v3373 = vmax.f32 %v3296, 0.0
      %v3374 = vmax.f32 %v3298, 0.0
      %v3375 = vmax.f32 %v3300, 0.0
      %v3376 = vmax.f32 %v3304, 0.0
      %v3377 = vmax.f32 %v3306, 0.0
      %v3378 = vmax.f32 %v3308, 0.0
      %v3379 = vmax.f32 %v3310, 0.0
      %v3380 = vmax.f32 %v3314, 0.0
      %v3381 = vmax.f32 %v3316, 0.0
      %v3382 = vmax.f32 %v3318, 0.0
      %v3383 = vmax.f32 %v3320, 0.0
      %v3384 = vmax.f32 %v3324, 0.0
      %v3385 = vmax.f32 %v3326, 0.0
      %v3386 = vmax.f32 %v3328, 0.0
      %v3387 = vmax.f32 %v3330, 0.0
      %v3388 = vmax.f32 %v3334, 0.0
      %v3389 = vmax.f32 %v3336, 0.0
      %v3390 = vmax.f32 %v3338, 0.0
      %v3391 = vmax.f32 %v3340, 0.0
      %v3392 = vmax.f32 %v3344, 0.0
      %v3393 = vmax.f32 %v3346, 0.0
      %v3394 = vmax.f32 %v3348, 0.0
      %v3395 = vmax.f32 %v3350, 0.0
      %v3396 = vmax.f32 %v3354, 0.0
      %v3397 = vmax.f32 %v3356, 0.0
      %v3398 = vmax.f32 %v3358, 0.0
      %v3399 = vmax.f32 %v3360, 0.0
      %v3400 = vmax.f32 %v3364, 0.0
      %v3401 = vmax.f32 %v3366, 0.0
      %v3402 = vmax.f32 %v3368, 0.0
      %v3403 = vmax.f32 %v3370, 0.0
      %v3404 = vpack.c.bf16 %v3374, %v3372
      %v3405 = vpack.c.bf16 %v3375, %v3373
      %v3406 = vpack.c.bf16 %v3378, %v3376
      %v3407 = vpack.c.bf16 %v3379, %v3377
      %v3408 = vpack.c.bf16 %v3382, %v3380
      %v3409 = vpack.c.bf16 %v3383, %v3381
      %v3410 = vpack.c.bf16 %v3386, %v3384
      %v3411 = vpack.c.bf16 %v3387, %v3385
      %v3412 = vpack.c.bf16 %v3390, %v3388
      %v3413 = vpack.c.bf16 %v3391, %v3389
      %v3414 = vpack.c.bf16 %v3394, %v3392
      %v3415 = vpack.c.bf16 %v3395, %v3393
      %v3416 = vpack.c.bf16 %v3398, %v3396
      %v3417 = vpack.c.bf16 %v3399, %v3397
      %v3418 = vpack.c.bf16 %v3402, %v3400
      %v3419 = vpack.c.bf16 %v3403, %v3401
      %3420 = vmatprep.subr.bf16.mxu0 %v3405
      %3421 = vmatpush1.bf16.msra.mxu0 %v3404
      %3422 = vmatprep.subr.bf16.mxu0 %v3407
      %3423 = vmatpush1.bf16.msra.mxu0 %v3406
      %3424 = vmatprep.subr.bf16.mxu0 %v3409
      %3425 = vmatpush1.bf16.msra.mxu0 %v3408
      %3426 = vmatprep.subr.bf16.mxu0 %v3411
      %3427 = vmatpush1.bf16.msra.mxu0 %v3410
      %3428 = vmatprep.subr.bf16.mxu0 %v3413
      %3429 = vmatpush1.bf16.msra.mxu0 %v3412
      %3430 = vmatprep.subr.bf16.mxu0 %v3415
      %3431 = vmatpush1.bf16.msra.mxu0 %v3414
      %3432 = vmatprep.subr.bf16.mxu0 %v3417
      %3433 = vmatpush1.bf16.msra.mxu0 %v3416
      %3434 = vmatprep.subr.bf16.mxu0 %v3419
      %3435 = vmatpush1.bf16.msra.mxu0 %v3418
      %3436 = vmatprep.subr.bf16.mxu0 0
      %3437 = vmatpush1.bf16.msra.mxu0 0
      %3438 = vmatprep.subr.bf16.mxu0 0
      %3439 = vmatpush1.bf16.msra.mxu0 0
      %3440 = vmatprep.subr.bf16.mxu0 0
      %3441 = vmatpush1.bf16.msra.mxu0 0
      %3442 = vmatprep.subr.bf16.mxu0 0
      %3443 = vmatpush1.bf16.msra.mxu0 0
      %3444 = vmatprep.subr.bf16.mxu0 0
      %3445 = vmatpush1.bf16.msra.mxu0 0
      %3446 = vmatprep.subr.bf16.mxu0 0
      %3447 = vmatpush1.bf16.msra.mxu0 0
      %3448 = vmatprep.subr.bf16.mxu0 0
      %3449 = vmatpush1.bf16.msra.mxu0 0
      %3450 = vmatprep.subr.bf16.mxu0 0
      %3451 = vmatpush1.bf16.msra.mxu0 0
      %3452 = vmatprep.mubr.bf16.mxu0 0
      %3453 = vmatmul.mubr.bf16.gmra.mrb[0].mxu0 %v1472
      %v3454 = vpop.f32.mrb[0].mxu0
      %v3455 = vadd.f32 0.0, %v3454
      %v3456 = vpop.f32.mrb[0].mxu0
      %v3457 = vadd.f32 0.0, %v3456
      %v3458 = vpop.f32.mrb[0].mxu0
      %v3459 = vpop.f32.mrb[0].mxu0
      %3460 = vdwg.mxu0
      %3461 = vmatprep.subr.bf16.mxu0 %v3405
      %3462 = vmatpush1.bf16.msra.mxu0 %v3404
      %3463 = vmatprep.subr.bf16.mxu0 %v3407
      %3464 = vmatpush1.bf16.msra.mxu0 %v3406
      %3465 = vmatprep.subr.bf16.mxu0 %v3409
      %3466 = vmatpush1.bf16.msra.mxu0 %v3408
      %3467 = vmatprep.subr.bf16.mxu0 %v3411
      %3468 = vmatpush1.bf16.msra.mxu0 %v3410
      %3469 = vmatprep.subr.bf16.mxu0 %v3413
      %3470 = vmatpush1.bf16.msra.mxu0 %v3412
      %3471 = vmatprep.subr.bf16.mxu0 %v3415
      %3472 = vmatpush1.bf16.msra.mxu0 %v3414
      %3473 = vmatprep.subr.bf16.mxu0 %v3417
      %3474 = vmatpush1.bf16.msra.mxu0 %v3416
      %3475 = vmatprep.subr.bf16.mxu0 %v3419
      %3476 = vmatpush1.bf16.msra.mxu0 %v3418
      %3477 = vmatprep.subr.bf16.mxu0 0
      %3478 = vmatpush1.bf16.msra.mxu0 0
      %3479 = vmatprep.subr.bf16.mxu0 0
      %3480 = vmatpush1.bf16.msra.mxu0 0
      %3481 = vmatprep.subr.bf16.mxu0 0
      %3482 = vmatpush1.bf16.msra.mxu0 0
      %3483 = vmatprep.subr.bf16.mxu0 0
      %3484 = vmatpush1.bf16.msra.mxu0 0
      %3485 = vmatprep.subr.bf16.mxu0 0
      %3486 = vmatpush1.bf16.msra.mxu0 0
      %3487 = vmatprep.subr.bf16.mxu0 0
      %3488 = vmatpush1.bf16.msra.mxu0 0
      %3489 = vmatprep.subr.bf16.mxu0 0
      %3490 = vmatpush1.bf16.msra.mxu0 0
      %3491 = vmatprep.subr.bf16.mxu0 0
      %3492 = vmatpush1.bf16.msra.mxu0 0
      %3493 = vmatprep.mubr.bf16.mxu0 0
      %3494 = vmatmul.mubr.bf16.gmra.mrb[0].mxu0 %v1471
      %v3495 = vpop.f32.mrb[0].mxu0
      %v3496 = vadd.f32 %v1839, %v3495
      %v3497 = vpop.f32.mrb[0].mxu0
      %v3498 = vadd.f32 %v1839, %v3497
      %v3499 = vpop.f32.mrb[0].mxu0
      %v3500 = vpop.f32.mrb[0].mxu0
      %3501 = vdwg.mxu0
      %s3502 = scalar_lea.vmem %s7, 320
      %v3503 = vld [vmem:[%s3502] sm:$0xf]
      %v3504 = vld [vmem:[%s3502 + $0x4] sm:$0xf]
      %v3505 = vld [vmem:[%s3502 + $0x8] sm:$0xf]
      %v3506 = vld [vmem:[%s3502 + $0xc] sm:$0xf]
      %v3507 = vld [vmem:[%s3502 + $0x10] sm:$0xf]
      %v3508 = vld [vmem:[%s3502 + $0x14] sm:$0xf]
      %v3509 = vld [vmem:[%s3502 + $0x18] sm:$0xf]
      %v3510 = vld [vmem:[%s3502 + $0x1c] sm:$0xf]
      %v3511 = vld [vmem:[%s3502 + $0x20] sm:$0xf]
      %v3512 = vld [vmem:[%s3502 + $0x24] sm:$0xf]
      %v3513 = vld [vmem:[%s3502 + $0x28] sm:$0xf]
      %v3514 = vld [vmem:[%s3502 + $0x2c] sm:$0xf]
      %v3515 = vld [vmem:[%s3502 + $0x30] sm:$0xf]
      %v3516 = vld [vmem:[%s3502 + $0x34] sm:$0xf]
      %v3517 = vld [vmem:[%s3502 + $0x38] sm:$0xf]
      %v3518 = vld [vmem:[%s3502 + $0x3c] sm:$0xf]
      %s3519 = scalar_lea.vmem %s428, 640
      %v3520 = vld [vmem:[%s3519] sm:$0xff]
      %v3521 = vld [vmem:[%s3519 + $0x8] sm:$0xff]
      %v3522 = vld [vmem:[%s3519 + $0x10] sm:$0xff]
      %v3523 = vld [vmem:[%s3519 + $0x18] sm:$0xff]
      %v3524 = vld [vmem:[%s3519 + $0x20] sm:$0xff]
      %v3525 = vld [vmem:[%s3519 + $0x28] sm:$0xff]
      %v3526 = vld [vmem:[%s3519 + $0x30] sm:$0xff]
      %v3527 = vld [vmem:[%s3519 + $0x38] sm:$0xff]
      %v3528 = vld [vmem:[%s3519 + $0x40] sm:$0xff]
      %v3529 = vld [vmem:[%s3519 + $0x48] sm:$0xff]
      %v3530 = vld [vmem:[%s3519 + $0x50] sm:$0xff]
      %v3531 = vld [vmem:[%s3519 + $0x58] sm:$0xff]
      %v3532 = vld [vmem:[%s3519 + $0x60] sm:$0xff]
      %v3533 = vld [vmem:[%s3519 + $0x68] sm:$0xff]
      %v3534 = vld [vmem:[%s3519 + $0x70] sm:$0xff]
      %v3535 = vld [vmem:[%s3519 + $0x78] sm:$0xff]
      %3537 = vset.pattern.permute.xlu0 0
      %3538 = vperm.xlu0 %3537, %v3520
      %v3539 = vpop.permute.xlu0 %3538
      %3542 = vset.pattern.permute.xlu0 0
      %3543 = vperm.xlu0 %3542, %v3521
      %v3544 = vpop.permute.xlu0 %3543
      %3547 = vset.pattern.permute.xlu0 0
      %3548 = vperm.xlu0 %3547, %v3522
      %v3549 = vpop.permute.xlu0 %3548
      %3552 = vset.pattern.permute.xlu0 0
      %3553 = vperm.xlu0 %3552, %v3523
      %v3554 = vpop.permute.xlu0 %3553
      %3557 = vset.pattern.permute.xlu0 0
      %3558 = vperm.xlu0 %3557, %v3524
      %v3559 = vpop.permute.xlu0 %3558
      %3562 = vset.pattern.permute.xlu0 0
      %3563 = vperm.xlu0 %3562, %v3525
      %v3564 = vpop.permute.xlu0 %3563
      %3567 = vset.pattern.permute.xlu0 0
      %3568 = vperm.xlu0 %3567, %v3526
      %v3569 = vpop.permute.xlu0 %3568
      %3572 = vset.pattern.permute.xlu0 0
      %3573 = vperm.xlu0 %3572, %v3527
      %v3574 = vpop.permute.xlu0 %3573
      %3577 = vset.pattern.permute.xlu0 0
      %3578 = vperm.xlu0 %3577, %v3528
      %v3579 = vpop.permute.xlu0 %3578
      %3582 = vset.pattern.permute.xlu0 0
      %3583 = vperm.xlu0 %3582, %v3529
      %v3584 = vpop.permute.xlu0 %3583
      %3587 = vset.pattern.permute.xlu0 0
      %3588 = vperm.xlu0 %3587, %v3530
      %v3589 = vpop.permute.xlu0 %3588
      %3592 = vset.pattern.permute.xlu0 0
      %3593 = vperm.xlu0 %3592, %v3531
      %v3594 = vpop.permute.xlu0 %3593
      %3597 = vset.pattern.permute.xlu0 0
      %3598 = vperm.xlu0 %3597, %v3532
      %v3599 = vpop.permute.xlu0 %3598
      %3602 = vset.pattern.permute.xlu0 0
      %3603 = vperm.xlu0 %3602, %v3533
      %v3604 = vpop.permute.xlu0 %3603
      %3607 = vset.pattern.permute.xlu0 0
      %3608 = vperm.xlu0 %3607, %v3534
      %v3609 = vpop.permute.xlu0 %3608
      %3612 = vset.pattern.permute.xlu0 0
      %3613 = vperm.xlu0 %3612, %v3535
      %v3614 = vpop.permute.xlu0 %3613
      %v3632 = vunpack.c.l.b16 %v3503
      %v3633 = vunpack.c.l.b16 %v3504
      %v3634 = vunpack.c.l.b16 %v3505
      %v3635 = vunpack.c.l.b16 %v3506
      %v3636 = vunpack.c.l.b16 %v3507
      %v3637 = vunpack.c.l.b16 %v3508
      %v3638 = vunpack.c.l.b16 %v3509
      %v3639 = vunpack.c.l.b16 %v3510
      %v3640 = vunpack.c.l.b16 %v3511
      %v3641 = vunpack.c.l.b16 %v3512
      %v3642 = vunpack.c.l.b16 %v3513
      %v3643 = vunpack.c.l.b16 %v3514
      %v3644 = vunpack.c.l.b16 %v3515
      %v3645 = vunpack.c.l.b16 %v3516
      %v3646 = vunpack.c.l.b16 %v3517
      %v3647 = vunpack.c.l.b16 %v3518
      %v3648 = vpack.c.b16 %v3633, %v3632
      %v3649 = vpack.c.b16 %v3635, %v3634
      %v3650 = vpack.c.b16 %v3637, %v3636
      %v3651 = vpack.c.b16 %v3639, %v3638
      %v3652 = vpack.c.b16 %v3641, %v3640
      %v3653 = vpack.c.b16 %v3643, %v3642
      %v3654 = vpack.c.b16 %v3645, %v3644
      %v3655 = vpack.c.b16 %v3647, %v3646
      %3664 = vmatprep.subr.bf16.mxu0 %v1456
      %3665 = vmatpush1.bf16.msra.mxu0 %v1455
      %3666 = vmatprep.subr.bf16.mxu0 %v1458
      %3667 = vmatpush1.bf16.msra.mxu0 %v1457
      %3668 = vmatprep.subr.bf16.mxu0 %v1460
      %3669 = vmatpush1.bf16.msra.mxu0 %v1459
      %3670 = vmatprep.subr.bf16.mxu0 %v1462
      %3671 = vmatpush1.bf16.msra.mxu0 %v1461
      %3672 = vmatprep.subr.bf16.mxu0 %v1464
      %3673 = vmatpush1.bf16.msra.mxu0 %v1463
      %3674 = vmatprep.subr.bf16.mxu0 %v1466
      %3675 = vmatpush1.bf16.msra.mxu0 %v1465
      %3676 = vmatprep.subr.bf16.mxu0 %v1468
      %3677 = vmatpush1.bf16.msra.mxu0 %v1467
      %3678 = vmatprep.subr.bf16.mxu0 %v1470
      %3679 = vmatpush1.bf16.msra.mxu0 %v1469
      %3680 = vmatprep.subr.bf16.mxu0 0
      %3681 = vmatpush1.bf16.msra.mxu0 0
      %3682 = vmatprep.subr.bf16.mxu0 0
      %3683 = vmatpush1.bf16.msra.mxu0 0
      %3684 = vmatprep.subr.bf16.mxu0 0
      %3685 = vmatpush1.bf16.msra.mxu0 0
      %3686 = vmatprep.subr.bf16.mxu0 0
      %3687 = vmatpush1.bf16.msra.mxu0 0
      %3688 = vmatprep.subr.bf16.mxu0 0
      %3689 = vmatpush1.bf16.msra.mxu0 0
      %3690 = vmatprep.subr.bf16.mxu0 0
      %3691 = vmatpush1.bf16.msra.mxu0 0
      %3692 = vmatprep.subr.bf16.mxu0 0
      %3693 = vmatpush1.bf16.msra.mxu0 0
      %3694 = vmatprep.subr.bf16.mxu0 0
      %3695 = vmatpush1.bf16.msra.mxu0 0
      %3696 = vmatprep.mubr.bf16.mxu0 0
      %3697 = vmatmul.mubr.bf16.gmra.mrb[0].mxu0 %v3648
      %v3698 = vpop.f32.mrb[0].mxu0
      %v3699 = vadd.f32 %v3539, %v3698
      %v3700 = vpop.f32.mrb[0].mxu0
      %v3701 = vadd.f32 %v3539, %v3700
      %v3702 = vpop.f32.mrb[0].mxu0
      %v3703 = vadd.f32 %v3544, %v3702
      %v3704 = vpop.f32.mrb[0].mxu0
      %v3705 = vadd.f32 %v3544, %v3704
      %3706 = vmatprep.mubr.bf16.mxu0 0
      %3707 = vmatmul.mubr.bf16.gmra.mrb[0].mxu0 %v3649
      %v3708 = vpop.f32.mrb[0].mxu0
      %v3709 = vadd.f32 %v3549, %v3708
      %v3710 = vpop.f32.mrb[0].mxu0
      %v3711 = vadd.f32 %v3549, %v3710
      %v3712 = vpop.f32.mrb[0].mxu0
      %v3713 = vadd.f32 %v3554, %v3712
      %v3714 = vpop.f32.mrb[0].mxu0
      %v3715 = vadd.f32 %v3554, %v3714
      %3716 = vmatprep.mubr.bf16.mxu0 0
      %3717 = vmatmul.mubr.bf16.gmra.mrb[0].mxu0 %v3650
      %v3718 = vpop.f32.mrb[0].mxu0
      %v3719 = vadd.f32 %v3559, %v3718
      %v3720 = vpop.f32.mrb[0].mxu0
      %v3721 = vadd.f32 %v3559, %v3720
      %v3722 = vpop.f32.mrb[0].mxu0
      %v3723 = vadd.f32 %v3564, %v3722
      %v3724 = vpop.f32.mrb[0].mxu0
      %v3725 = vadd.f32 %v3564, %v3724
      %3726 = vmatprep.mubr.bf16.mxu0 0
      %3727 = vmatmul.mubr.bf16.gmra.mrb[0].mxu0 %v3651
      %v3728 = vpop.f32.mrb[0].mxu0
      %v3729 = vadd.f32 %v3569, %v3728
      %v3730 = vpop.f32.mrb[0].mxu0
      %v3731 = vadd.f32 %v3569, %v3730
      %v3732 = vpop.f32.mrb[0].mxu0
      %v3733 = vadd.f32 %v3574, %v3732
      %v3734 = vpop.f32.mrb[0].mxu0
      %v3735 = vadd.f32 %v3574, %v3734
      %3736 = vmatprep.mubr.bf16.mxu0 0
      %3737 = vmatmul.mubr.bf16.gmra.mrb[0].mxu0 %v3652
      %v3738 = vpop.f32.mrb[0].mxu0
      %v3739 = vadd.f32 %v3579, %v3738
      %v3740 = vpop.f32.mrb[0].mxu0
      %v3741 = vadd.f32 %v3579, %v3740
      %v3742 = vpop.f32.mrb[0].mxu0
      %v3743 = vadd.f32 %v3584, %v3742
      %v3744 = vpop.f32.mrb[0].mxu0
      %v3745 = vadd.f32 %v3584, %v3744
      %3746 = vmatprep.mubr.bf16.mxu0 0
      %3747 = vmatmul.mubr.bf16.gmra.mrb[0].mxu0 %v3653
      %v3748 = vpop.f32.mrb[0].mxu0
      %v3749 = vadd.f32 %v3589, %v3748
      %v3750 = vpop.f32.mrb[0].mxu0
      %v3751 = vadd.f32 %v3589, %v3750
      %v3752 = vpop.f32.mrb[0].mxu0
      %v3753 = vadd.f32 %v3594, %v3752
      %v3754 = vpop.f32.mrb[0].mxu0
      %v3755 = vadd.f32 %v3594, %v3754
      %3756 = vmatprep.mubr.bf16.mxu0 0
      %3757 = vmatmul.mubr.bf16.gmra.mrb[0].mxu0 %v3654
      %v3758 = vpop.f32.mrb[0].mxu0
      %v3759 = vadd.f32 %v3599, %v3758
      %v3760 = vpop.f32.mrb[0].mxu0
      %v3761 = vadd.f32 %v3599, %v3760
      %v3762 = vpop.f32.mrb[0].mxu0
      %v3763 = vadd.f32 %v3604, %v3762
      %v3764 = vpop.f32.mrb[0].mxu0
      %v3765 = vadd.f32 %v3604, %v3764
      %3766 = vmatprep.mubr.bf16.mxu0 0
      %3767 = vmatmul.mubr.bf16.gmra.mrb[0].mxu0 %v3655
      %v3768 = vpop.f32.mrb[0].mxu0
      %v3769 = vadd.f32 %v3609, %v3768
      %v3770 = vpop.f32.mrb[0].mxu0
      %v3771 = vadd.f32 %v3609, %v3770
      %v3772 = vpop.f32.mrb[0].mxu0
      %v3773 = vadd.f32 %v3614, %v3772
      %v3774 = vpop.f32.mrb[0].mxu0
      %v3775 = vadd.f32 %v3614, %v3774
      %3776 = vdwg.mxu0
      %v3777 = vmax.f32 %v3699, 0.0
      %v3778 = vmax.f32 %v3701, 0.0
      %v3779 = vmax.f32 %v3703, 0.0
      %v3780 = vmax.f32 %v3705, 0.0
      %v3781 = vmax.f32 %v3709, 0.0
      %v3782 = vmax.f32 %v3711, 0.0
      %v3783 = vmax.f32 %v3713, 0.0
      %v3784 = vmax.f32 %v3715, 0.0
      %v3785 = vmax.f32 %v3719, 0.0
      %v3786 = vmax.f32 %v3721, 0.0
      %v3787 = vmax.f32 %v3723, 0.0
      %v3788 = vmax.f32 %v3725, 0.0
      %v3789 = vmax.f32 %v3729, 0.0
      %v3790 = vmax.f32 %v3731, 0.0
      %v3791 = vmax.f32 %v3733, 0.0
      %v3792 = vmax.f32 %v3735, 0.0
      %v3793 = vmax.f32 %v3739, 0.0
      %v3794 = vmax.f32 %v3741, 0.0
      %v3795 = vmax.f32 %v3743, 0.0
      %v3796 = vmax.f32 %v3745, 0.0
      %v3797 = vmax.f32 %v3749, 0.0
      %v3798 = vmax.f32 %v3751, 0.0
      %v3799 = vmax.f32 %v3753, 0.0
      %v3800 = vmax.f32 %v3755, 0.0
      %v3801 = vmax.f32 %v3759, 0.0
      %v3802 = vmax.f32 %v3761, 0.0
      %v3803 = vmax.f32 %v3763, 0.0
      %v3804 = vmax.f32 %v3765, 0.0
      %v3805 = vmax.f32 %v3769, 0.0
      %v3806 = vmax.f32 %v3771, 0.0
      %v3807 = vmax.f32 %v3773, 0.0
      %v3808 = vmax.f32 %v3775, 0.0
      %v3809 = vpack.c.bf16 %v3779, %v3777
      %v3810 = vpack.c.bf16 %v3780, %v3778
      %v3811 = vpack.c.bf16 %v3783, %v3781
      %v3812 = vpack.c.bf16 %v3784, %v3782
      %v3813 = vpack.c.bf16 %v3787, %v3785
      %v3814 = vpack.c.bf16 %v3788, %v3786
      %v3815 = vpack.c.bf16 %v3791, %v3789
      %v3816 = vpack.c.bf16 %v3792, %v3790
      %v3817 = vpack.c.bf16 %v3795, %v3793
      %v3818 = vpack.c.bf16 %v3796, %v3794
      %v3819 = vpack.c.bf16 %v3799, %v3797
      %v3820 = vpack.c.bf16 %v3800, %v3798
      %v3821 = vpack.c.bf16 %v3803, %v3801
      %v3822 = vpack.c.bf16 %v3804, %v3802
      %v3823 = vpack.c.bf16 %v3807, %v3805
      %v3824 = vpack.c.bf16 %v3808, %v3806
      %3825 = vmatprep.subr.bf16.mxu0 %v3810
      %3826 = vmatpush1.bf16.msra.mxu0 %v3809
      %3827 = vmatprep.subr.bf16.mxu0 %v3812
      %3828 = vmatpush1.bf16.msra.mxu0 %v3811
      %3829 = vmatprep.subr.bf16.mxu0 %v3814
      %3830 = vmatpush1.bf16.msra.mxu0 %v3813
      %3831 = vmatprep.subr.bf16.mxu0 %v3816
      %3832 = vmatpush1.bf16.msra.mxu0 %v3815
      %3833 = vmatprep.subr.bf16.mxu0 %v3818
      %3834 = vmatpush1.bf16.msra.mxu0 %v3817
      %3835 = vmatprep.subr.bf16.mxu0 %v3820
      %3836 = vmatpush1.bf16.msra.mxu0 %v3819
      %3837 = vmatprep.subr.bf16.mxu0 %v3822
      %3838 = vmatpush1.bf16.msra.mxu0 %v3821
      %3839 = vmatprep.subr.bf16.mxu0 %v3824
      %3840 = vmatpush1.bf16.msra.mxu0 %v3823
      %3841 = vmatprep.subr.bf16.mxu0 0
      %3842 = vmatpush1.bf16.msra.mxu0 0
      %3843 = vmatprep.subr.bf16.mxu0 0
      %3844 = vmatpush1.bf16.msra.mxu0 0
      %3845 = vmatprep.subr.bf16.mxu0 0
      %3846 = vmatpush1.bf16.msra.mxu0 0
      %3847 = vmatprep.subr.bf16.mxu0 0
      %3848 = vmatpush1.bf16.msra.mxu0 0
      %3849 = vmatprep.subr.bf16.mxu0 0
      %3850 = vmatpush1.bf16.msra.mxu0 0
      %3851 = vmatprep.subr.bf16.mxu0 0
      %3852 = vmatpush1.bf16.msra.mxu0 0
      %3853 = vmatprep.subr.bf16.mxu0 0
      %3854 = vmatpush1.bf16.msra.mxu0 0
      %3855 = vmatprep.subr.bf16.mxu0 0
      %3856 = vmatpush1.bf16.msra.mxu0 0
      %3857 = vmatprep.mubr.bf16.mxu0 0
      %3858 = vmatmul.mubr.bf16.gmra.mrb[0].mxu0 %v1472
      %v3859 = vpop.f32.mrb[0].mxu0
      %v3860 = vadd.f32 0.0, %v3859
      %v3861 = vpop.f32.mrb[0].mxu0
      %v3862 = vadd.f32 0.0, %v3861
      %v3863 = vpop.f32.mrb[0].mxu0
      %v3864 = vpop.f32.mrb[0].mxu0
      %3865 = vdwg.mxu0
      %3866 = vmatprep.subr.bf16.mxu0 %v3810
      %3867 = vmatpush1.bf16.msra.mxu0 %v3809
      %3868 = vmatprep.subr.bf16.mxu0 %v3812
      %3869 = vmatpush1.bf16.msra.mxu0 %v3811
      %3870 = vmatprep.subr.bf16.mxu0 %v3814
      %3871 = vmatpush1.bf16.msra.mxu0 %v3813
      %3872 = vmatprep.subr.bf16.mxu0 %v3816
      %3873 = vmatpush1.bf16.msra.mxu0 %v3815
      %3874 = vmatprep.subr.bf16.mxu0 %v3818
      %3875 = vmatpush1.bf16.msra.mxu0 %v3817
      %3876 = vmatprep.subr.bf16.mxu0 %v3820
      %3877 = vmatpush1.bf16.msra.mxu0 %v3819
      %3878 = vmatprep.subr.bf16.mxu0 %v3822
      %3879 = vmatpush1.bf16.msra.mxu0 %v3821
      %3880 = vmatprep.subr.bf16.mxu0 %v3824
      %3881 = vmatpush1.bf16.msra.mxu0 %v3823
      %3882 = vmatprep.subr.bf16.mxu0 0
      %3883 = vmatpush1.bf16.msra.mxu0 0
      %3884 = vmatprep.subr.bf16.mxu0 0
      %3885 = vmatpush1.bf16.msra.mxu0 0
      %3886 = vmatprep.subr.bf16.mxu0 0
      %3887 = vmatpush1.bf16.msra.mxu0 0
      %3888 = vmatprep.subr.bf16.mxu0 0
      %3889 = vmatpush1.bf16.msra.mxu0 0
      %3890 = vmatprep.subr.bf16.mxu0 0
      %3891 = vmatpush1.bf16.msra.mxu0 0
      %3892 = vmatprep.subr.bf16.mxu0 0
      %3893 = vmatpush1.bf16.msra.mxu0 0
      %3894 = vmatprep.subr.bf16.mxu0 0
      %3895 = vmatpush1.bf16.msra.mxu0 0
      %3896 = vmatprep.subr.bf16.mxu0 0
      %3897 = vmatpush1.bf16.msra.mxu0 0
      %3898 = vmatprep.mubr.bf16.mxu0 0
      %3899 = vmatmul.mubr.bf16.gmra.mrb[0].mxu0 %v1471
      %v3900 = vpop.f32.mrb[0].mxu0
      %v3901 = vadd.f32 %v1839, %v3900
      %v3902 = vpop.f32.mrb[0].mxu0
      %v3903 = vadd.f32 %v1839, %v3902
      %v3904 = vpop.f32.mrb[0].mxu0
      %v3905 = vpop.f32.mrb[0].mxu0
      %3906 = vdwg.mxu0
      %v3907 = vmax.f32 %v1830, %v2240
      %v3908 = vmax.f32 %v1832, %v2242
      %v3909 = vmax.f32 %v3907, %v2645
      %v3910 = vmax.f32 %v3908, %v2647
      %v3911 = vmax.f32 %v3909, %v3050
      %v3912 = vmax.f32 %v3910, %v3052
      %v3913 = vmax.f32 %v3911, %v3455
      %v3914 = vmax.f32 %v3912, %v3457
      %v3915 = vmax.f32 %v3913, %v3860
      %v3916 = vmax.f32 %v3914, %v3862
      %v3917 = vsub.f32 %v1830, %v3915
      %v3918 = vsub.f32 %v1832, %v3916
      %v3919 = vmul.f32 %v3917, 1.442695
      %v3920 = vpow.pop %v3919
      %v3921 = vmul.f32 %v3918, 1.442695
      %v3922 = vpow.pop %v3921
      %v3923 = vsub.f32 %v2240, %v3915
      %v3924 = vsub.f32 %v2242, %v3916
      %v3925 = vmul.f32 %v3923, 1.442695
      %v3926 = vpow.pop %v3925
      %v3927 = vmul.f32 %v3924, 1.442695
      %v3928 = vpow.pop %v3927
      %v3929 = vsub.f32 %v2645, %v3915
      %v3930 = vsub.f32 %v2647, %v3916
      %v3931 = vmul.f32 %v3929, 1.442695
      %v3932 = vpow.pop %v3931
      %v3933 = vmul.f32 %v3930, 1.442695
      %v3934 = vpow.pop %v3933
      %v3935 = vsub.f32 %v3050, %v3915
      %v3936 = vsub.f32 %v3052, %v3916
      %v3937 = vmul.f32 %v3935, 1.442695
      %v3938 = vpow.pop %v3937
      %v3939 = vmul.f32 %v3936, 1.442695
      %v3940 = vpow.pop %v3939
      %v3941 = vsub.f32 %v3455, %v3915
      %v3942 = vsub.f32 %v3457, %v3916
      %v3943 = vmul.f32 %v3941, 1.442695
      %v3944 = vpow.pop %v3943
      %v3945 = vmul.f32 %v3942, 1.442695
      %v3946 = vpow.pop %v3945
      %v3947 = vsub.f32 %v3860, %v3915
      %v3948 = vsub.f32 %v3862, %v3916
      %v3949 = vmul.f32 %v3947, 1.442695
      %v3950 = vpow.pop %v3949
      %v3951 = vmul.f32 %v3948, 1.442695
      %v3952 = vpow.pop %v3951
      %v3953 = vadd.f32 %v3920, %v3926
      %v3954 = vadd.f32 %v3922, %v3928
      %v3955 = vadd.f32 %v3953, %v3932
      %v3956 = vadd.f32 %v3954, %v3934
      %v3957 = vadd.f32 %v3955, %v3938
      %v3958 = vadd.f32 %v3956, %v3940
      %v3959 = vadd.f32 %v3957, %v3944
      %v3960 = vadd.f32 %v3958, %v3946
      %v3961 = vadd.f32 %v3959, %v3950
      %v3962 = vadd.f32 %v3960, %v3952
      %v3963 = vrcp.pop %v3961
      %v3964 = vrcp.pop %v3962
      %v3965 = vmul.f32 %v3920, %v3963
      %v3966 = vmul.f32 %v3922, %v3964
      %v3967 = vlaneseq
      %v3968 = vshrl.u32 %v3967, 7
      %v3969 = vsub.s32 0, %v3968
      %v3970 = vrot.slane %v3965, %v3969
      %v3971 = vlaneseq
      %v3972 = vshrl.u32 %v3971, 7
      %v3973 = vsub.s32 0, %v3972
      %v3974 = vrot.slane %v3966, %v3973
      %v3975 = vmul.f32 %v1876, %v3970
      %v3976 = vmul.f32 %v1878, %v3974
      %v3977 = vmul.f32 %v3926, %v3963
      %v3978 = vmul.f32 %v3928, %v3964
      %v3979 = vlaneseq
      %v3980 = vshrl.u32 %v3979, 7
      %v3981 = vsub.s32 0, %v3980
      %v3982 = vrot.slane %v3977, %v3981
      %v3983 = vlaneseq
      %v3984 = vshrl.u32 %v3983, 7
      %v3985 = vsub.s32 0, %v3984
      %v3986 = vrot.slane %v3978, %v3985
      %v3987 = vmul.f32 %v2281, %v3982
      %v3988 = vmul.f32 %v2283, %v3986
      %v3989 = vadd.f32 %v3975, %v3987
      %v3990 = vadd.f32 %v3976, %v3988
      %v3991 = vmul.f32 %v3932, %v3963
      %v3992 = vmul.f32 %v3934, %v3964
      %v3993 = vlaneseq
      %v3994 = vshrl.u32 %v3993, 7
      %v3995 = vsub.s32 0, %v3994
      %v3996 = vrot.slane %v3991, %v3995
      %v3997 = vlaneseq
      %v3998 = vshrl.u32 %v3997, 7
      %v3999 = vsub.s32 0, %v3998
      %v4000 = vrot.slane %v3992, %v3999
      %v4001 = vmul.f32 %v2686, %v3996
      %v4002 = vmul.f32 %v2688, %v4000
      %v4003 = vadd.f32 %v3989, %v4001
      %v4004 = vadd.f32 %v3990, %v4002
      %v4005 = vmul.f32 %v3938, %v3963
      %v4006 = vmul.f32 %v3940, %v3964
      %v4007 = vlaneseq
      %v4008 = vshrl.u32 %v4007, 7
      %v4009 = vsub.s32 0, %v4008
      %v4010 = vrot.slane %v4005, %v4009
      %v4011 = vlaneseq
      %v4012 = vshrl.u32 %v4011, 7
      %v4013 = vsub.s32 0, %v4012
      %v4014 = vrot.slane %v4006, %v4013
      %v4015 = vmul.f32 %v3091, %v4010
      %v4016 = vmul.f32 %v3093, %v4014
      %v4017 = vadd.f32 %v4003, %v4015
      %v4018 = vadd.f32 %v4004, %v4016
      %v4019 = vmul.f32 %v3944, %v3963
      %v4020 = vmul.f32 %v3946, %v3964
      %v4021 = vlaneseq
      %v4022 = vshrl.u32 %v4021, 7
      %v4023 = vsub.s32 0, %v4022
      %v4024 = vrot.slane %v4019, %v4023
      %v4025 = vlaneseq
      %v4026 = vshrl.u32 %v4025, 7
      %v4027 = vsub.s32 0, %v4026
      %v4028 = vrot.slane %v4020, %v4027
      %v4029 = vmul.f32 %v3496, %v4024
      %v4030 = vmul.f32 %v3498, %v4028
      %v4031 = vadd.f32 %v4017, %v4029
      %v4032 = vadd.f32 %v4018, %v4030
      %v4033 = vmul.f32 %v3950, %v3963
      %v4034 = vmul.f32 %v3952, %v3964
      %v4035 = vlaneseq
      %v4036 = vshrl.u32 %v4035, 7
      %v4037 = vsub.s32 0, %v4036
      %v4038 = vrot.slane %v4033, %v4037
      %v4039 = vlaneseq
      %v4040 = vshrl.u32 %v4039, 7
      %v4041 = vsub.s32 0, %v4040
      %v4042 = vrot.slane %v4034, %v4041
      %v4043 = vmul.f32 %v3901, %v4038
      %v4044 = vmul.f32 %v3903, %v4042
      %v4045 = vadd.f32 %v4031, %v4043
      %v4046 = vadd.f32 %v4032, %v4044
      %v4049 = vcombine.low %v4045, %v4046
      %4051 = vst [vmem:[%s433] sm:$0x77] %v4049
      %p4052 = scmp.lt.s32.totalorder %s23, 1
      %s4053 = scalar_select %p4052, %s23, 1
      %s4054 = smul.addr %s4053, 2
      %s4055 = smul.addr %s4054, 4
      %s4056 = scalar_lea.vmem %s12, %s4055
      // Predicated region
      $region69: #{csfn_forward.1} parent=67 // pred_check
        %p4057 = pneg %p303
      $region70: #{csfn_forward.1} parent=67 // pred_check_branch
        %4059 = sbr.rel (%p4057) target = $region72
      $region71: #{csfn_forward.1} parent=67 // pred_region
        _
      $region72: #{csfn_forward.1} parent=67 // pred_fallthru
        _
    $region68: #{csfn_forward.1} parent=5 // pred_fallthru
      _
    %p4060 = scmp.le.s32.totalorder 2, %s18
    // Predicated region
    $region73: #{csfn_forward.1} parent=5 // pred_check
      %p4061 = pneg %p4060
    $region74: #{csfn_forward.1} parent=5 // pred_check_branch
      %4063 = sbr.rel (%p4061) target = $region76
    $region75: #{csfn_forward.1} parent=5 // pred_region
      %s4064 = ssub.s32 %s18, 2
      // Predicated region
      $region77: #{csfn_forward.1} parent=75 // pred_check
        %p4065 = pneg %p309
      $region78: #{csfn_forward.1} parent=75 // pred_check_branch
        %4067 = sbr.rel (%p4065) target = $region80
      $region79: #{csfn_forward.1} parent=75 // pred_region
        %p4068 = scmp.lt.s32.totalorder %s24, 1
        %s4069 = scalar_select %p4068, %s24, 1
        %s4070 = smul.addr %s4069, 2
        %s4071 = smul.addr %s4070, 4
        %s4072 = scalar_lea.vmem %s12, %s4071
      $region80: #{csfn_forward.1} parent=75 // pred_fallthru
        _
    $region76: #{csfn_forward.1} parent=5 // pred_fallthru
      _
  $region6: #{csfn_forward.1} parent=0 // loop_footer
    %s22 = sadd.s32 1, %s18
  $region7: #{csfn_forward.1} parent=0 // loop_footer_branch
    %17 = sbr.rel target = $region3
  $region8: #{csfn_forward.1} parent=0 // loop_exit
    _

</llo_original>
